<compile_context>
chip_gen: v6e
topology: v6e:2x2x1
jax: 0.10.0
libtpu: 0.0.40
codegen_flags: <defaults>
</compile_context>

<pallas_src>
import jax
import jax.numpy as jnp
from jax import lax
from jax.experimental import pallas as pl
from jax.experimental.pallas import tpu as pltpu


def _round_up(x, m):
    return ((x + m - 1) // m) * m


# ----------------------------- Pallas kernel --------------------------------
def charrnn_kernel(
    x_ref,        # (T, Bp, Ep)    embedded input, time-major, padded
    h0_ref,       # (2, Bp, Hp)    initial hidden
    c0_ref,       # (2, Bp, Hp)    initial cell
    w0x_ref,      # (Ep, 4Hp)      layer-0 input weights (gate-block padded)
    w0h_ref,      # (Hp, 4Hp)      layer-0 hidden weights
    b0_ref,       # (1, 4Hp)       layer-0 combined bias (b_ih + b_hh)
    w1_ref,       # (2Hp, 4Hp)     layer-1 fused [input; hidden] weights
    b1_ref,       # (1, 4Hp)       layer-1 combined bias
    wfc_ref,      # (Hp, Vp)       fc weight
    bfc_ref,      # (1, Vp)        fc bias
    logits_ref,   # (T, Bp, Vp)    output logits (time-major, lane-dense)
    h_out_ref,    # (2, Bp, Hp)    final hidden (aliased with h0)
    c_out_ref,    # (2, Bp, Hp)    final cell   (aliased with c0)
    xg_ref,       # scratch (T, Bp, 4Hp)  precomputed layer-0 input gates
    hs_ref,       # scratch (T, Bp, Hp)   per-step top-layer hidden states
):
    T, Bp, Ep = x_ref.shape
    Hp = h0_ref.shape[-1]
    Vp = logits_ref.shape[-1]

    # ---- hoisted layer-0 input projection: one big MXU matmul (M = T*Bp) ----
    x_flat = x_ref[...].reshape(T * Bp, Ep)
    xg = (
        jnp.dot(x_flat, w0x_ref[...], preferred_element_type=jnp.float32)
        + b0_ref[...]
    )
    xg_ref[...] = xg.reshape(T, Bp, 4 * Hp)

    # hoist loop-invariant weights out of the recurrence
    w0h = w0h_ref[...]
    w1 = w1_ref[...]
    b1 = b1_ref[...]

    def gate_math(gates, c):
        # PyTorch gate order i, f, g, o; each block is a 128-lane-aligned slice.
        i = jax.nn.sigmoid(gates[:, 0 * Hp:1 * Hp])
        f = jax.nn.sigmoid(gates[:, 1 * Hp:2 * Hp])
        g = jnp.tanh(gates[:, 2 * Hp:3 * Hp])
        o = jax.nn.sigmoid(gates[:, 3 * Hp:4 * Hp])
        c_new = f * c + i * g
        h_new = o * jnp.tanh(c_new)
        return h_new, c_new

    def step(t, carry):
        h1, c1, h2, c2 = carry
        # layer 0: only the hidden-dependent matmul is on the serial path
        g0 = xg_ref[t] + jnp.dot(h1, w0h, preferred_element_type=jnp.float32)
        h1n, c1n = gate_math(g0, c1)
        # inter-layer dropout is identity in eval mode
        # layer 1: single fused matmul on concat([input, hidden])
        xh = jnp.concatenate([h1n, h2], axis=1)            # (Bp, 2Hp)
        g1 = jnp.dot(xh, w1, preferred_element_type=jnp.float32) + b1
        h2n, c2n = gate_math(g1, c2)
        # full-vreg store of this step's top-layer hidden state
        hs_ref[t] = h2n
        return (h1n, c1n, h2n, c2n)

    init = (h0_ref[0], c0_ref[0], h0_ref[1], c0_ref[1])
    unroll = True if T <= 32 else False
    h1, c1, h2, c2 = lax.fori_loop(0, T, step, init, unroll=unroll)

    h_out_ref[0] = h1
    h_out_ref[1] = h2
    c_out_ref[0] = c1
    c_out_ref[1] = c2

    # ---- batched FC head: one lane-dense matmul + one lane-dense store ----
    h_all = hs_ref[...].reshape(T * Bp, Hp)
    logits = (
        jnp.dot(h_all, wfc_ref[...], preferred_element_type=jnp.float32)
        + bfc_ref[...]
    )
    logits_ref[...] = logits.reshape(T, Bp, Vp).astype(logits_ref.dtype)


# ------------------------------ wrapper --------------------------------------
def charrnn_forward(x_ids, hc, params):
    """Forward pass equivalent to CharRNN.forward (eval mode, batch_first=True).

    x_ids: (B, T) int32 token ids
    hc:    tuple (h0, c0), each (n_layers, B, H) float32
    returns (logits (B*T, V), (h, c))
    """
    h0, c0 = hc
    B, T = x_ids.shape
    L, _, H = h0.shape
    assert L == 2, "kernel implements the module's n_layers=2 configuration"
    V = params["fc_w"].shape[0]
    E = params["embed"].shape[1]

    Bp = _round_up(B, 8)      # sublane alignment
    Hp = _round_up(H, 128)    # lane alignment (gates become 4*Hp lane blocks)
    Ep = _round_up(E, 128)
    Vp = _round_up(V, 128)

    f32 = jnp.float32

    # --- embedding: pad table in E, gather directly in time-major order ---
    embed_p = jnp.zeros((params["embed"].shape[0], Ep), f32)
    embed_p = embed_p.at[:, :E].set(params["embed"])
    ids_p = jnp.zeros((Bp, T), jnp.int32).at[:B, :].set(x_ids)
    x_tm = embed_p[ids_p.T]                                  # (T, Bp, Ep)
    # (identity) dropout on the embedded input

    # --- pad initial state ---
    h0_p = jnp.zeros((L, Bp, Hp), f32).at[:, :B, :H].set(h0)
    c0_p = jnp.zeros((L, Bp, Hp), f32).at[:, :B, :H].set(c0)

    # --- gate-block-padded weight packing (zero-padded lanes stay inert:
    #     i=f=o=sigmoid(0), g=tanh(0)=0 keeps padded h/c lanes exactly 0) ---
    def pack_gate_cols(w, in_dim, in_pad):
        # w: (4H, in_dim) PyTorch layout -> (in_pad, 4Hp), per-gate lane blocks
        out = jnp.zeros((in_pad, 4 * Hp), f32)
        for g in range(4):
            blk = w[g * H:(g + 1) * H, :].T                   # (in_dim, H)
            out = out.at[:in_dim, g * Hp:g * Hp + H].set(blk)
        return out

    def pack_gate_bias(b_ih, b_hh):
        b = b_ih + b_hh
        out = jnp.zeros((1, 4 * Hp), f32)
        for g in range(4):
            out = out.at[0, g * Hp:g * Hp + H].set(b[g * H:(g + 1) * H])
        return out

    w0x = pack_gate_cols(params["w_ih0"], E, Ep)              # (Ep, 4Hp)
    w0h = pack_gate_cols(params["w_hh0"], H, Hp)              # (Hp, 4Hp)
    b0 = pack_gate_bias(params["b_ih0"], params["b_hh0"])     # (1, 4Hp)
    w1 = jnp.concatenate(
        [pack_gate_cols(params["w_ih1"], H, Hp),
         pack_gate_cols(params["w_hh1"], H, Hp)],
        axis=0,
    )                                                         # (2Hp, 4Hp)
    b1 = pack_gate_bias(params["b_ih1"], params["b_hh1"])     # (1, 4Hp)

    wfc = jnp.zeros((Hp, Vp), f32).at[:H, :V].set(params["fc_w"].T)
    bfc = jnp.zeros((1, Vp), f32).at[0, :V].set(params["fc_b"])

    vmem = pl.BlockSpec(memory_space=pltpu.MemorySpace.VMEM)

    # advisory cost hint for XLA scheduling
    flops = (
        2 * T * Bp * Ep * 4 * Hp            # hoisted layer-0 input projection
        + 2 * T * Bp * Hp * 4 * Hp          # layer-0 hidden projection
        + 2 * T * Bp * (2 * Hp) * 4 * Hp    # layer-1 fused projection
        + 2 * T * Bp * Hp * Vp              # fc head
    )
    transcendentals = 2 * T * Bp * 5 * Hp   # 3 sigmoid + 2 tanh per cell
    bytes_accessed = 4 * (
        x_tm.size + h0_p.size + c0_p.size + w0x.size + w0h.size + b0.size
        + w1.size + b1.size + wfc.size + bfc.size
        + T * Bp * Vp + h0_p.size + c0_p.size
    )

    logits_tbv, h_out, c_out = pl.pallas_call(
        charrnn_kernel,
        out_shape=(
            jax.ShapeDtypeStruct((T, Bp, Vp), f32),
            jax.ShapeDtypeStruct((L, Bp, Hp), f32),
            jax.ShapeDtypeStruct((L, Bp, Hp), f32),
        ),
        in_specs=[vmem] * 10,
        out_specs=(vmem, vmem, vmem),
        scratch_shapes=[
            pltpu.VMEM((T, Bp, 4 * Hp), f32),   # precomputed layer-0 input gates
            pltpu.VMEM((T, Bp, Hp), f32),       # per-step top-layer hidden states
        ],
        # carry h/c state in place (h0 -> h_out, c0 -> c_out)
        input_output_aliases={1: 1, 2: 2},
        cost_estimate=pl.CostEstimate(
            flops=flops,
            transcendentals=transcendentals,
            bytes_accessed=bytes_accessed,
        ),
    )(x_tm, h0_p, c0_p, w0x, w0h, b0, w1, b1, wfc, bfc)

    # PyTorch (batch_first=True): x.view(B*T, H) is a batch-major flatten.
    logits = jnp.transpose(logits_tbv, (1, 0, 2))[:B, :, :V].reshape(B * T, V)
    h = h_out[:, :B, :H]
    c = c_out[:, :B, :H]
    return logits, (h, c)


# --------------------------- parameter init ----------------------------------
def init_params(key, vocab, embed_dim, n_hidden):
    ks = jax.random.split(key, 12)
    initrange = 0.1
    stdv = 1.0 / jnp.sqrt(jnp.float32(n_hidden))
    u = lambda k, shape, r: jax.random.uniform(k, shape, jnp.float32, -r, r)
    return {
        "embed": u(ks[0], (vocab, embed_dim), initrange),
        # layer 0: input size = embed_dim
        "w_ih0": u(ks[1], (4 * n_hidden, embed_dim), stdv),
        "w_hh0": u(ks[2], (4 * n_hidden, n_hidden), stdv),
        "b_ih0": u(ks[3], (4 * n_hidden,), stdv),
        "b_hh0": u(ks[4], (4 * n_hidden,), stdv),
        # layer 1: input size = n_hidden
        "w_ih1": u(ks[5], (4 * n_hidden, n_hidden), stdv),
        "w_hh1": u(ks[6], (4 * n_hidden, n_hidden), stdv),
        "b_ih1": u(ks[7], (4 * n_hidden,), stdv),
        "b_hh1": u(ks[8], (4 * n_hidden,), stdv),
        # fc head
        "fc_w": u(ks[9], (vocab, n_hidden), initrange),
        "fc_b": jnp.zeros((vocab,), jnp.float32),
    }


if __name__ == "__main__":
    # small, deterministic shapes consistent with the module
    VOCAB = 16       # len(tokens)
    EMBED = 32       # embed_dim
    HIDDEN = 32      # n_hidden
    LAYERS = 2       # n_layers
    B, T = 2, 8      # batch, sequence length

    key = jax.random.PRNGKey(0)
    k_param, k_x = jax.random.split(key)

    params = init_params(k_param, VOCAB, EMBED, HIDDEN)
    x_ids = jax.random.randint(k_x, (B, T), 0, VOCAB, dtype=jnp.int32)

    # init_hidden(n_seqs=B): zeros
    h0 = jnp.zeros((LAYERS, B, HIDDEN), jnp.float32)
    c0 = jnp.zeros((LAYERS, B, HIDDEN), jnp.float32)

    fwd = jax.jit(charrnn_forward)
    logits, (h, c) = fwd(x_ids, (h0, c0), params)
    jax.block_until_ready((logits, h, c))

    assert logits.shape == (B * T, VOCAB)
    assert h.shape == (LAYERS, B, HIDDEN) and c.shape == (LAYERS, B, HIDDEN)
    assert bool(jnp.all(jnp.isfinite(logits)))
    print("KERNEL_OK")
</pallas_src>

<mosaic_0001>
module attributes {stable_mosaic.version = 11 : i64} {
  func.func @charrnn_kernel(%arg0: memref<8x8x128xf32, #tpu.memory_space<vmem>>, %arg1: memref<2x8x128xf32, #tpu.memory_space<vmem>>, %arg2: memref<2x8x128xf32, #tpu.memory_space<vmem>>, %arg3: memref<128x512xf32, #tpu.memory_space<vmem>>, %arg4: memref<128x512xf32, #tpu.memory_space<vmem>>, %arg5: memref<1x512xf32, #tpu.memory_space<vmem>>, %arg6: memref<256x512xf32, #tpu.memory_space<vmem>>, %arg7: memref<1x512xf32, #tpu.memory_space<vmem>>, %arg8: memref<128x128xf32, #tpu.memory_space<vmem>>, %arg9: memref<1x128xf32, #tpu.memory_space<vmem>>, %arg10: memref<8x8x128xf32, #tpu.memory_space<vmem>>, %arg11: memref<2x8x128xf32, #tpu.memory_space<vmem>>, %arg12: memref<2x8x128xf32, #tpu.memory_space<vmem>>, %arg13: memref<8x8x512xf32, #tpu.memory_space<vmem>>, %arg14: memref<8x8x128xf32, #tpu.memory_space<vmem>>) attributes {dimension_semantics = [], scalar_prefetch = 0 : i64, scratch_operands = 2 : i64, tpu.core_type = #tpu.core_type<tc>} {
    %c0 = arith.constant 0 : index
    %c0_0 = arith.constant 0 : index
    %c0_1 = arith.constant 0 : index
    %0 = vector.load %arg0[%c0, %c0_0, %c0_1] : memref<8x8x128xf32, #tpu.memory_space<vmem>>, vector<8x8x128xf32>
    %1 = vector.shape_cast %0 : vector<8x8x128xf32> to vector<64x128xf32>
    %c0_2 = arith.constant 0 : index
    %c0_3 = arith.constant 0 : index
    %2 = vector.load %arg3[%c0_2, %c0_3] : memref<128x512xf32, #tpu.memory_space<vmem>>, vector<128x512xf32>
    %cst = arith.constant dense<0.000000e+00> : vector<64x512xf32>
    %3 = tpu.matmul %1, %2, %cst {dimension_numbers = #tpu.dot_dimension_numbers<[1], [0], [0], [1], [0, 0, 1, 1], [], []>} : vector<64x128xf32>, vector<128x512xf32>, vector<64x512xf32> -> vector<64x512xf32>
    %c0_4 = arith.constant 0 : index
    %c0_5 = arith.constant 0 : index
    %4 = vector.load %arg5[%c0_4, %c0_5] : memref<1x512xf32, #tpu.memory_space<vmem>>, vector<1x512xf32>
    %5 = vector.broadcast %4 : vector<1x512xf32> to vector<64x512xf32>
    %6 = arith.addf %3, %5 : vector<64x512xf32>
    %7 = vector.shape_cast %6 : vector<64x512xf32> to vector<8x8x512xf32>
    %c0_6 = arith.constant 0 : index
    %c0_7 = arith.constant 0 : index
    %c0_8 = arith.constant 0 : index
    %8 = vector.load %arg13[%c0_6, %c0_7, %c0_8] : memref<8x8x512xf32, #tpu.memory_space<vmem>>, vector<8x8x512xf32>
    tpu.vector_store %arg13[%c0_6, %c0_7, %c0_8], %7 {strides = array<i32>} : memref<8x8x512xf32, #tpu.memory_space<vmem>>, vector<8x8x512xf32>,
    %c0_9 = arith.constant 0 : index
    %c0_10 = arith.constant 0 : index
    %9 = vector.load %arg4[%c0_9, %c0_10] : memref<128x512xf32, #tpu.memory_space<vmem>>, vector<128x512xf32>
    %c0_11 = arith.constant 0 : index
    %c0_12 = arith.constant 0 : index
    %10 = vector.load %arg6[%c0_11, %c0_12] : memref<256x512xf32, #tpu.memory_space<vmem>>, vector<256x512xf32>
    %c0_13 = arith.constant 0 : index
    %c0_14 = arith.constant 0 : index
    %11 = vector.load %arg7[%c0_13, %c0_14] : memref<1x512xf32, #tpu.memory_space<vmem>>, vector<1x512xf32>
    %c0_15 = arith.constant 0 : index
    %c0_16 = arith.constant 0 : index
    %c0_17 = arith.constant 0 : index
    %12 = vector.load %arg1[%c0_15, %c0_16, %c0_17] : memref<2x8x128xf32, #tpu.memory_space<vmem>>, vector<1x8x128xf32>
    %13 = vector.shape_cast %12 : vector<1x8x128xf32> to vector<8x128xf32>
    %c0_18 = arith.constant 0 : index
    %c0_19 = arith.constant 0 : index
    %c0_20 = arith.constant 0 : index
    %14 = vector.load %arg2[%c0_18, %c0_19, %c0_20] : memref<2x8x128xf32, #tpu.memory_space<vmem>>, vector<1x8x128xf32>
    %15 = vector.shape_cast %14 : vector<1x8x128xf32> to vector<8x128xf32>
    %c1 = arith.constant 1 : index
    %c0_21 = arith.constant 0 : index
    %c0_22 = arith.constant 0 : index
    %16 = vector.load %arg1[%c1, %c0_21, %c0_22] : memref<2x8x128xf32, #tpu.memory_space<vmem>>, vector<1x8x128xf32>
    %17 = vector.shape_cast %16 : vector<1x8x128xf32> to vector<8x128xf32>
    %c1_23 = arith.constant 1 : index
    %c0_24 = arith.constant 0 : index
    %c0_25 = arith.constant 0 : index
    %18 = vector.load %arg2[%c1_23, %c0_24, %c0_25] : memref<2x8x128xf32, #tpu.memory_space<vmem>>, vector<1x8x128xf32>
    %19 = vector.shape_cast %18 : vector<1x8x128xf32> to vector<8x128xf32>
    %c0_i32 = arith.constant 0 : i32
    %20 = arith.index_cast %c0_i32 : i32 to index
    %c0_26 = arith.constant 0 : index
    %c0_27 = arith.constant 0 : index
    %21 = vector.load %arg13[%20, %c0_26, %c0_27] : memref<8x8x512xf32, #tpu.memory_space<vmem>>, vector<1x8x512xf32>
    %22 = vector.shape_cast %21 : vector<1x8x512xf32> to vector<8x512xf32>
    %cst_28 = arith.constant dense<0.000000e+00> : vector<8x512xf32>
    %23 = tpu.matmul %13, %9, %cst_28 {dimension_numbers = #tpu.dot_dimension_numbers<[1], [0], [0], [1], [0, 0, 1, 1], [], []>} : vector<8x128xf32>, vector<128x512xf32>, vector<8x512xf32> -> vector<8x512xf32>
    %24 = arith.addf %22, %23 : vector<8x512xf32>
    %25 = vector.extract_strided_slice %24 {offsets = [0, 0], sizes = [8, 128], strides = [1, 1]} : vector<8x512xf32> to vector<8x128xf32>
    %26 = arith.negf %25 : vector<8x128xf32>
    %27 = math.exp %26 : vector<8x128xf32>
    %cst_29 = arith.constant 1.000000e+00 : f32
    %28 = vector.broadcast %cst_29 : f32 to vector<8x128xf32>
    %29 = arith.addf %28, %27 : vector<8x128xf32>
    %30 = arith.divf %28, %29 : vector<8x128xf32>
    %31 = vector.extract_strided_slice %24 {offsets = [0, 128], sizes = [8, 128], strides = [1, 1]} : vector<8x512xf32> to vector<8x128xf32>
    %32 = arith.negf %31 : vector<8x128xf32>
    %33 = math.exp %32 : vector<8x128xf32>
    %cst_30 = arith.constant 1.000000e+00 : f32
    %34 = vector.broadcast %cst_30 : f32 to vector<8x128xf32>
    %35 = arith.addf %34, %33 : vector<8x128xf32>
    %36 = arith.divf %34, %35 : vector<8x128xf32>
    %37 = vector.extract_strided_slice %24 {offsets = [0, 256], sizes = [8, 128], strides = [1, 1]} : vector<8x512xf32> to vector<8x128xf32>
    %38 = math.tanh %37 : vector<8x128xf32>
    %39 = vector.extract_strided_slice %24 {offsets = [0, 384], sizes = [8, 128], strides = [1, 1]} : vector<8x512xf32> to vector<8x128xf32>
    %40 = arith.negf %39 : vector<8x128xf32>
    %41 = math.exp %40 : vector<8x128xf32>
    %cst_31 = arith.constant 1.000000e+00 : f32
    %42 = vector.broadcast %cst_31 : f32 to vector<8x128xf32>
    %43 = arith.addf %42, %41 : vector<8x128xf32>
    %44 = arith.divf %42, %43 : vector<8x128xf32>
    %45 = arith.mulf %36, %15 : vector<8x128xf32>
    %46 = arith.mulf %30, %38 : vector<8x128xf32>
    %47 = arith.addf %45, %46 : vector<8x128xf32>
    %48 = math.tanh %47 : vector<8x128xf32>
    %49 = arith.mulf %44, %48 : vector<8x128xf32>
    %50 = tpu.concatenate %49, %17 in 1 : vector<8x128xf32>, vector<8x128xf32> -> vector<8x256xf32>
    %cst_32 = arith.constant dense<0.000000e+00> : vector<8x512xf32>
    %51 = tpu.matmul %50, %10, %cst_32 {dimension_numbers = #tpu.dot_dimension_numbers<[1], [0], [0], [1], [0, 0, 1, 1], [], []>} : vector<8x256xf32>, vector<256x512xf32>, vector<8x512xf32> -> vector<8x512xf32>
    %52 = vector.broadcast %11 : vector<1x512xf32> to vector<8x512xf32>
    %53 = arith.addf %51, %52 : vector<8x512xf32>
    %54 = vector.extract_strided_slice %53 {offsets = [0, 0], sizes = [8, 128], strides = [1, 1]} : vector<8x512xf32> to vector<8x128xf32>
    %55 = arith.negf %54 : vector<8x128xf32>
    %56 = math.exp %55 : vector<8x128xf32>
    %cst_33 = arith.constant 1.000000e+00 : f32
    %57 = vector.broadcast %cst_33 : f32 to vector<8x128xf32>
    %58 = arith.addf %57, %56 : vector<8x128xf32>
    %59 = arith.divf %57, %58 : vector<8x128xf32>
    %60 = vector.extract_strided_slice %53 {offsets = [0, 128], sizes = [8, 128], strides = [1, 1]} : vector<8x512xf32> to vector<8x128xf32>
    %61 = arith.negf %60 : vector<8x128xf32>
    %62 = math.exp %61 : vector<8x128xf32>
    %cst_34 = arith.constant 1.000000e+00 : f32
    %63 = vector.broadcast %cst_34 : f32 to vector<8x128xf32>
    %64 = arith.addf %63, %62 : vector<8x128xf32>
    %65 = arith.divf %63, %64 : vector<8x128xf32>
    %66 = vector.extract_strided_slice %53 {offsets = [0, 256], sizes = [8, 128], strides = [1, 1]} : vector<8x512xf32> to vector<8x128xf32>
    %67 = math.tanh %66 : vector<8x128xf32>
    %68 = vector.extract_strided_slice %53 {offsets = [0, 384], sizes = [8, 128], strides = [1, 1]} : vector<8x512xf32> to vector<8x128xf32>
    %69 = arith.negf %68 : vector<8x128xf32>
    %70 = math.exp %69 : vector<8x128xf32>
    %cst_35 = arith.constant 1.000000e+00 : f32
    %71 = vector.broadcast %cst_35 : f32 to vector<8x128xf32>
    %72 = arith.addf %71, %70 : vector<8x128xf32>
    %73 = arith.divf %71, %72 : vector<8x128xf32>
    %74 = arith.mulf %65, %19 : vector<8x128xf32>
    %75 = arith.mulf %59, %67 : vector<8x128xf32>
    %76 = arith.addf %74, %75 : vector<8x128xf32>
    %77 = math.tanh %76 : vector<8x128xf32>
    %78 = arith.mulf %73, %77 : vector<8x128xf32>
    %79 = arith.index_cast %c0_i32 : i32 to index
    %c0_36 = arith.constant 0 : index
    %c0_37 = arith.constant 0 : index
    %80 = vector.load %arg14[%79, %c0_36, %c0_37] : memref<8x8x128xf32, #tpu.memory_space<vmem>>, vector<1x8x128xf32>
    %81 = vector.shape_cast %80 : vector<1x8x128xf32> to vector<8x128xf32>
    %82 = vector.shape_cast %78 : vector<8x128xf32> to vector<1x8x128xf32>
    tpu.vector_store %arg14[%79, %c0_36, %c0_37], %82 {strides = array<i32>} : memref<8x8x128xf32, #tpu.memory_space<vmem>>, vector<1x8x128xf32>,
    %c1_i32 = arith.constant 1 : i32
    %83 = arith.index_cast %c1_i32 : i32 to index
    %c0_38 = arith.constant 0 : index
    %c0_39 = arith.constant 0 : index
    %84 = vector.load %arg13[%83, %c0_38, %c0_39] : memref<8x8x512xf32, #tpu.memory_space<vmem>>, vector<1x8x512xf32>
    %85 = vector.shape_cast %84 : vector<1x8x512xf32> to vector<8x512xf32>
    %cst_40 = arith.constant dense<0.000000e+00> : vector<8x512xf32>
    %86 = tpu.matmul %49, %9, %cst_40 {dimension_numbers = #tpu.dot_dimension_numbers<[1], [0], [0], [1], [0, 0, 1, 1], [], []>} : vector<8x128xf32>, vector<128x512xf32>, vector<8x512xf32> -> vector<8x512xf32>
    %87 = arith.addf %85, %86 : vector<8x512xf32>
    %88 = vector.extract_strided_slice %87 {offsets = [0, 0], sizes = [8, 128], strides = [1, 1]} : vector<8x512xf32> to vector<8x128xf32>
    %89 = arith.negf %88 : vector<8x128xf32>
    %90 = math.exp %89 : vector<8x128xf32>
    %cst_41 = arith.constant 1.000000e+00 : f32
    %91 = vector.broadcast %cst_41 : f32 to vector<8x128xf32>
    %92 = arith.addf %91, %90 : vector<8x128xf32>
    %93 = arith.divf %91, %92 : vector<8x128xf32>
    %94 = vector.extract_strided_slice %87 {offsets = [0, 128], sizes = [8, 128], strides = [1, 1]} : vector<8x512xf32> to vector<8x128xf32>
    %95 = arith.negf %94 : vector<8x128xf32>
    %96 = math.exp %95 : vector<8x128xf32>
    %cst_42 = arith.constant 1.000000e+00 : f32
    %97 = vector.broadcast %cst_42 : f32 to vector<8x128xf32>
    %98 = arith.addf %97, %96 : vector<8x128xf32>
    %99 = arith.divf %97, %98 : vector<8x128xf32>
    %100 = vector.extract_strided_slice %87 {offsets = [0, 256], sizes = [8, 128], strides = [1, 1]} : vector<8x512xf32> to vector<8x128xf32>
    %101 = math.tanh %100 : vector<8x128xf32>
    %102 = vector.extract_strided_slice %87 {offsets = [0, 384], sizes = [8, 128], strides = [1, 1]} : vector<8x512xf32> to vector<8x128xf32>
    %103 = arith.negf %102 : vector<8x128xf32>
    %104 = math.exp %103 : vector<8x128xf32>
    %cst_43 = arith.constant 1.000000e+00 : f32
    %105 = vector.broadcast %cst_43 : f32 to vector<8x128xf32>
    %106 = arith.addf %105, %104 : vector<8x128xf32>
    %107 = arith.divf %105, %106 : vector<8x128xf32>
    %108 = arith.mulf %99, %47 : vector<8x128xf32>
    %109 = arith.mulf %93, %101 : vector<8x128xf32>
    %110 = arith.addf %108, %109 : vector<8x128xf32>
    %111 = math.tanh %110 : vector<8x128xf32>
    %112 = arith.mulf %107, %111 : vector<8x128xf32>
    %113 = tpu.concatenate %112, %78 in 1 : vector<8x128xf32>, vector<8x128xf32> -> vector<8x256xf32>
    %cst_44 = arith.constant dense<0.000000e+00> : vector<8x512xf32>
    %114 = tpu.matmul %113, %10, %cst_44 {dimension_numbers = #tpu.dot_dimension_numbers<[1], [0], [0], [1], [0, 0, 1, 1], [], []>} : vector<8x256xf32>, vector<256x512xf32>, vector<8x512xf32> -> vector<8x512xf32>
    %115 = vector.broadcast %11 : vector<1x512xf32> to vector<8x512xf32>
    %116 = arith.addf %114, %115 : vector<8x512xf32>
    %117 = vector.extract_strided_slice %116 {offsets = [0, 0], sizes = [8, 128], strides = [1, 1]} : vector<8x512xf32> to vector<8x128xf32>
    %118 = arith.negf %117 : vector<8x128xf32>
    %119 = math.exp %118 : vector<8x128xf32>
    %cst_45 = arith.constant 1.000000e+00 : f32
    %120 = vector.broadcast %cst_45 : f32 to vector<8x128xf32>
    %121 = arith.addf %120, %119 : vector<8x128xf32>
    %122 = arith.divf %120, %121 : vector<8x128xf32>
    %123 = vector.extract_strided_slice %116 {offsets = [0, 128], sizes = [8, 128], strides = [1, 1]} : vector<8x512xf32> to vector<8x128xf32>
    %124 = arith.negf %123 : vector<8x128xf32>
    %125 = math.exp %124 : vector<8x128xf32>
    %cst_46 = arith.constant 1.000000e+00 : f32
    %126 = vector.broadcast %cst_46 : f32 to vector<8x128xf32>
    %127 = arith.addf %126, %125 : vector<8x128xf32>
    %128 = arith.divf %126, %127 : vector<8x128xf32>
    %129 = vector.extract_strided_slice %116 {offsets = [0, 256], sizes = [8, 128], strides = [1, 1]} : vector<8x512xf32> to vector<8x128xf32>
    %130 = math.tanh %129 : vector<8x128xf32>
    %131 = vector.extract_strided_slice %116 {offsets = [0, 384], sizes = [8, 128], strides = [1, 1]} : vector<8x512xf32> to vector<8x128xf32>
    %132 = arith.negf %131 : vector<8x128xf32>
    %133 = math.exp %132 : vector<8x128xf32>
    %cst_47 = arith.constant 1.000000e+00 : f32
    %134 = vector.broadcast %cst_47 : f32 to vector<8x128xf32>
    %135 = arith.addf %134, %133 : vector<8x128xf32>
    %136 = arith.divf %134, %135 : vector<8x128xf32>
    %137 = arith.mulf %128, %76 : vector<8x128xf32>
    %138 = arith.mulf %122, %130 : vector<8x128xf32>
    %139 = arith.addf %137, %138 : vector<8x128xf32>
    %140 = math.tanh %139 : vector<8x128xf32>
    %141 = arith.mulf %136, %140 : vector<8x128xf32>
    %142 = arith.index_cast %c1_i32 : i32 to index
    %c0_48 = arith.constant 0 : index
    %c0_49 = arith.constant 0 : index
    %143 = vector.load %arg14[%142, %c0_48, %c0_49] : memref<8x8x128xf32, #tpu.memory_space<vmem>>, vector<1x8x128xf32>
    %144 = vector.shape_cast %143 : vector<1x8x128xf32> to vector<8x128xf32>
    %145 = vector.shape_cast %141 : vector<8x128xf32> to vector<1x8x128xf32>
    tpu.vector_store %arg14[%142, %c0_48, %c0_49], %145 {strides = array<i32>} : memref<8x8x128xf32, #tpu.memory_space<vmem>>, vector<1x8x128xf32>,
    %c2_i32 = arith.constant 2 : i32
    %146 = arith.index_cast %c2_i32 : i32 to index
    %c0_50 = arith.constant 0 : index
    %c0_51 = arith.constant 0 : index
    %147 = vector.load %arg13[%146, %c0_50, %c0_51] : memref<8x8x512xf32, #tpu.memory_space<vmem>>, vector<1x8x512xf32>
    %148 = vector.shape_cast %147 : vector<1x8x512xf32> to vector<8x512xf32>
    %cst_52 = arith.constant dense<0.000000e+00> : vector<8x512xf32>
    %149 = tpu.matmul %112, %9, %cst_52 {dimension_numbers = #tpu.dot_dimension_numbers<[1], [0], [0], [1], [0, 0, 1, 1], [], []>} : vector<8x128xf32>, vector<128x512xf32>, vector<8x512xf32> -> vector<8x512xf32>
    %150 = arith.addf %148, %149 : vector<8x512xf32>
    %151 = vector.extract_strided_slice %150 {offsets = [0, 0], sizes = [8, 128], strides = [1, 1]} : vector<8x512xf32> to vector<8x128xf32>
    %152 = arith.negf %151 : vector<8x128xf32>
    %153 = math.exp %152 : vector<8x128xf32>
    %cst_53 = arith.constant 1.000000e+00 : f32
    %154 = vector.broadcast %cst_53 : f32 to vector<8x128xf32>
    %155 = arith.addf %154, %153 : vector<8x128xf32>
    %156 = arith.divf %154, %155 : vector<8x128xf32>
    %157 = vector.extract_strided_slice %150 {offsets = [0, 128], sizes = [8, 128], strides = [1, 1]} : vector<8x512xf32> to vector<8x128xf32>
    %158 = arith.negf %157 : vector<8x128xf32>
    %159 = math.exp %158 : vector<8x128xf32>
    %cst_54 = arith.constant 1.000000e+00 : f32
    %160 = vector.broadcast %cst_54 : f32 to vector<8x128xf32>
    %161 = arith.addf %160, %159 : vector<8x128xf32>
    %162 = arith.divf %160, %161 : vector<8x128xf32>
    %163 = vector.extract_strided_slice %150 {offsets = [0, 256], sizes = [8, 128], strides = [1, 1]} : vector<8x512xf32> to vector<8x128xf32>
    %164 = math.tanh %163 : vector<8x128xf32>
    %165 = vector.extract_strided_slice %150 {offsets = [0, 384], sizes = [8, 128], strides = [1, 1]} : vector<8x512xf32> to vector<8x128xf32>
    %166 = arith.negf %165 : vector<8x128xf32>
    %167 = math.exp %166 : vector<8x128xf32>
    %cst_55 = arith.constant 1.000000e+00 : f32
    %168 = vector.broadcast %cst_55 : f32 to vector<8x128xf32>
    %169 = arith.addf %168, %167 : vector<8x128xf32>
    %170 = arith.divf %168, %169 : vector<8x128xf32>
    %171 = arith.mulf %162, %110 : vector<8x128xf32>
    %172 = arith.mulf %156, %164 : vector<8x128xf32>
    %173 = arith.addf %171, %172 : vector<8x128xf32>
    %174 = math.tanh %173 : vector<8x128xf32>
    %175 = arith.mulf %170, %174 : vector<8x128xf32>
    %176 = tpu.concatenate %175, %141 in 1 : vector<8x128xf32>, vector<8x128xf32> -> vector<8x256xf32>
    %cst_56 = arith.constant dense<0.000000e+00> : vector<8x512xf32>
    %177 = tpu.matmul %176, %10, %cst_56 {dimension_numbers = #tpu.dot_dimension_numbers<[1], [0], [0], [1], [0, 0, 1, 1], [], []>} : vector<8x256xf32>, vector<256x512xf32>, vector<8x512xf32> -> vector<8x512xf32>
    %178 = vector.broadcast %11 : vector<1x512xf32> to vector<8x512xf32>
    %179 = arith.addf %177, %178 : vector<8x512xf32>
    %180 = vector.extract_strided_slice %179 {offsets = [0, 0], sizes = [8, 128], strides = [1, 1]} : vector<8x512xf32> to vector<8x128xf32>
    %181 = arith.negf %180 : vector<8x128xf32>
    %182 = math.exp %181 : vector<8x128xf32>
    %cst_57 = arith.constant 1.000000e+00 : f32
    %183 = vector.broadcast %cst_57 : f32 to vector<8x128xf32>
    %184 = arith.addf %183, %182 : vector<8x128xf32>
    %185 = arith.divf %183, %184 : vector<8x128xf32>
    %186 = vector.extract_strided_slice %179 {offsets = [0, 128], sizes = [8, 128], strides = [1, 1]} : vector<8x512xf32> to vector<8x128xf32>
    %187 = arith.negf %186 : vector<8x128xf32>
    %188 = math.exp %187 : vector<8x128xf32>
    %cst_58 = arith.constant 1.000000e+00 : f32
    %189 = vector.broadcast %cst_58 : f32 to vector<8x128xf32>
    %190 = arith.addf %189, %188 : vector<8x128xf32>
    %191 = arith.divf %189, %190 : vector<8x128xf32>
    %192 = vector.extract_strided_slice %179 {offsets = [0, 256], sizes = [8, 128], strides = [1, 1]} : vector<8x512xf32> to vector<8x128xf32>
    %193 = math.tanh %192 : vector<8x128xf32>
    %194 = vector.extract_strided_slice %179 {offsets = [0, 384], sizes = [8, 128], strides = [1, 1]} : vector<8x512xf32> to vector<8x128xf32>
    %195 = arith.negf %194 : vector<8x128xf32>
    %196 = math.exp %195 : vector<8x128xf32>
    %cst_59 = arith.constant 1.000000e+00 : f32
    %197 = vector.broadcast %cst_59 : f32 to vector<8x128xf32>
    %198 = arith.addf %197, %196 : vector<8x128xf32>
    %199 = arith.divf %197, %198 : vector<8x128xf32>
    %200 = arith.mulf %191, %139 : vector<8x128xf32>
    %201 = arith.mulf %185, %193 : vector<8x128xf32>
    %202 = arith.addf %200, %201 : vector<8x128xf32>
    %203 = math.tanh %202 : vector<8x128xf32>
    %204 = arith.mulf %199, %203 : vector<8x128xf32>
    %205 = arith.index_cast %c2_i32 : i32 to index
    %c0_60 = arith.constant 0 : index
    %c0_61 = arith.constant 0 : index
    %206 = vector.load %arg14[%205, %c0_60, %c0_61] : memref<8x8x128xf32, #tpu.memory_space<vmem>>, vector<1x8x128xf32>
    %207 = vector.shape_cast %206 : vector<1x8x128xf32> to vector<8x128xf32>
    %208 = vector.shape_cast %204 : vector<8x128xf32> to vector<1x8x128xf32>
    tpu.vector_store %arg14[%205, %c0_60, %c0_61], %208 {strides = array<i32>} : memref<8x8x128xf32, #tpu.memory_space<vmem>>, vector<1x8x128xf32>,
    %c3_i32 = arith.constant 3 : i32
    %209 = arith.index_cast %c3_i32 : i32 to index
    %c0_62 = arith.constant 0 : index
    %c0_63 = arith.constant 0 : index
    %210 = vector.load %arg13[%209, %c0_62, %c0_63] : memref<8x8x512xf32, #tpu.memory_space<vmem>>, vector<1x8x512xf32>
    %211 = vector.shape_cast %210 : vector<1x8x512xf32> to vector<8x512xf32>
    %cst_64 = arith.constant dense<0.000000e+00> : vector<8x512xf32>
    %212 = tpu.matmul %175, %9, %cst_64 {dimension_numbers = #tpu.dot_dimension_numbers<[1], [0], [0], [1], [0, 0, 1, 1], [], []>} : vector<8x128xf32>, vector<128x512xf32>, vector<8x512xf32> -> vector<8x512xf32>
    %213 = arith.addf %211, %212 : vector<8x512xf32>
    %214 = vector.extract_strided_slice %213 {offsets = [0, 0], sizes = [8, 128], strides = [1, 1]} : vector<8x512xf32> to vector<8x128xf32>
    %215 = arith.negf %214 : vector<8x128xf32>
    %216 = math.exp %215 : vector<8x128xf32>
    %cst_65 = arith.constant 1.000000e+00 : f32
    %217 = vector.broadcast %cst_65 : f32 to vector<8x128xf32>
    %218 = arith.addf %217, %216 : vector<8x128xf32>
    %219 = arith.divf %217, %218 : vector<8x128xf32>
    %220 = vector.extract_strided_slice %213 {offsets = [0, 128], sizes = [8, 128], strides = [1, 1]} : vector<8x512xf32> to vector<8x128xf32>
    %221 = arith.negf %220 : vector<8x128xf32>
    %222 = math.exp %221 : vector<8x128xf32>
    %cst_66 = arith.constant 1.000000e+00 : f32
    %223 = vector.broadcast %cst_66 : f32 to vector<8x128xf32>
    %224 = arith.addf %223, %222 : vector<8x128xf32>
    %225 = arith.divf %223, %224 : vector<8x128xf32>
    %226 = vector.extract_strided_slice %213 {offsets = [0, 256], sizes = [8, 128], strides = [1, 1]} : vector<8x512xf32> to vector<8x128xf32>
    %227 = math.tanh %226 : vector<8x128xf32>
    %228 = vector.extract_strided_slice %213 {offsets = [0, 384], sizes = [8, 128], strides = [1, 1]} : vector<8x512xf32> to vector<8x128xf32>
    %229 = arith.negf %228 : vector<8x128xf32>
    %230 = math.exp %229 : vector<8x128xf32>
    %cst_67 = arith.constant 1.000000e+00 : f32
    %231 = vector.broadcast %cst_67 : f32 to vector<8x128xf32>
    %232 = arith.addf %231, %230 : vector<8x128xf32>
    %233 = arith.divf %231, %232 : vector<8x128xf32>
    %234 = arith.mulf %225, %173 : vector<8x128xf32>
    %235 = arith.mulf %219, %227 : vector<8x128xf32>
    %236 = arith.addf %234, %235 : vector<8x128xf32>
    %237 = math.tanh %236 : vector<8x128xf32>
    %238 = arith.mulf %233, %237 : vector<8x128xf32>
    %239 = tpu.concatenate %238, %204 in 1 : vector<8x128xf32>, vector<8x128xf32> -> vector<8x256xf32>
    %cst_68 = arith.constant dense<0.000000e+00> : vector<8x512xf32>
    %240 = tpu.matmul %239, %10, %cst_68 {dimension_numbers = #tpu.dot_dimension_numbers<[1], [0], [0], [1], [0, 0, 1, 1], [], []>} : vector<8x256xf32>, vector<256x512xf32>, vector<8x512xf32> -> vector<8x512xf32>
    %241 = vector.broadcast %11 : vector<1x512xf32> to vector<8x512xf32>
    %242 = arith.addf %240, %241 : vector<8x512xf32>
    %243 = vector.extract_strided_slice %242 {offsets = [0, 0], sizes = [8, 128], strides = [1, 1]} : vector<8x512xf32> to vector<8x128xf32>
    %244 = arith.negf %243 : vector<8x128xf32>
    %245 = math.exp %244 : vector<8x128xf32>
    %cst_69 = arith.constant 1.000000e+00 : f32
    %246 = vector.broadcast %cst_69 : f32 to vector<8x128xf32>
    %247 = arith.addf %246, %245 : vector<8x128xf32>
    %248 = arith.divf %246, %247 : vector<8x128xf32>
    %249 = vector.extract_strided_slice %242 {offsets = [0, 128], sizes = [8, 128], strides = [1, 1]} : vector<8x512xf32> to vector<8x128xf32>
    %250 = arith.negf %249 : vector<8x128xf32>
    %251 = math.exp %250 : vector<8x128xf32>
    %cst_70 = arith.constant 1.000000e+00 : f32
    %252 = vector.broadcast %cst_70 : f32 to vector<8x128xf32>
    %253 = arith.addf %252, %251 : vector<8x128xf32>
    %254 = arith.divf %252, %253 : vector<8x128xf32>
    %255 = vector.extract_strided_slice %242 {offsets = [0, 256], sizes = [8, 128], strides = [1, 1]} : vector<8x512xf32> to vector<8x128xf32>
    %256 = math.tanh %255 : vector<8x128xf32>
    %257 = vector.extract_strided_slice %242 {offsets = [0, 384], sizes = [8, 128], strides = [1, 1]} : vector<8x512xf32> to vector<8x128xf32>
    %258 = arith.negf %257 : vector<8x128xf32>
    %259 = math.exp %258 : vector<8x128xf32>
    %cst_71 = arith.constant 1.000000e+00 : f32
    %260 = vector.broadcast %cst_71 : f32 to vector<8x128xf32>
    %261 = arith.addf %260, %259 : vector<8x128xf32>
    %262 = arith.divf %260, %261 : vector<8x128xf32>
    %263 = arith.mulf %254, %202 : vector<8x128xf32>
    %264 = arith.mulf %248, %256 : vector<8x128xf32>
    %265 = arith.addf %263, %264 : vector<8x128xf32>
    %266 = math.tanh %265 : vector<8x128xf32>
    %267 = arith.mulf %262, %266 : vector<8x128xf32>
    %268 = arith.index_cast %c3_i32 : i32 to index
    %c0_72 = arith.constant 0 : index
    %c0_73 = arith.constant 0 : index
    %269 = vector.load %arg14[%268, %c0_72, %c0_73] : memref<8x8x128xf32, #tpu.memory_space<vmem>>, vector<1x8x128xf32>
    %270 = vector.shape_cast %269 : vector<1x8x128xf32> to vector<8x128xf32>
    %271 = vector.shape_cast %267 : vector<8x128xf32> to vector<1x8x128xf32>
    tpu.vector_store %arg14[%268, %c0_72, %c0_73], %271 {strides = array<i32>} : memref<8x8x128xf32, #tpu.memory_space<vmem>>, vector<1x8x128xf32>,
    %c4_i32 = arith.constant 4 : i32
    %272 = arith.index_cast %c4_i32 : i32 to index
    %c0_74 = arith.constant 0 : index
    %c0_75 = arith.constant 0 : index
    %273 = vector.load %arg13[%272, %c0_74, %c0_75] : memref<8x8x512xf32, #tpu.memory_space<vmem>>, vector<1x8x512xf32>
    %274 = vector.shape_cast %273 : vector<1x8x512xf32> to vector<8x512xf32>
    %cst_76 = arith.constant dense<0.000000e+00> : vector<8x512xf32>
    %275 = tpu.matmul %238, %9, %cst_76 {dimension_numbers = #tpu.dot_dimension_numbers<[1], [0], [0], [1], [0, 0, 1, 1], [], []>} : vector<8x128xf32>, vector<128x512xf32>, vector<8x512xf32> -> vector<8x512xf32>
    %276 = arith.addf %274, %275 : vector<8x512xf32>
    %277 = vector.extract_strided_slice %276 {offsets = [0, 0], sizes = [8, 128], strides = [1, 1]} : vector<8x512xf32> to vector<8x128xf32>
    %278 = arith.negf %277 : vector<8x128xf32>
    %279 = math.exp %278 : vector<8x128xf32>
    %cst_77 = arith.constant 1.000000e+00 : f32
    %280 = vector.broadcast %cst_77 : f32 to vector<8x128xf32>
    %281 = arith.addf %280, %279 : vector<8x128xf32>
    %282 = arith.divf %280, %281 : vector<8x128xf32>
    %283 = vector.extract_strided_slice %276 {offsets = [0, 128], sizes = [8, 128], strides = [1, 1]} : vector<8x512xf32> to vector<8x128xf32>
    %284 = arith.negf %283 : vector<8x128xf32>
    %285 = math.exp %284 : vector<8x128xf32>
    %cst_78 = arith.constant 1.000000e+00 : f32
    %286 = vector.broadcast %cst_78 : f32 to vector<8x128xf32>
    %287 = arith.addf %286, %285 : vector<8x128xf32>
    %288 = arith.divf %286, %287 : vector<8x128xf32>
    %289 = vector.extract_strided_slice %276 {offsets = [0, 256], sizes = [8, 128], strides = [1, 1]} : vector<8x512xf32> to vector<8x128xf32>
    %290 = math.tanh %289 : vector<8x128xf32>
    %291 = vector.extract_strided_slice %276 {offsets = [0, 384], sizes = [8, 128], strides = [1, 1]} : vector<8x512xf32> to vector<8x128xf32>
    %292 = arith.negf %291 : vector<8x128xf32>
    %293 = math.exp %292 : vector<8x128xf32>
    %cst_79 = arith.constant 1.000000e+00 : f32
    %294 = vector.broadcast %cst_79 : f32 to vector<8x128xf32>
    %295 = arith.addf %294, %293 : vector<8x128xf32>
    %296 = arith.divf %294, %295 : vector<8x128xf32>
    %297 = arith.mulf %288, %236 : vector<8x128xf32>
    %298 = arith.mulf %282, %290 : vector<8x128xf32>
    %299 = arith.addf %297, %298 : vector<8x128xf32>
    %300 = math.tanh %299 : vector<8x128xf32>
    %301 = arith.mulf %296, %300 : vector<8x128xf32>
    %302 = tpu.concatenate %301, %267 in 1 : vector<8x128xf32>, vector<8x128xf32> -> vector<8x256xf32>
    %cst_80 = arith.constant dense<0.000000e+00> : vector<8x512xf32>
    %303 = tpu.matmul %302, %10, %cst_80 {dimension_numbers = #tpu.dot_dimension_numbers<[1], [0], [0], [1], [0, 0, 1, 1], [], []>} : vector<8x256xf32>, vector<256x512xf32>, vector<8x512xf32> -> vector<8x512xf32>
    %304 = vector.broadcast %11 : vector<1x512xf32> to vector<8x512xf32>
    %305 = arith.addf %303, %304 : vector<8x512xf32>
    %306 = vector.extract_strided_slice %305 {offsets = [0, 0], sizes = [8, 128], strides = [1, 1]} : vector<8x512xf32> to vector<8x128xf32>
    %307 = arith.negf %306 : vector<8x128xf32>
    %308 = math.exp %307 : vector<8x128xf32>
    %cst_81 = arith.constant 1.000000e+00 : f32
    %309 = vector.broadcast %cst_81 : f32 to vector<8x128xf32>
    %310 = arith.addf %309, %308 : vector<8x128xf32>
    %311 = arith.divf %309, %310 : vector<8x128xf32>
    %312 = vector.extract_strided_slice %305 {offsets = [0, 128], sizes = [8, 128], strides = [1, 1]} : vector<8x512xf32> to vector<8x128xf32>
    %313 = arith.negf %312 : vector<8x128xf32>
    %314 = math.exp %313 : vector<8x128xf32>
    %cst_82 = arith.constant 1.000000e+00 : f32
    %315 = vector.broadcast %cst_82 : f32 to vector<8x128xf32>
    %316 = arith.addf %315, %314 : vector<8x128xf32>
    %317 = arith.divf %315, %316 : vector<8x128xf32>
    %318 = vector.extract_strided_slice %305 {offsets = [0, 256], sizes = [8, 128], strides = [1, 1]} : vector<8x512xf32> to vector<8x128xf32>
    %319 = math.tanh %318 : vector<8x128xf32>
    %320 = vector.extract_strided_slice %305 {offsets = [0, 384], sizes = [8, 128], strides = [1, 1]} : vector<8x512xf32> to vector<8x128xf32>
    %321 = arith.negf %320 : vector<8x128xf32>
    %322 = math.exp %321 : vector<8x128xf32>
    %cst_83 = arith.constant 1.000000e+00 : f32
    %323 = vector.broadcast %cst_83 : f32 to vector<8x128xf32>
    %324 = arith.addf %323, %322 : vector<8x128xf32>
    %325 = arith.divf %323, %324 : vector<8x128xf32>
    %326 = arith.mulf %317, %265 : vector<8x128xf32>
    %327 = arith.mulf %311, %319 : vector<8x128xf32>
    %328 = arith.addf %326, %327 : vector<8x128xf32>
    %329 = math.tanh %328 : vector<8x128xf32>
    %330 = arith.mulf %325, %329 : vector<8x128xf32>
    %331 = arith.index_cast %c4_i32 : i32 to index
    %c0_84 = arith.constant 0 : index
    %c0_85 = arith.constant 0 : index
    %332 = vector.load %arg14[%331, %c0_84, %c0_85] : memref<8x8x128xf32, #tpu.memory_space<vmem>>, vector<1x8x128xf32>
    %333 = vector.shape_cast %332 : vector<1x8x128xf32> to vector<8x128xf32>
    %334 = vector.shape_cast %330 : vector<8x128xf32> to vector<1x8x128xf32>
    tpu.vector_store %arg14[%331, %c0_84, %c0_85], %334 {strides = array<i32>} : memref<8x8x128xf32, #tpu.memory_space<vmem>>, vector<1x8x128xf32>,
    %c5_i32 = arith.constant 5 : i32
    %335 = arith.index_cast %c5_i32 : i32 to index
    %c0_86 = arith.constant 0 : index
    %c0_87 = arith.constant 0 : index
    %336 = vector.load %arg13[%335, %c0_86, %c0_87] : memref<8x8x512xf32, #tpu.memory_space<vmem>>, vector<1x8x512xf32>
    %337 = vector.shape_cast %336 : vector<1x8x512xf32> to vector<8x512xf32>
    %cst_88 = arith.constant dense<0.000000e+00> : vector<8x512xf32>
    %338 = tpu.matmul %301, %9, %cst_88 {dimension_numbers = #tpu.dot_dimension_numbers<[1], [0], [0], [1], [0, 0, 1, 1], [], []>} : vector<8x128xf32>, vector<128x512xf32>, vector<8x512xf32> -> vector<8x512xf32>
    %339 = arith.addf %337, %338 : vector<8x512xf32>
    %340 = vector.extract_strided_slice %339 {offsets = [0, 0], sizes = [8, 128], strides = [1, 1]} : vector<8x512xf32> to vector<8x128xf32>
    %341 = arith.negf %340 : vector<8x128xf32>
    %342 = math.exp %341 : vector<8x128xf32>
    %cst_89 = arith.constant 1.000000e+00 : f32
    %343 = vector.broadcast %cst_89 : f32 to vector<8x128xf32>
    %344 = arith.addf %343, %342 : vector<8x128xf32>
    %345 = arith.divf %343, %344 : vector<8x128xf32>
    %346 = vector.extract_strided_slice %339 {offsets = [0, 128], sizes = [8, 128], strides = [1, 1]} : vector<8x512xf32> to vector<8x128xf32>
    %347 = arith.negf %346 : vector<8x128xf32>
    %348 = math.exp %347 : vector<8x128xf32>
    %cst_90 = arith.constant 1.000000e+00 : f32
    %349 = vector.broadcast %cst_90 : f32 to vector<8x128xf32>
    %350 = arith.addf %349, %348 : vector<8x128xf32>
    %351 = arith.divf %349, %350 : vector<8x128xf32>
    %352 = vector.extract_strided_slice %339 {offsets = [0, 256], sizes = [8, 128], strides = [1, 1]} : vector<8x512xf32> to vector<8x128xf32>
    %353 = math.tanh %352 : vector<8x128xf32>
    %354 = vector.extract_strided_slice %339 {offsets = [0, 384], sizes = [8, 128], strides = [1, 1]} : vector<8x512xf32> to vector<8x128xf32>
    %355 = arith.negf %354 : vector<8x128xf32>
    %356 = math.exp %355 : vector<8x128xf32>
    %cst_91 = arith.constant 1.000000e+00 : f32
    %357 = vector.broadcast %cst_91 : f32 to vector<8x128xf32>
    %358 = arith.addf %357, %356 : vector<8x128xf32>
    %359 = arith.divf %357, %358 : vector<8x128xf32>
    %360 = arith.mulf %351, %299 : vector<8x128xf32>
    %361 = arith.mulf %345, %353 : vector<8x128xf32>
    %362 = arith.addf %360, %361 : vector<8x128xf32>
    %363 = math.tanh %362 : vector<8x128xf32>
    %364 = arith.mulf %359, %363 : vector<8x128xf32>
    %365 = tpu.concatenate %364, %330 in 1 : vector<8x128xf32>, vector<8x128xf32> -> vector<8x256xf32>
    %cst_92 = arith.constant dense<0.000000e+00> : vector<8x512xf32>
    %366 = tpu.matmul %365, %10, %cst_92 {dimension_numbers = #tpu.dot_dimension_numbers<[1], [0], [0], [1], [0, 0, 1, 1], [], []>} : vector<8x256xf32>, vector<256x512xf32>, vector<8x512xf32> -> vector<8x512xf32>
    %367 = vector.broadcast %11 : vector<1x512xf32> to vector<8x512xf32>
    %368 = arith.addf %366, %367 : vector<8x512xf32>
    %369 = vector.extract_strided_slice %368 {offsets = [0, 0], sizes = [8, 128], strides = [1, 1]} : vector<8x512xf32> to vector<8x128xf32>
    %370 = arith.negf %369 : vector<8x128xf32>
    %371 = math.exp %370 : vector<8x128xf32>
    %cst_93 = arith.constant 1.000000e+00 : f32
    %372 = vector.broadcast %cst_93 : f32 to vector<8x128xf32>
    %373 = arith.addf %372, %371 : vector<8x128xf32>
    %374 = arith.divf %372, %373 : vector<8x128xf32>
    %375 = vector.extract_strided_slice %368 {offsets = [0, 128], sizes = [8, 128], strides = [1, 1]} : vector<8x512xf32> to vector<8x128xf32>
    %376 = arith.negf %375 : vector<8x128xf32>
    %377 = math.exp %376 : vector<8x128xf32>
    %cst_94 = arith.constant 1.000000e+00 : f32
    %378 = vector.broadcast %cst_94 : f32 to vector<8x128xf32>
    %379 = arith.addf %378, %377 : vector<8x128xf32>
    %380 = arith.divf %378, %379 : vector<8x128xf32>
    %381 = vector.extract_strided_slice %368 {offsets = [0, 256], sizes = [8, 128], strides = [1, 1]} : vector<8x512xf32> to vector<8x128xf32>
    %382 = math.tanh %381 : vector<8x128xf32>
    %383 = vector.extract_strided_slice %368 {offsets = [0, 384], sizes = [8, 128], strides = [1, 1]} : vector<8x512xf32> to vector<8x128xf32>
    %384 = arith.negf %383 : vector<8x128xf32>
    %385 = math.exp %384 : vector<8x128xf32>
    %cst_95 = arith.constant 1.000000e+00 : f32
    %386 = vector.broadcast %cst_95 : f32 to vector<8x128xf32>
    %387 = arith.addf %386, %385 : vector<8x128xf32>
    %388 = arith.divf %386, %387 : vector<8x128xf32>
    %389 = arith.mulf %380, %328 : vector<8x128xf32>
    %390 = arith.mulf %374, %382 : vector<8x128xf32>
    %391 = arith.addf %389, %390 : vector<8x128xf32>
    %392 = math.tanh %391 : vector<8x128xf32>
    %393 = arith.mulf %388, %392 : vector<8x128xf32>
    %394 = arith.index_cast %c5_i32 : i32 to index
    %c0_96 = arith.constant 0 : index
    %c0_97 = arith.constant 0 : index
    %395 = vector.load %arg14[%394, %c0_96, %c0_97] : memref<8x8x128xf32, #tpu.memory_space<vmem>>, vector<1x8x128xf32>
    %396 = vector.shape_cast %395 : vector<1x8x128xf32> to vector<8x128xf32>
    %397 = vector.shape_cast %393 : vector<8x128xf32> to vector<1x8x128xf32>
    tpu.vector_store %arg14[%394, %c0_96, %c0_97], %397 {strides = array<i32>} : memref<8x8x128xf32, #tpu.memory_space<vmem>>, vector<1x8x128xf32>,
    %c6_i32 = arith.constant 6 : i32
    %398 = arith.index_cast %c6_i32 : i32 to index
    %c0_98 = arith.constant 0 : index
    %c0_99 = arith.constant 0 : index
    %399 = vector.load %arg13[%398, %c0_98, %c0_99] : memref<8x8x512xf32, #tpu.memory_space<vmem>>, vector<1x8x512xf32>
    %400 = vector.shape_cast %399 : vector<1x8x512xf32> to vector<8x512xf32>
    %cst_100 = arith.constant dense<0.000000e+00> : vector<8x512xf32>
    %401 = tpu.matmul %364, %9, %cst_100 {dimension_numbers = #tpu.dot_dimension_numbers<[1], [0], [0], [1], [0, 0, 1, 1], [], []>} : vector<8x128xf32>, vector<128x512xf32>, vector<8x512xf32> -> vector<8x512xf32>
    %402 = arith.addf %400, %401 : vector<8x512xf32>
    %403 = vector.extract_strided_slice %402 {offsets = [0, 0], sizes = [8, 128], strides = [1, 1]} : vector<8x512xf32> to vector<8x128xf32>
    %404 = arith.negf %403 : vector<8x128xf32>
    %405 = math.exp %404 : vector<8x128xf32>
    %cst_101 = arith.constant 1.000000e+00 : f32
    %406 = vector.broadcast %cst_101 : f32 to vector<8x128xf32>
    %407 = arith.addf %406, %405 : vector<8x128xf32>
    %408 = arith.divf %406, %407 : vector<8x128xf32>
    %409 = vector.extract_strided_slice %402 {offsets = [0, 128], sizes = [8, 128], strides = [1, 1]} : vector<8x512xf32> to vector<8x128xf32>
    %410 = arith.negf %409 : vector<8x128xf32>
    %411 = math.exp %410 : vector<8x128xf32>
    %cst_102 = arith.constant 1.000000e+00 : f32
    %412 = vector.broadcast %cst_102 : f32 to vector<8x128xf32>
    %413 = arith.addf %412, %411 : vector<8x128xf32>
    %414 = arith.divf %412, %413 : vector<8x128xf32>
    %415 = vector.extract_strided_slice %402 {offsets = [0, 256], sizes = [8, 128], strides = [1, 1]} : vector<8x512xf32> to vector<8x128xf32>
    %416 = math.tanh %415 : vector<8x128xf32>
    %417 = vector.extract_strided_slice %402 {offsets = [0, 384], sizes = [8, 128], strides = [1, 1]} : vector<8x512xf32> to vector<8x128xf32>
    %418 = arith.negf %417 : vector<8x128xf32>
    %419 = math.exp %418 : vector<8x128xf32>
    %cst_103 = arith.constant 1.000000e+00 : f32
    %420 = vector.broadcast %cst_103 : f32 to vector<8x128xf32>
    %421 = arith.addf %420, %419 : vector<8x128xf32>
    %422 = arith.divf %420, %421 : vector<8x128xf32>
    %423 = arith.mulf %414, %362 : vector<8x128xf32>
    %424 = arith.mulf %408, %416 : vector<8x128xf32>
    %425 = arith.addf %423, %424 : vector<8x128xf32>
    %426 = math.tanh %425 : vector<8x128xf32>
    %427 = arith.mulf %422, %426 : vector<8x128xf32>
    %428 = tpu.concatenate %427, %393 in 1 : vector<8x128xf32>, vector<8x128xf32> -> vector<8x256xf32>
    %cst_104 = arith.constant dense<0.000000e+00> : vector<8x512xf32>
    %429 = tpu.matmul %428, %10, %cst_104 {dimension_numbers = #tpu.dot_dimension_numbers<[1], [0], [0], [1], [0, 0, 1, 1], [], []>} : vector<8x256xf32>, vector<256x512xf32>, vector<8x512xf32> -> vector<8x512xf32>
    %430 = vector.broadcast %11 : vector<1x512xf32> to vector<8x512xf32>
    %431 = arith.addf %429, %430 : vector<8x512xf32>
    %432 = vector.extract_strided_slice %431 {offsets = [0, 0], sizes = [8, 128], strides = [1, 1]} : vector<8x512xf32> to vector<8x128xf32>
    %433 = arith.negf %432 : vector<8x128xf32>
    %434 = math.exp %433 : vector<8x128xf32>
    %cst_105 = arith.constant 1.000000e+00 : f32
    %435 = vector.broadcast %cst_105 : f32 to vector<8x128xf32>
    %436 = arith.addf %435, %434 : vector<8x128xf32>
    %437 = arith.divf %435, %436 : vector<8x128xf32>
    %438 = vector.extract_strided_slice %431 {offsets = [0, 128], sizes = [8, 128], strides = [1, 1]} : vector<8x512xf32> to vector<8x128xf32>
    %439 = arith.negf %438 : vector<8x128xf32>
    %440 = math.exp %439 : vector<8x128xf32>
    %cst_106 = arith.constant 1.000000e+00 : f32
    %441 = vector.broadcast %cst_106 : f32 to vector<8x128xf32>
    %442 = arith.addf %441, %440 : vector<8x128xf32>
    %443 = arith.divf %441, %442 : vector<8x128xf32>
    %444 = vector.extract_strided_slice %431 {offsets = [0, 256], sizes = [8, 128], strides = [1, 1]} : vector<8x512xf32> to vector<8x128xf32>
    %445 = math.tanh %444 : vector<8x128xf32>
    %446 = vector.extract_strided_slice %431 {offsets = [0, 384], sizes = [8, 128], strides = [1, 1]} : vector<8x512xf32> to vector<8x128xf32>
    %447 = arith.negf %446 : vector<8x128xf32>
    %448 = math.exp %447 : vector<8x128xf32>
    %cst_107 = arith.constant 1.000000e+00 : f32
    %449 = vector.broadcast %cst_107 : f32 to vector<8x128xf32>
    %450 = arith.addf %449, %448 : vector<8x128xf32>
    %451 = arith.divf %449, %450 : vector<8x128xf32>
    %452 = arith.mulf %443, %391 : vector<8x128xf32>
    %453 = arith.mulf %437, %445 : vector<8x128xf32>
    %454 = arith.addf %452, %453 : vector<8x128xf32>
    %455 = math.tanh %454 : vector<8x128xf32>
    %456 = arith.mulf %451, %455 : vector<8x128xf32>
    %457 = arith.index_cast %c6_i32 : i32 to index
    %c0_108 = arith.constant 0 : index
    %c0_109 = arith.constant 0 : index
    %458 = vector.load %arg14[%457, %c0_108, %c0_109] : memref<8x8x128xf32, #tpu.memory_space<vmem>>, vector<1x8x128xf32>
    %459 = vector.shape_cast %458 : vector<1x8x128xf32> to vector<8x128xf32>
    %460 = vector.shape_cast %456 : vector<8x128xf32> to vector<1x8x128xf32>
    tpu.vector_store %arg14[%457, %c0_108, %c0_109], %460 {strides = array<i32>} : memref<8x8x128xf32, #tpu.memory_space<vmem>>, vector<1x8x128xf32>,
    %c7_i32 = arith.constant 7 : i32
    %461 = arith.index_cast %c7_i32 : i32 to index
    %c0_110 = arith.constant 0 : index
    %c0_111 = arith.constant 0 : index
    %462 = vector.load %arg13[%461, %c0_110, %c0_111] : memref<8x8x512xf32, #tpu.memory_space<vmem>>, vector<1x8x512xf32>
    %463 = vector.shape_cast %462 : vector<1x8x512xf32> to vector<8x512xf32>
    %cst_112 = arith.constant dense<0.000000e+00> : vector<8x512xf32>
    %464 = tpu.matmul %427, %9, %cst_112 {dimension_numbers = #tpu.dot_dimension_numbers<[1], [0], [0], [1], [0, 0, 1, 1], [], []>} : vector<8x128xf32>, vector<128x512xf32>, vector<8x512xf32> -> vector<8x512xf32>
    %465 = arith.addf %463, %464 : vector<8x512xf32>
    %466 = vector.extract_strided_slice %465 {offsets = [0, 0], sizes = [8, 128], strides = [1, 1]} : vector<8x512xf32> to vector<8x128xf32>
    %467 = arith.negf %466 : vector<8x128xf32>
    %468 = math.exp %467 : vector<8x128xf32>
    %cst_113 = arith.constant 1.000000e+00 : f32
    %469 = vector.broadcast %cst_113 : f32 to vector<8x128xf32>
    %470 = arith.addf %469, %468 : vector<8x128xf32>
    %471 = arith.divf %469, %470 : vector<8x128xf32>
    %472 = vector.extract_strided_slice %465 {offsets = [0, 128], sizes = [8, 128], strides = [1, 1]} : vector<8x512xf32> to vector<8x128xf32>
    %473 = arith.negf %472 : vector<8x128xf32>
    %474 = math.exp %473 : vector<8x128xf32>
    %cst_114 = arith.constant 1.000000e+00 : f32
    %475 = vector.broadcast %cst_114 : f32 to vector<8x128xf32>
    %476 = arith.addf %475, %474 : vector<8x128xf32>
    %477 = arith.divf %475, %476 : vector<8x128xf32>
    %478 = vector.extract_strided_slice %465 {offsets = [0, 256], sizes = [8, 128], strides = [1, 1]} : vector<8x512xf32> to vector<8x128xf32>
    %479 = math.tanh %478 : vector<8x128xf32>
    %480 = vector.extract_strided_slice %465 {offsets = [0, 384], sizes = [8, 128], strides = [1, 1]} : vector<8x512xf32> to vector<8x128xf32>
    %481 = arith.negf %480 : vector<8x128xf32>
    %482 = math.exp %481 : vector<8x128xf32>
    %cst_115 = arith.constant 1.000000e+00 : f32
    %483 = vector.broadcast %cst_115 : f32 to vector<8x128xf32>
    %484 = arith.addf %483, %482 : vector<8x128xf32>
    %485 = arith.divf %483, %484 : vector<8x128xf32>
    %486 = arith.mulf %477, %425 : vector<8x128xf32>
    %487 = arith.mulf %471, %479 : vector<8x128xf32>
    %488 = arith.addf %486, %487 : vector<8x128xf32>
    %489 = math.tanh %488 : vector<8x128xf32>
    %490 = arith.mulf %485, %489 : vector<8x128xf32>
    %491 = tpu.concatenate %490, %456 in 1 : vector<8x128xf32>, vector<8x128xf32> -> vector<8x256xf32>
    %cst_116 = arith.constant dense<0.000000e+00> : vector<8x512xf32>
    %492 = tpu.matmul %491, %10, %cst_116 {dimension_numbers = #tpu.dot_dimension_numbers<[1], [0], [0], [1], [0, 0, 1, 1], [], []>} : vector<8x256xf32>, vector<256x512xf32>, vector<8x512xf32> -> vector<8x512xf32>
    %493 = vector.broadcast %11 : vector<1x512xf32> to vector<8x512xf32>
    %494 = arith.addf %492, %493 : vector<8x512xf32>
    %495 = vector.extract_strided_slice %494 {offsets = [0, 0], sizes = [8, 128], strides = [1, 1]} : vector<8x512xf32> to vector<8x128xf32>
    %496 = arith.negf %495 : vector<8x128xf32>
    %497 = math.exp %496 : vector<8x128xf32>
    %cst_117 = arith.constant 1.000000e+00 : f32
    %498 = vector.broadcast %cst_117 : f32 to vector<8x128xf32>
    %499 = arith.addf %498, %497 : vector<8x128xf32>
    %500 = arith.divf %498, %499 : vector<8x128xf32>
    %501 = vector.extract_strided_slice %494 {offsets = [0, 128], sizes = [8, 128], strides = [1, 1]} : vector<8x512xf32> to vector<8x128xf32>
    %502 = arith.negf %501 : vector<8x128xf32>
    %503 = math.exp %502 : vector<8x128xf32>
    %cst_118 = arith.constant 1.000000e+00 : f32
    %504 = vector.broadcast %cst_118 : f32 to vector<8x128xf32>
    %505 = arith.addf %504, %503 : vector<8x128xf32>
    %506 = arith.divf %504, %505 : vector<8x128xf32>
    %507 = vector.extract_strided_slice %494 {offsets = [0, 256], sizes = [8, 128], strides = [1, 1]} : vector<8x512xf32> to vector<8x128xf32>
    %508 = math.tanh %507 : vector<8x128xf32>
    %509 = vector.extract_strided_slice %494 {offsets = [0, 384], sizes = [8, 128], strides = [1, 1]} : vector<8x512xf32> to vector<8x128xf32>
    %510 = arith.negf %509 : vector<8x128xf32>
    %511 = math.exp %510 : vector<8x128xf32>
    %cst_119 = arith.constant 1.000000e+00 : f32
    %512 = vector.broadcast %cst_119 : f32 to vector<8x128xf32>
    %513 = arith.addf %512, %511 : vector<8x128xf32>
    %514 = arith.divf %512, %513 : vector<8x128xf32>
    %515 = arith.mulf %506, %454 : vector<8x128xf32>
    %516 = arith.mulf %500, %508 : vector<8x128xf32>
    %517 = arith.addf %515, %516 : vector<8x128xf32>
    %518 = math.tanh %517 : vector<8x128xf32>
    %519 = arith.mulf %514, %518 : vector<8x128xf32>
    %520 = arith.index_cast %c7_i32 : i32 to index
    %c0_120 = arith.constant 0 : index
    %c0_121 = arith.constant 0 : index
    %521 = vector.load %arg14[%520, %c0_120, %c0_121] : memref<8x8x128xf32, #tpu.memory_space<vmem>>, vector<1x8x128xf32>
    %522 = vector.shape_cast %521 : vector<1x8x128xf32> to vector<8x128xf32>
    %523 = vector.shape_cast %519 : vector<8x128xf32> to vector<1x8x128xf32>
    tpu.vector_store %arg14[%520, %c0_120, %c0_121], %523 {strides = array<i32>} : memref<8x8x128xf32, #tpu.memory_space<vmem>>, vector<1x8x128xf32>,
    %c8_i32 = arith.constant 8 : i32
    %c0_122 = arith.constant 0 : index
    %c0_123 = arith.constant 0 : index
    %c0_124 = arith.constant 0 : index
    %524 = vector.load %arg11[%c0_122, %c0_123, %c0_124] : memref<2x8x128xf32, #tpu.memory_space<vmem>>, vector<1x8x128xf32>
    %525 = vector.shape_cast %524 : vector<1x8x128xf32> to vector<8x128xf32>
    %526 = vector.shape_cast %490 : vector<8x128xf32> to vector<1x8x128xf32>
    tpu.vector_store %arg11[%c0_122, %c0_123, %c0_124], %526 {strides = array<i32>} : memref<2x8x128xf32, #tpu.memory_space<vmem>>, vector<1x8x128xf32>,
    %c1_125 = arith.constant 1 : index
    %c0_126 = arith.constant 0 : index
    %c0_127 = arith.constant 0 : index
    %527 = vector.load %arg11[%c1_125, %c0_126, %c0_127] : memref<2x8x128xf32, #tpu.memory_space<vmem>>, vector<1x8x128xf32>
    %528 = vector.shape_cast %527 : vector<1x8x128xf32> to vector<8x128xf32>
    %529 = vector.shape_cast %519 : vector<8x128xf32> to vector<1x8x128xf32>
    tpu.vector_store %arg11[%c1_125, %c0_126, %c0_127], %529 {strides = array<i32>} : memref<2x8x128xf32, #tpu.memory_space<vmem>>, vector<1x8x128xf32>,
    %c0_128 = arith.constant 0 : index
    %c0_129 = arith.constant 0 : index
    %c0_130 = arith.constant 0 : index
    %530 = vector.load %arg12[%c0_128, %c0_129, %c0_130] : memref<2x8x128xf32, #tpu.memory_space<vmem>>, vector<1x8x128xf32>
    %531 = vector.shape_cast %530 : vector<1x8x128xf32> to vector<8x128xf32>
    %532 = vector.shape_cast %488 : vector<8x128xf32> to vector<1x8x128xf32>
    tpu.vector_store %arg12[%c0_128, %c0_129, %c0_130], %532 {strides = array<i32>} : memref<2x8x128xf32, #tpu.memory_space<vmem>>, vector<1x8x128xf32>,
    %c1_131 = arith.constant 1 : index
    %c0_132 = arith.constant 0 : index
    %c0_133 = arith.constant 0 : index
    %533 = vector.load %arg12[%c1_131, %c0_132, %c0_133] : memref<2x8x128xf32, #tpu.memory_space<vmem>>, vector<1x8x128xf32>
    %534 = vector.shape_cast %533 : vector<1x8x128xf32> to vector<8x128xf32>
    %535 = vector.shape_cast %517 : vector<8x128xf32> to vector<1x8x128xf32>
    tpu.vector_store %arg12[%c1_131, %c0_132, %c0_133], %535 {strides = array<i32>} : memref<2x8x128xf32, #tpu.memory_space<vmem>>, vector<1x8x128xf32>,
    %c0_134 = arith.constant 0 : index
    %c0_135 = arith.constant 0 : index
    %c0_136 = arith.constant 0 : index
    %536 = vector.load %arg14[%c0_134, %c0_135, %c0_136] : memref<8x8x128xf32, #tpu.memory_space<vmem>>, vector<8x8x128xf32>
    %537 = vector.shape_cast %536 : vector<8x8x128xf32> to vector<64x128xf32>
    %c0_137 = arith.constant 0 : index
    %c0_138 = arith.constant 0 : index
    %538 = vector.load %arg8[%c0_137, %c0_138] : memref<128x128xf32, #tpu.memory_space<vmem>>, vector<128x128xf32>
    %cst_139 = arith.constant dense<0.000000e+00> : vector<64x128xf32>
    %539 = tpu.matmul %537, %538, %cst_139 {dimension_numbers = #tpu.dot_dimension_numbers<[1], [0], [0], [1], [0, 0, 1, 1], [], []>} : vector<64x128xf32>, vector<128x128xf32>, vector<64x128xf32> -> vector<64x128xf32>
    %c0_140 = arith.constant 0 : index
    %c0_141 = arith.constant 0 : index
    %540 = vector.load %arg9[%c0_140, %c0_141] : memref<1x128xf32, #tpu.memory_space<vmem>>, vector<1x128xf32>
    %541 = vector.broadcast %540 : vector<1x128xf32> to vector<64x128xf32>
    %542 = arith.addf %539, %541 : vector<64x128xf32>
    %543 = vector.shape_cast %542 : vector<64x128xf32> to vector<8x8x128xf32>
    %c0_142 = arith.constant 0 : index
    %c0_143 = arith.constant 0 : index
    %c0_144 = arith.constant 0 : index
    %544 = vector.load %arg10[%c0_142, %c0_143, %c0_144] : memref<8x8x128xf32, #tpu.memory_space<vmem>>, vector<8x8x128xf32>
    tpu.vector_store %arg10[%c0_142, %c0_143, %c0_144], %543 {strides = array<i32>} : memref<8x8x128xf32, #tpu.memory_space<vmem>>, vector<8x8x128xf32>,
    return
  }
}

</mosaic_0001>

<llo_original>
// kernel: charrnn_forward.1
$region0: #{charrnn_forward.1}
  #allocation0 [shape = 'u32[]', space=smem, size = 0x4, offset = 0x4, fixed_abs, tag = 'smem constant byte address 0x4 - core index']
  #allocation1 [shape = 'u32[144,128]{1,0:T(1,128)}', space=vmem, size = 0x12000, scoped, tag = 'internal scratch']
  #allocation2 [shape = 'f32[8,8,512]{2,1,0:T(8,128)}', space=vmem, size = 0x20000, scoped, tag = 'scratch operand']
  #allocation3 [shape = 'f32[8,8,128]{2,1,0:T(8,128)}', space=vmem, size = 0x8000, scoped, tag = 'scratch operand']
  %s0 = inlined_call_operand.vmem [shape: f32[8,8,128], index: 0, kind: input, shape index: {}]
  %s1 = inlined_call_operand.vmem [shape: f32[2,8,128], index: 1, kind: input, shape index: {}, may-alias: {1,11}]
  %s2 = inlined_call_operand.vmem [shape: f32[2,8,128], index: 2, kind: input, shape index: {}, may-alias: {2,12}]
  %s3 = inlined_call_operand.vmem [shape: f32[128,512], index: 3, kind: input, shape index: {}]
  %s4 = inlined_call_operand.vmem [shape: f32[128,512], index: 4, kind: input, shape index: {}]
  %s5 = inlined_call_operand.vmem [shape: f32[1,512], index: 5, kind: input, shape index: {}]
  %s6 = inlined_call_operand.vmem [shape: f32[256,512], index: 6, kind: input, shape index: {}]
  %s7 = inlined_call_operand.vmem [shape: f32[1,512], index: 7, kind: input, shape index: {}]
  %s8 = inlined_call_operand.vmem [shape: f32[128,128], index: 8, kind: input, shape index: {}]
  %s9 = inlined_call_operand.vmem [shape: f32[1,128], index: 9, kind: input, shape index: {}]
  %s10 = inlined_call_operand.vmem [shape: f32[8,8,128], index: 10, kind: output, shape index: {0}]
  %s11 = inlined_call_operand.vmem [shape: f32[2,8,128], index: 11, kind: output, shape index: {1}, may-alias: {1,11}]
  %s12 = inlined_call_operand.vmem [shape: f32[2,8,128], index: 12, kind: output, shape index: {2}, may-alias: {2,12}]
  %13 = xla_tuple %s10, %s11, %s12
  %s14 = sld [smem:[#allocation0]]
  $region66: #{charrnn_forward.1} parent=0
    _
  %s16 = ssub.s32 1, %s14
  %s17 = scalar_select 0, %s16, %s14
  // Predicated region
  $region2: #{charrnn_forward.1} parent=0 // pred_check
    _
  $region3: #{charrnn_forward.1} parent=0 // pred_check_branch
    %19 = sbr.rel (0) target = $region5
  $region4: #{charrnn_forward.1} parent=0 // pred_region
    _
  $region5: #{charrnn_forward.1} parent=0 // pred_fallthru
    _
  // Predicated region
  $region6: #{charrnn_forward.1} parent=0 // pred_check
    _
  $region7: #{charrnn_forward.1} parent=0 // pred_check_branch
    %21 = sbr.rel (0) target = $region9
  $region8: #{charrnn_forward.1} parent=0 // pred_region
    _
  $region9: #{charrnn_forward.1} parent=0 // pred_fallthru
    _
  // Predicated region
  $region10: #{charrnn_forward.1} parent=0 // pred_check
    _
  $region11: #{charrnn_forward.1} parent=0 // pred_check_branch
    %23 = sbr.rel (0) target = $region13
  $region12: #{charrnn_forward.1} parent=0 // pred_region
    _
  $region13: #{charrnn_forward.1} parent=0 // pred_fallthru
    _
  // Predicated region
  $region14: #{charrnn_forward.1} parent=0 // pred_check
    _
  $region15: #{charrnn_forward.1} parent=0 // pred_check_branch
    %25 = sbr.rel (0) target = $region17
  $region16: #{charrnn_forward.1} parent=0 // pred_region
    _
  $region17: #{charrnn_forward.1} parent=0 // pred_fallthru
    _
  // Predicated region
  $region18: #{charrnn_forward.1} parent=0 // pred_check
    _
  $region19: #{charrnn_forward.1} parent=0 // pred_check_branch
    %27 = sbr.rel (0) target = $region21
  $region20: #{charrnn_forward.1} parent=0 // pred_region
    _
  $region21: #{charrnn_forward.1} parent=0 // pred_fallthru
    _
  // Predicated region
  $region22: #{charrnn_forward.1} parent=0 // pred_check
    _
  $region23: #{charrnn_forward.1} parent=0 // pred_check_branch
    %29 = sbr.rel (0) target = $region25
  $region24: #{charrnn_forward.1} parent=0 // pred_region
    _
  $region25: #{charrnn_forward.1} parent=0 // pred_fallthru
    _
  // Predicated region
  $region26: #{charrnn_forward.1} parent=0 // pred_check
    _
  $region27: #{charrnn_forward.1} parent=0 // pred_check_branch
    %31 = sbr.rel (0) target = $region29
  $region28: #{charrnn_forward.1} parent=0 // pred_region
    _
  $region29: #{charrnn_forward.1} parent=0 // pred_fallthru
    _
  // Predicated region
  $region30: #{charrnn_forward.1} parent=0 // pred_check
    _
  $region31: #{charrnn_forward.1} parent=0 // pred_check_branch
    %33 = sbr.rel (0) target = $region33
  $region32: #{charrnn_forward.1} parent=0 // pred_region
    _
  $region33: #{charrnn_forward.1} parent=0 // pred_fallthru
    _
  // Predicated region
  $region34: #{charrnn_forward.1} parent=0 // pred_check
    _
  $region35: #{charrnn_forward.1} parent=0 // pred_check_branch
    %35 = sbr.rel (0) target = $region37
  $region36: #{charrnn_forward.1} parent=0 // pred_region
    _
  $region37: #{charrnn_forward.1} parent=0 // pred_fallthru
    _
  // Predicated region
  $region38: #{charrnn_forward.1} parent=0 // pred_check
    _
  $region39: #{charrnn_forward.1} parent=0 // pred_check_branch
    %37 = sbr.rel (0) target = $region41
  $region40: #{charrnn_forward.1} parent=0 // pred_region
    _
  $region41: #{charrnn_forward.1} parent=0 // pred_fallthru
    _
  %v38 = vld [vmem:[%s0] sm:$0xff]
  %v39 = vld [vmem:[%s0 + $0x8] sm:$0xff]
  %v40 = vld [vmem:[%s0 + $0x10] sm:$0xff]
  %v41 = vld [vmem:[%s0 + $0x18] sm:$0xff]
  %v42 = vld [vmem:[%s0 + $0x20] sm:$0xff]
  %v43 = vld [vmem:[%s0 + $0x28] sm:$0xff]
  %v44 = vld [vmem:[%s0 + $0x30] sm:$0xff]
  %v45 = vld [vmem:[%s0 + $0x38] sm:$0xff]
  %v46 = vld [vmem:[%s3] sm:$0xff]
  %v47 = vld [vmem:[%s3 + $0x8] sm:$0xff]
  %v48 = vld [vmem:[%s3 + $0x10] sm:$0xff]
  %v49 = vld [vmem:[%s3 + $0x18] sm:$0xff]
  %v50 = vld [vmem:[%s3 + $0x20] sm:$0xff]
  %v51 = vld [vmem:[%s3 + $0x28] sm:$0xff]
  %v52 = vld [vmem:[%s3 + $0x30] sm:$0xff]
  %v53 = vld [vmem:[%s3 + $0x38] sm:$0xff]
  %v54 = vld [vmem:[%s3 + $0x40] sm:$0xff]
  %v55 = vld [vmem:[%s3 + $0x48] sm:$0xff]
  %v56 = vld [vmem:[%s3 + $0x50] sm:$0xff]
  %v57 = vld [vmem:[%s3 + $0x58] sm:$0xff]
  %v58 = vld [vmem:[%s3 + $0x60] sm:$0xff]
  %v59 = vld [vmem:[%s3 + $0x68] sm:$0xff]
  %v60 = vld [vmem:[%s3 + $0x70] sm:$0xff]
  %v61 = vld [vmem:[%s3 + $0x78] sm:$0xff]
  %v62 = vld [vmem:[%s3 + $0x80] sm:$0xff]
  %v63 = vld [vmem:[%s3 + $0x88] sm:$0xff]
  %v64 = vld [vmem:[%s3 + $0x90] sm:$0xff]
  %v65 = vld [vmem:[%s3 + $0x98] sm:$0xff]
  %v66 = vld [vmem:[%s3 + $0xa0] sm:$0xff]
  %v67 = vld [vmem:[%s3 + $0xa8] sm:$0xff]
  %v68 = vld [vmem:[%s3 + $0xb0] sm:$0xff]
  %v69 = vld [vmem:[%s3 + $0xb8] sm:$0xff]
  %v70 = vld [vmem:[%s3 + $0xc0] sm:$0xff]
  %v71 = vld [vmem:[%s3 + $0xc8] sm:$0xff]
  %v72 = vld [vmem:[%s3 + $0xd0] sm:$0xff]
  %v73 = vld [vmem:[%s3 + $0xd8] sm:$0xff]
  %v74 = vld [vmem:[%s3 + $0xe0] sm:$0xff]
  %v75 = vld [vmem:[%s3 + $0xe8] sm:$0xff]
  %v76 = vld [vmem:[%s3 + $0xf0] sm:$0xff]
  %v77 = vld [vmem:[%s3 + $0xf8] sm:$0xff]
  %v78 = vld [vmem:[%s3 + $0x100] sm:$0xff]
  %v79 = vld [vmem:[%s3 + $0x108] sm:$0xff]
  %v80 = vld [vmem:[%s3 + $0x110] sm:$0xff]
  %v81 = vld [vmem:[%s3 + $0x118] sm:$0xff]
  %v82 = vld [vmem:[%s3 + $0x120] sm:$0xff]
  %v83 = vld [vmem:[%s3 + $0x128] sm:$0xff]
  %v84 = vld [vmem:[%s3 + $0x130] sm:$0xff]
  %v85 = vld [vmem:[%s3 + $0x138] sm:$0xff]
  %v86 = vld [vmem:[%s3 + $0x140] sm:$0xff]
  %v87 = vld [vmem:[%s3 + $0x148] sm:$0xff]
  %v88 = vld [vmem:[%s3 + $0x150] sm:$0xff]
  %v89 = vld [vmem:[%s3 + $0x158] sm:$0xff]
  %v90 = vld [vmem:[%s3 + $0x160] sm:$0xff]
  %v91 = vld [vmem:[%s3 + $0x168] sm:$0xff]
  %v92 = vld [vmem:[%s3 + $0x170] sm:$0xff]
  %v93 = vld [vmem:[%s3 + $0x178] sm:$0xff]
  %v94 = vld [vmem:[%s3 + $0x180] sm:$0xff]
  %v95 = vld [vmem:[%s3 + $0x188] sm:$0xff]
  %v96 = vld [vmem:[%s3 + $0x190] sm:$0xff]
  %v97 = vld [vmem:[%s3 + $0x198] sm:$0xff]
  %v98 = vld [vmem:[%s3 + $0x1a0] sm:$0xff]
  %v99 = vld [vmem:[%s3 + $0x1a8] sm:$0xff]
  %v100 = vld [vmem:[%s3 + $0x1b0] sm:$0xff]
  %v101 = vld [vmem:[%s3 + $0x1b8] sm:$0xff]
  %v102 = vld [vmem:[%s3 + $0x1c0] sm:$0xff]
  %v103 = vld [vmem:[%s3 + $0x1c8] sm:$0xff]
  %v104 = vld [vmem:[%s3 + $0x1d0] sm:$0xff]
  %v105 = vld [vmem:[%s3 + $0x1d8] sm:$0xff]
  %v106 = vld [vmem:[%s3 + $0x1e0] sm:$0xff]
  %v107 = vld [vmem:[%s3 + $0x1e8] sm:$0xff]
  %v108 = vld [vmem:[%s3 + $0x1f0] sm:$0xff]
  %v109 = vld [vmem:[%s3 + $0x1f8] sm:$0xff]
  %v110 = vld [vmem:[%s5] sm:$0xf]
  %v112 = vlaneseq
  %v113 = vshrl.u32 %v112, 7
  %v114 = vsub.s32 0, %v113
  %v115 = vrot.slane %v110, %v114
  %v116 = vlaneseq
  %v117 = vshrl.u32 %v116, 7
  %v118 = vsub.s32 1, %v117
  %v119 = vrot.slane %v110, %v118
  %v120 = vlaneseq
  %v121 = vshrl.u32 %v120, 7
  %v122 = vsub.s32 2, %v121
  %v123 = vrot.slane %v110, %v122
  %v124 = vlaneseq
  %v125 = vshrl.u32 %v124, 7
  %v126 = vsub.s32 3, %v125
  %v127 = vrot.slane %v110, %v126
  %132 = vmatprep.subr.mxu0 %v107
  %133 = vmatpush1.msra.mxu0 %v106
  %134 = vmatprep.subr.mxu0 %v103
  %135 = vmatpush1.msra.mxu0 %v102
  %136 = vmatprep.subr.mxu0 %v99
  %137 = vmatpush1.msra.mxu0 %v98
  %138 = vmatprep.subr.mxu0 %v95
  %139 = vmatpush1.msra.mxu0 %v94
  %140 = vmatprep.subr.mxu0 %v91
  %141 = vmatpush1.msra.mxu0 %v90
  %142 = vmatprep.subr.mxu0 %v87
  %143 = vmatpush1.msra.mxu0 %v86
  %144 = vmatprep.subr.mxu0 %v83
  %145 = vmatpush1.msra.mxu0 %v82
  %146 = vmatprep.subr.mxu0 %v79
  %147 = vmatpush1.msra.mxu0 %v78
  %148 = vmatprep.subr.mxu0 %v75
  %149 = vmatpush1.msra.mxu0 %v74
  %150 = vmatprep.subr.mxu0 %v71
  %151 = vmatpush1.msra.mxu0 %v70
  %152 = vmatprep.subr.mxu0 %v67
  %153 = vmatpush1.msra.mxu0 %v66
  %154 = vmatprep.subr.mxu0 %v63
  %155 = vmatpush1.msra.mxu0 %v62
  %156 = vmatprep.subr.mxu0 %v59
  %157 = vmatpush1.msra.mxu0 %v58
  %158 = vmatprep.subr.mxu0 %v55
  %159 = vmatpush1.msra.mxu0 %v54
  %160 = vmatprep.subr.mxu0 %v51
  %161 = vmatpush1.msra.mxu0 %v50
  %162 = vmatprep.subr.mxu0 %v47
  %163 = vmatpush1.msra.mxu0 %v46
  %164 = vmatprep.subr.mxu0 0.0
  %165 = vmatpush2.msra.mxu0 0.0
  %166 = vmatprep.subr.mxu0 0.0
  %167 = vmatpush2.msra.mxu0 0.0
  %168 = vmatprep.subr.mxu0 0.0
  %169 = vmatpush2.msra.mxu0 0.0
  %170 = vmatprep.subr.mxu0 0.0
  %171 = vmatpush2.msra.mxu0 0.0
  %172 = vmatprep.subr.mxu0 0.0
  %173 = vmatpush2.msra.mxu0 0.0
  %174 = vmatprep.subr.mxu0 0.0
  %175 = vmatpush2.msra.mxu0 0.0
  %176 = vmatprep.subr.mxu0 0.0
  %177 = vmatpush2.msra.mxu0 0.0
  %178 = vmatprep.subr.mxu0 0.0
  %179 = vmatpush2.msra.mxu0 0.0
  %180 = vmatprep.subr.mxu0 0.0
  %181 = vmatpush2.msra.mxu0 0.0
  %182 = vmatprep.subr.mxu0 0.0
  %183 = vmatpush2.msra.mxu0 0.0
  %184 = vmatprep.subr.mxu0 0.0
  %185 = vmatpush2.msra.mxu0 0.0
  %186 = vmatprep.subr.mxu0 0.0
  %187 = vmatpush2.msra.mxu0 0.0
  %188 = vmatprep.subr.mxu0 0.0
  %189 = vmatpush2.msra.mxu0 0.0
  %190 = vmatprep.subr.mxu0 0.0
  %191 = vmatpush2.msra.mxu0 0.0
  %192 = vmatprep.subr.mxu0 0.0
  %193 = vmatpush2.msra.mxu0 0.0
  %194 = vmatprep.subr.mxu0 0.0
  %195 = vmatpush2.msra.mxu0 0.0
  %196 = vmatprep.mubr.f32.mxu0 0.0
  %197 = vmatmul.mubr.f32.gmra.mxu0 %v38
  %v198 = vpop.f32.mrf.mxu0
  %v199 = vadd.f32 %v115, %v198
  %v200 = vpop.f32.mrf.mxu0
  %v201 = vadd.f32 %v119, %v200
  %202 = vmatprep.mubr.f32.mxu0 0.0
  %203 = vmatmul.mubr.f32.gmra.mxu0 %v39
  %v204 = vpop.f32.mrf.mxu0
  %v205 = vadd.f32 %v115, %v204
  %v206 = vpop.f32.mrf.mxu0
  %v207 = vadd.f32 %v119, %v206
  %208 = vmatprep.mubr.f32.mxu0 0.0
  %209 = vmatmul.mubr.f32.gmra.mxu0 %v40
  %v210 = vpop.f32.mrf.mxu0
  %v211 = vadd.f32 %v115, %v210
  %v212 = vpop.f32.mrf.mxu0
  %v213 = vadd.f32 %v119, %v212
  %214 = vmatprep.mubr.f32.mxu0 0.0
  %215 = vmatmul.mubr.f32.gmra.mxu0 %v41
  %v216 = vpop.f32.mrf.mxu0
  %v217 = vadd.f32 %v115, %v216
  %v218 = vpop.f32.mrf.mxu0
  %v219 = vadd.f32 %v119, %v218
  %220 = vmatprep.mubr.f32.mxu0 0.0
  %221 = vmatmul.mubr.f32.gmra.mxu0 %v42
  %v222 = vpop.f32.mrf.mxu0
  %v223 = vadd.f32 %v115, %v222
  %v224 = vpop.f32.mrf.mxu0
  %v225 = vadd.f32 %v119, %v224
  %226 = vmatprep.mubr.f32.mxu0 0.0
  %227 = vmatmul.mubr.f32.gmra.mxu0 %v43
  %v228 = vpop.f32.mrf.mxu0
  %v229 = vadd.f32 %v115, %v228
  %v230 = vpop.f32.mrf.mxu0
  %v231 = vadd.f32 %v119, %v230
  %232 = vmatprep.mubr.f32.mxu0 0.0
  %233 = vmatmul.mubr.f32.gmra.mxu0 %v44
  %v234 = vpop.f32.mrf.mxu0
  %v235 = vadd.f32 %v115, %v234
  %v236 = vpop.f32.mrf.mxu0
  %v237 = vadd.f32 %v119, %v236
  %238 = vmatprep.mubr.f32.mxu0 0.0
  %239 = vmatmul.mubr.f32.gmra.mxu0 %v45
  %v240 = vpop.f32.mrf.mxu0
  %v241 = vadd.f32 %v115, %v240
  %v242 = vpop.f32.mrf.mxu0
  %v243 = vadd.f32 %v119, %v242
  %244 = vdwg.mxu0
  %245 = vmatprep.subr.mxu0 %v109
  %246 = vmatpush1.msra.mxu0 %v108
  %247 = vmatprep.subr.mxu0 %v105
  %248 = vmatpush1.msra.mxu0 %v104
  %249 = vmatprep.subr.mxu0 %v101
  %250 = vmatpush1.msra.mxu0 %v100
  %251 = vmatprep.subr.mxu0 %v97
  %252 = vmatpush1.msra.mxu0 %v96
  %253 = vmatprep.subr.mxu0 %v93
  %254 = vmatpush1.msra.mxu0 %v92
  %255 = vmatprep.subr.mxu0 %v89
  %256 = vmatpush1.msra.mxu0 %v88
  %257 = vmatprep.subr.mxu0 %v85
  %258 = vmatpush1.msra.mxu0 %v84
  %259 = vmatprep.subr.mxu0 %v81
  %260 = vmatpush1.msra.mxu0 %v80
  %261 = vmatprep.subr.mxu0 %v77
  %262 = vmatpush1.msra.mxu0 %v76
  %263 = vmatprep.subr.mxu0 %v73
  %264 = vmatpush1.msra.mxu0 %v72
  %265 = vmatprep.subr.mxu0 %v69
  %266 = vmatpush1.msra.mxu0 %v68
  %267 = vmatprep.subr.mxu0 %v65
  %268 = vmatpush1.msra.mxu0 %v64
  %269 = vmatprep.subr.mxu0 %v61
  %270 = vmatpush1.msra.mxu0 %v60
  %271 = vmatprep.subr.mxu0 %v57
  %272 = vmatpush1.msra.mxu0 %v56
  %273 = vmatprep.subr.mxu0 %v53
  %274 = vmatpush1.msra.mxu0 %v52
  %275 = vmatprep.subr.mxu0 %v49
  %276 = vmatpush1.msra.mxu0 %v48
  %277 = vmatprep.subr.mxu0 0.0
  %278 = vmatpush2.msra.mxu0 0.0
  %279 = vmatprep.subr.mxu0 0.0
  %280 = vmatpush2.msra.mxu0 0.0
  %281 = vmatprep.subr.mxu0 0.0
  %282 = vmatpush2.msra.mxu0 0.0
  %283 = vmatprep.subr.mxu0 0.0
  %284 = vmatpush2.msra.mxu0 0.0
  %285 = vmatprep.subr.mxu0 0.0
  %286 = vmatpush2.msra.mxu0 0.0
  %287 = vmatprep.subr.mxu0 0.0
  %288 = vmatpush2.msra.mxu0 0.0
  %289 = vmatprep.subr.mxu0 0.0
  %290 = vmatpush2.msra.mxu0 0.0
  %291 = vmatprep.subr.mxu0 0.0
  %292 = vmatpush2.msra.mxu0 0.0
  %293 = vmatprep.subr.mxu0 0.0
  %294 = vmatpush2.msra.mxu0 0.0
  %295 = vmatprep.subr.mxu0 0.0
  %296 = vmatpush2.msra.mxu0 0.0
  %297 = vmatprep.subr.mxu0 0.0
  %298 = vmatpush2.msra.mxu0 0.0
  %299 = vmatprep.subr.mxu0 0.0
  %300 = vmatpush2.msra.mxu0 0.0
  %301 = vmatprep.subr.mxu0 0.0
  %302 = vmatpush2.msra.mxu0 0.0
  %303 = vmatprep.subr.mxu0 0.0
  %304 = vmatpush2.msra.mxu0 0.0
  %305 = vmatprep.subr.mxu0 0.0
  %306 = vmatpush2.msra.mxu0 0.0
  %307 = vmatprep.subr.mxu0 0.0
  %308 = vmatpush2.msra.mxu0 0.0
  %309 = vmatprep.mubr.f32.mxu0 0.0
  %310 = vmatmul.mubr.f32.gmra.mxu0 %v38
  %v311 = vpop.f32.mrf.mxu0
  %v312 = vadd.f32 %v123, %v311
  %v313 = vpop.f32.mrf.mxu0
  %v314 = vadd.f32 %v127, %v313
  %315 = vmatprep.mubr.f32.mxu0 0.0
  %316 = vmatmul.mubr.f32.gmra.mxu0 %v39
  %v317 = vpop.f32.mrf.mxu0
  %v318 = vadd.f32 %v123, %v317
  %v319 = vpop.f32.mrf.mxu0
  %v320 = vadd.f32 %v127, %v319
  %321 = vmatprep.mubr.f32.mxu0 0.0
  %322 = vmatmul.mubr.f32.gmra.mxu0 %v40
  %v323 = vpop.f32.mrf.mxu0
  %v324 = vadd.f32 %v123, %v323
  %v325 = vpop.f32.mrf.mxu0
  %v326 = vadd.f32 %v127, %v325
  %327 = vmatprep.mubr.f32.mxu0 0.0
  %328 = vmatmul.mubr.f32.gmra.mxu0 %v41
  %v329 = vpop.f32.mrf.mxu0
  %v330 = vadd.f32 %v123, %v329
  %v331 = vpop.f32.mrf.mxu0
  %v332 = vadd.f32 %v127, %v331
  %333 = vmatprep.mubr.f32.mxu0 0.0
  %334 = vmatmul.mubr.f32.gmra.mxu0 %v42
  %v335 = vpop.f32.mrf.mxu0
  %v336 = vadd.f32 %v123, %v335
  %v337 = vpop.f32.mrf.mxu0
  %v338 = vadd.f32 %v127, %v337
  %339 = vmatprep.mubr.f32.mxu0 0.0
  %340 = vmatmul.mubr.f32.gmra.mxu0 %v43
  %v341 = vpop.f32.mrf.mxu0
  %v342 = vadd.f32 %v123, %v341
  %v343 = vpop.f32.mrf.mxu0
  %v344 = vadd.f32 %v127, %v343
  %345 = vmatprep.mubr.f32.mxu0 0.0
  %346 = vmatmul.mubr.f32.gmra.mxu0 %v44
  %v347 = vpop.f32.mrf.mxu0
  %v348 = vadd.f32 %v123, %v347
  %v349 = vpop.f32.mrf.mxu0
  %v350 = vadd.f32 %v127, %v349
  %351 = vmatprep.mubr.f32.mxu0 0.0
  %352 = vmatmul.mubr.f32.gmra.mxu0 %v45
  %v353 = vpop.f32.mrf.mxu0
  %v354 = vadd.f32 %v123, %v353
  %v355 = vpop.f32.mrf.mxu0
  %v356 = vadd.f32 %v127, %v355
  %357 = vdwg.mxu0
  %358 = vst [vmem:[#allocation2] sm:$0xff] %v199
  %359 = vst [vmem:[#allocation2 + $0x8] sm:$0xff] %v201
  %360 = vst [vmem:[#allocation2 + $0x10] sm:$0xff] %v312
  %361 = vst [vmem:[#allocation2 + $0x18] sm:$0xff] %v314
  %362 = vst [vmem:[#allocation2 + $0x20] sm:$0xff] %v205
  %363 = vst [vmem:[#allocation2 + $0x28] sm:$0xff] %v207
  %364 = vst [vmem:[#allocation2 + $0x30] sm:$0xff] %v318
  %365 = vst [vmem:[#allocation2 + $0x38] sm:$0xff] %v320
  %366 = vst [vmem:[#allocation2 + $0x40] sm:$0xff] %v211
  %367 = vst [vmem:[#allocation2 + $0x48] sm:$0xff] %v213
  %368 = vst [vmem:[#allocation2 + $0x50] sm:$0xff] %v324
  %369 = vst [vmem:[#allocation2 + $0x58] sm:$0xff] %v326
  %370 = vst [vmem:[#allocation2 + $0x60] sm:$0xff] %v217
  %371 = vst [vmem:[#allocation2 + $0x68] sm:$0xff] %v219
  %372 = vst [vmem:[#allocation2 + $0x70] sm:$0xff] %v330
  %373 = vst [vmem:[#allocation2 + $0x78] sm:$0xff] %v332
  %374 = vst [vmem:[#allocation2 + $0x80] sm:$0xff] %v223
  %375 = vst [vmem:[#allocation2 + $0x88] sm:$0xff] %v225
  %376 = vst [vmem:[#allocation2 + $0x90] sm:$0xff] %v336
  %377 = vst [vmem:[#allocation2 + $0x98] sm:$0xff] %v338
  %378 = vst [vmem:[#allocation2 + $0xa0] sm:$0xff] %v229
  %379 = vst [vmem:[#allocation2 + $0xa8] sm:$0xff] %v231
  %380 = vst [vmem:[#allocation2 + $0xb0] sm:$0xff] %v342
  %381 = vst [vmem:[#allocation2 + $0xb8] sm:$0xff] %v344
  %382 = vst [vmem:[#allocation2 + $0xc0] sm:$0xff] %v235
  %383 = vst [vmem:[#allocation2 + $0xc8] sm:$0xff] %v237
  %384 = vst [vmem:[#allocation2 + $0xd0] sm:$0xff] %v348
  %385 = vst [vmem:[#allocation2 + $0xd8] sm:$0xff] %v350
  %386 = vst [vmem:[#allocation2 + $0xe0] sm:$0xff] %v241
  %387 = vst [vmem:[#allocation2 + $0xe8] sm:$0xff] %v243
  %388 = vst [vmem:[#allocation2 + $0xf0] sm:$0xff] %v354
  %389 = vst [vmem:[#allocation2 + $0xf8] sm:$0xff] %v356
  %v390 = vld [vmem:[%s4] sm:$0xff]
  %v391 = vld [vmem:[%s4 + $0x8] sm:$0xff]
  %v392 = vld [vmem:[%s4 + $0x10] sm:$0xff]
  %v393 = vld [vmem:[%s4 + $0x18] sm:$0xff]
  %v394 = vld [vmem:[%s4 + $0x20] sm:$0xff]
  %v395 = vld [vmem:[%s4 + $0x28] sm:$0xff]
  %v396 = vld [vmem:[%s4 + $0x30] sm:$0xff]
  %v397 = vld [vmem:[%s4 + $0x38] sm:$0xff]
  %v398 = vld [vmem:[%s4 + $0x40] sm:$0xff]
  %v399 = vld [vmem:[%s4 + $0x48] sm:$0xff]
  %v400 = vld [vmem:[%s4 + $0x50] sm:$0xff]
  %v401 = vld [vmem:[%s4 + $0x58] sm:$0xff]
  %v402 = vld [vmem:[%s4 + $0x60] sm:$0xff]
  %v403 = vld [vmem:[%s4 + $0x68] sm:$0xff]
  %v404 = vld [vmem:[%s4 + $0x70] sm:$0xff]
  %v405 = vld [vmem:[%s4 + $0x78] sm:$0xff]
  %v406 = vld [vmem:[%s4 + $0x80] sm:$0xff]
  %v407 = vld [vmem:[%s4 + $0x88] sm:$0xff]
  %v408 = vld [vmem:[%s4 + $0x90] sm:$0xff]
  %v409 = vld [vmem:[%s4 + $0x98] sm:$0xff]
  %v410 = vld [vmem:[%s4 + $0xa0] sm:$0xff]
  %v411 = vld [vmem:[%s4 + $0xa8] sm:$0xff]
  %v412 = vld [vmem:[%s4 + $0xb0] sm:$0xff]
  %v413 = vld [vmem:[%s4 + $0xb8] sm:$0xff]
  %v414 = vld [vmem:[%s4 + $0xc0] sm:$0xff]
  %v415 = vld [vmem:[%s4 + $0xc8] sm:$0xff]
  %v416 = vld [vmem:[%s4 + $0xd0] sm:$0xff]
  %v417 = vld [vmem:[%s4 + $0xd8] sm:$0xff]
  %v418 = vld [vmem:[%s4 + $0xe0] sm:$0xff]
  %v419 = vld [vmem:[%s4 + $0xe8] sm:$0xff]
  %v420 = vld [vmem:[%s4 + $0xf0] sm:$0xff]
  %v421 = vld [vmem:[%s4 + $0xf8] sm:$0xff]
  %v422 = vld [vmem:[%s4 + $0x100] sm:$0xff]
  %v423 = vld [vmem:[%s4 + $0x108] sm:$0xff]
  %v424 = vld [vmem:[%s4 + $0x110] sm:$0xff]
  %v425 = vld [vmem:[%s4 + $0x118] sm:$0xff]
  %v426 = vld [vmem:[%s4 + $0x120] sm:$0xff]
  %v427 = vld [vmem:[%s4 + $0x128] sm:$0xff]
  %v428 = vld [vmem:[%s4 + $0x130] sm:$0xff]
  %v429 = vld [vmem:[%s4 + $0x138] sm:$0xff]
  %v430 = vld [vmem:[%s4 + $0x140] sm:$0xff]
  %v431 = vld [vmem:[%s4 + $0x148] sm:$0xff]
  %v432 = vld [vmem:[%s4 + $0x150] sm:$0xff]
  %v433 = vld [vmem:[%s4 + $0x158] sm:$0xff]
  %v434 = vld [vmem:[%s4 + $0x160] sm:$0xff]
  %v435 = vld [vmem:[%s4 + $0x168] sm:$0xff]
  %v436 = vld [vmem:[%s4 + $0x170] sm:$0xff]
  %v437 = vld [vmem:[%s4 + $0x178] sm:$0xff]
  %v438 = vld [vmem:[%s4 + $0x180] sm:$0xff]
  %v439 = vld [vmem:[%s4 + $0x188] sm:$0xff]
  %v440 = vld [vmem:[%s4 + $0x190] sm:$0xff]
  %v441 = vld [vmem:[%s4 + $0x198] sm:$0xff]
  %v442 = vld [vmem:[%s4 + $0x1a0] sm:$0xff]
  %v443 = vld [vmem:[%s4 + $0x1a8] sm:$0xff]
  %v444 = vld [vmem:[%s4 + $0x1b0] sm:$0xff]
  %v445 = vld [vmem:[%s4 + $0x1b8] sm:$0xff]
  %v446 = vld [vmem:[%s4 + $0x1c0] sm:$0xff]
  %v447 = vld [vmem:[%s4 + $0x1c8] sm:$0xff]
  %v448 = vld [vmem:[%s4 + $0x1d0] sm:$0xff]
  %v449 = vld [vmem:[%s4 + $0x1d8] sm:$0xff]
  %v450 = vld [vmem:[%s4 + $0x1e0] sm:$0xff]
  %v451 = vld [vmem:[%s4 + $0x1e8] sm:$0xff]
  %v452 = vld [vmem:[%s4 + $0x1f0] sm:$0xff]
  %v453 = vld [vmem:[%s4 + $0x1f8] sm:$0xff]
  %v454 = vld [vmem:[%s6] sm:$0xff]
  %v455 = vld [vmem:[%s6 + $0x8] sm:$0xff]
  %v456 = vld [vmem:[%s6 + $0x10] sm:$0xff]
  %v457 = vld [vmem:[%s6 + $0x18] sm:$0xff]
  %v458 = vld [vmem:[%s6 + $0x20] sm:$0xff]
  %v459 = vld [vmem:[%s6 + $0x28] sm:$0xff]
  %v460 = vld [vmem:[%s6 + $0x30] sm:$0xff]
  %v461 = vld [vmem:[%s6 + $0x38] sm:$0xff]
  %v462 = vld [vmem:[%s6 + $0x40] sm:$0xff]
  %v463 = vld [vmem:[%s6 + $0x48] sm:$0xff]
  %v464 = vld [vmem:[%s6 + $0x50] sm:$0xff]
  %v465 = vld [vmem:[%s6 + $0x58] sm:$0xff]
  %v466 = vld [vmem:[%s6 + $0x60] sm:$0xff]
  %v467 = vld [vmem:[%s6 + $0x68] sm:$0xff]
  %v468 = vld [vmem:[%s6 + $0x70] sm:$0xff]
  %v469 = vld [vmem:[%s6 + $0x78] sm:$0xff]
  %v470 = vld [vmem:[%s6 + $0x80] sm:$0xff]
  %v471 = vld [vmem:[%s6 + $0x88] sm:$0xff]
  %v472 = vld [vmem:[%s6 + $0x90] sm:$0xff]
  %v473 = vld [vmem:[%s6 + $0x98] sm:$0xff]
  %v474 = vld [vmem:[%s6 + $0xa0] sm:$0xff]
  %v475 = vld [vmem:[%s6 + $0xa8] sm:$0xff]
  %v476 = vld [vmem:[%s6 + $0xb0] sm:$0xff]
  %v477 = vld [vmem:[%s6 + $0xb8] sm:$0xff]
  %v478 = vld [vmem:[%s6 + $0xc0] sm:$0xff]
  %v479 = vld [vmem:[%s6 + $0xc8] sm:$0xff]
  %v480 = vld [vmem:[%s6 + $0xd0] sm:$0xff]
  %v481 = vld [vmem:[%s6 + $0xd8] sm:$0xff]
  %v482 = vld [vmem:[%s6 + $0xe0] sm:$0xff]
  %v483 = vld [vmem:[%s6 + $0xe8] sm:$0xff]
  %v484 = vld [vmem:[%s6 + $0xf0] sm:$0xff]
  %v485 = vld [vmem:[%s6 + $0xf8] sm:$0xff]
  %v486 = vld [vmem:[%s6 + $0x100] sm:$0xff]
  %v487 = vld [vmem:[%s6 + $0x108] sm:$0xff]
  %v488 = vld [vmem:[%s6 + $0x110] sm:$0xff]
  %v489 = vld [vmem:[%s6 + $0x118] sm:$0xff]
  %v490 = vld [vmem:[%s6 + $0x120] sm:$0xff]
  %v491 = vld [vmem:[%s6 + $0x128] sm:$0xff]
  %v492 = vld [vmem:[%s6 + $0x130] sm:$0xff]
  %v493 = vld [vmem:[%s6 + $0x138] sm:$0xff]
  %v494 = vld [vmem:[%s6 + $0x140] sm:$0xff]
  %v495 = vld [vmem:[%s6 + $0x148] sm:$0xff]
  %v496 = vld [vmem:[%s6 + $0x150] sm:$0xff]
  %v497 = vld [vmem:[%s6 + $0x158] sm:$0xff]
  %v498 = vld [vmem:[%s6 + $0x160] sm:$0xff]
  %v499 = vld [vmem:[%s6 + $0x168] sm:$0xff]
  %v500 = vld [vmem:[%s6 + $0x170] sm:$0xff]
  %v501 = vld [vmem:[%s6 + $0x178] sm:$0xff]
  %v502 = vld [vmem:[%s6 + $0x180] sm:$0xff]
  %v503 = vld [vmem:[%s6 + $0x188] sm:$0xff]
  %v504 = vld [vmem:[%s6 + $0x190] sm:$0xff]
  %v505 = vld [vmem:[%s6 + $0x198] sm:$0xff]
  %v506 = vld [vmem:[%s6 + $0x1a0] sm:$0xff]
  %v507 = vld [vmem:[%s6 + $0x1a8] sm:$0xff]
  %v508 = vld [vmem:[%s6 + $0x1b0] sm:$0xff]
  %v509 = vld [vmem:[%s6 + $0x1b8] sm:$0xff]
  %v510 = vld [vmem:[%s6 + $0x1c0] sm:$0xff]
  %v511 = vld [vmem:[%s6 + $0x1c8] sm:$0xff]
  %v512 = vld [vmem:[%s6 + $0x1d0] sm:$0xff]
  %v513 = vld [vmem:[%s6 + $0x1d8] sm:$0xff]
  %v514 = vld [vmem:[%s6 + $0x1e0] sm:$0xff]
  %v515 = vld [vmem:[%s6 + $0x1e8] sm:$0xff]
  %v516 = vld [vmem:[%s6 + $0x1f0] sm:$0xff]
  %v517 = vld [vmem:[%s6 + $0x1f8] sm:$0xff]
  %v518 = vld [vmem:[%s6 + $0x200] sm:$0xff]
  %v519 = vld [vmem:[%s6 + $0x208] sm:$0xff]
  %v520 = vld [vmem:[%s6 + $0x210] sm:$0xff]
  %v521 = vld [vmem:[%s6 + $0x218] sm:$0xff]
  %v522 = vld [vmem:[%s6 + $0x220] sm:$0xff]
  %v523 = vld [vmem:[%s6 + $0x228] sm:$0xff]
  %v524 = vld [vmem:[%s6 + $0x230] sm:$0xff]
  %v525 = vld [vmem:[%s6 + $0x238] sm:$0xff]
  %v526 = vld [vmem:[%s6 + $0x240] sm:$0xff]
  %v527 = vld [vmem:[%s6 + $0x248] sm:$0xff]
  %v528 = vld [vmem:[%s6 + $0x250] sm:$0xff]
  %v529 = vld [vmem:[%s6 + $0x258] sm:$0xff]
  %v530 = vld [vmem:[%s6 + $0x260] sm:$0xff]
  %v531 = vld [vmem:[%s6 + $0x268] sm:$0xff]
  %v532 = vld [vmem:[%s6 + $0x270] sm:$0xff]
  %v533 = vld [vmem:[%s6 + $0x278] sm:$0xff]
  %v534 = vld [vmem:[%s6 + $0x280] sm:$0xff]
  %v535 = vld [vmem:[%s6 + $0x288] sm:$0xff]
  %v536 = vld [vmem:[%s6 + $0x290] sm:$0xff]
  %v537 = vld [vmem:[%s6 + $0x298] sm:$0xff]
  %v538 = vld [vmem:[%s6 + $0x2a0] sm:$0xff]
  %v539 = vld [vmem:[%s6 + $0x2a8] sm:$0xff]
  %v540 = vld [vmem:[%s6 + $0x2b0] sm:$0xff]
  %v541 = vld [vmem:[%s6 + $0x2b8] sm:$0xff]
  %v542 = vld [vmem:[%s6 + $0x2c0] sm:$0xff]
  %v543 = vld [vmem:[%s6 + $0x2c8] sm:$0xff]
  %v544 = vld [vmem:[%s6 + $0x2d0] sm:$0xff]
  %v545 = vld [vmem:[%s6 + $0x2d8] sm:$0xff]
  %v546 = vld [vmem:[%s6 + $0x2e0] sm:$0xff]
  %v547 = vld [vmem:[%s6 + $0x2e8] sm:$0xff]
  %v548 = vld [vmem:[%s6 + $0x2f0] sm:$0xff]
  %v549 = vld [vmem:[%s6 + $0x2f8] sm:$0xff]
  %v550 = vld [vmem:[%s6 + $0x300] sm:$0xff]
  %v551 = vld [vmem:[%s6 + $0x308] sm:$0xff]
  %v552 = vld [vmem:[%s6 + $0x310] sm:$0xff]
  %v553 = vld [vmem:[%s6 + $0x318] sm:$0xff]
  %v554 = vld [vmem:[%s6 + $0x320] sm:$0xff]
  %v555 = vld [vmem:[%s6 + $0x328] sm:$0xff]
  %v556 = vld [vmem:[%s6 + $0x330] sm:$0xff]
  %v557 = vld [vmem:[%s6 + $0x338] sm:$0xff]
  %v558 = vld [vmem:[%s6 + $0x340] sm:$0xff]
  %v559 = vld [vmem:[%s6 + $0x348] sm:$0xff]
  %v560 = vld [vmem:[%s6 + $0x350] sm:$0xff]
  %v561 = vld [vmem:[%s6 + $0x358] sm:$0xff]
  %v562 = vld [vmem:[%s6 + $0x360] sm:$0xff]
  %v563 = vld [vmem:[%s6 + $0x368] sm:$0xff]
  %v564 = vld [vmem:[%s6 + $0x370] sm:$0xff]
  %v565 = vld [vmem:[%s6 + $0x378] sm:$0xff]
  %v566 = vld [vmem:[%s6 + $0x380] sm:$0xff]
  %v567 = vld [vmem:[%s6 + $0x388] sm:$0xff]
  %v568 = vld [vmem:[%s6 + $0x390] sm:$0xff]
  %v569 = vld [vmem:[%s6 + $0x398] sm:$0xff]
  %v570 = vld [vmem:[%s6 + $0x3a0] sm:$0xff]
  %v571 = vld [vmem:[%s6 + $0x3a8] sm:$0xff]
  %v572 = vld [vmem:[%s6 + $0x3b0] sm:$0xff]
  %v573 = vld [vmem:[%s6 + $0x3b8] sm:$0xff]
  %v574 = vld [vmem:[%s6 + $0x3c0] sm:$0xff]
  %v575 = vld [vmem:[%s6 + $0x3c8] sm:$0xff]
  %v576 = vld [vmem:[%s6 + $0x3d0] sm:$0xff]
  %v577 = vld [vmem:[%s6 + $0x3d8] sm:$0xff]
  %v578 = vld [vmem:[%s6 + $0x3e0] sm:$0xff]
  %v579 = vld [vmem:[%s6 + $0x3e8] sm:$0xff]
  %v580 = vld [vmem:[%s6 + $0x3f0] sm:$0xff]
  %v581 = vld [vmem:[%s6 + $0x3f8] sm:$0xff]
  %v582 = vld [vmem:[%s7] sm:$0xf]
  %v583 = vld [vmem:[%s1] sm:$0xff]
  %v584 = vld [vmem:[%s2] sm:$0xff]
  %s585 = scalar_lea.vmem %s1, 8
  %v586 = vld [vmem:[%s585] sm:$0xff]
  %s587 = scalar_lea.vmem %s2, 8
  %v588 = vld [vmem:[%s587] sm:$0xff]
  %v589 = vld [vmem:[#allocation2] sm:$0xff]
  %v590 = vld [vmem:[#allocation2 + $0x8] sm:$0xff]
  %v591 = vld [vmem:[#allocation2 + $0x10] sm:$0xff]
  %v592 = vld [vmem:[#allocation2 + $0x18] sm:$0xff]
  %593 = vmatprep.subr.mxu0 %v451
  %594 = vmatpush1.msra.mxu0 %v450
  %595 = vmatprep.subr.mxu0 %v447
  %596 = vmatpush1.msra.mxu0 %v446
  %597 = vmatprep.subr.mxu0 %v443
  %598 = vmatpush1.msra.mxu0 %v442
  %599 = vmatprep.subr.mxu0 %v439
  %600 = vmatpush1.msra.mxu0 %v438
  %601 = vmatprep.subr.mxu0 %v435
  %602 = vmatpush1.msra.mxu0 %v434
  %603 = vmatprep.subr.mxu0 %v431
  %604 = vmatpush1.msra.mxu0 %v430
  %605 = vmatprep.subr.mxu0 %v427
  %606 = vmatpush1.msra.mxu0 %v426
  %607 = vmatprep.subr.mxu0 %v423
  %608 = vmatpush1.msra.mxu0 %v422
  %609 = vmatprep.subr.mxu0 %v419
  %610 = vmatpush1.msra.mxu0 %v418
  %611 = vmatprep.subr.mxu0 %v415
  %612 = vmatpush1.msra.mxu0 %v414
  %613 = vmatprep.subr.mxu0 %v411
  %614 = vmatpush1.msra.mxu0 %v410
  %615 = vmatprep.subr.mxu0 %v407
  %616 = vmatpush1.msra.mxu0 %v406
  %617 = vmatprep.subr.mxu0 %v403
  %618 = vmatpush1.msra.mxu0 %v402
  %619 = vmatprep.subr.mxu0 %v399
  %620 = vmatpush1.msra.mxu0 %v398
  %621 = vmatprep.subr.mxu0 %v395
  %622 = vmatpush1.msra.mxu0 %v394
  %623 = vmatprep.subr.mxu0 %v391
  %624 = vmatpush1.msra.mxu0 %v390
  %625 = vmatprep.subr.mxu0 0.0
  %626 = vmatpush2.msra.mxu0 0.0
  %627 = vmatprep.subr.mxu0 0.0
  %628 = vmatpush2.msra.mxu0 0.0
  %629 = vmatprep.subr.mxu0 0.0
  %630 = vmatpush2.msra.mxu0 0.0
  %631 = vmatprep.subr.mxu0 0.0
  %632 = vmatpush2.msra.mxu0 0.0
  %633 = vmatprep.subr.mxu0 0.0
  %634 = vmatpush2.msra.mxu0 0.0
  %635 = vmatprep.subr.mxu0 0.0
  %636 = vmatpush2.msra.mxu0 0.0
  %637 = vmatprep.subr.mxu0 0.0
  %638 = vmatpush2.msra.mxu0 0.0
  %639 = vmatprep.subr.mxu0 0.0
  %640 = vmatpush2.msra.mxu0 0.0
  %641 = vmatprep.subr.mxu0 0.0
  %642 = vmatpush2.msra.mxu0 0.0
  %643 = vmatprep.subr.mxu0 0.0
  %644 = vmatpush2.msra.mxu0 0.0
  %645 = vmatprep.subr.mxu0 0.0
  %646 = vmatpush2.msra.mxu0 0.0
  %647 = vmatprep.subr.mxu0 0.0
  %648 = vmatpush2.msra.mxu0 0.0
  %649 = vmatprep.subr.mxu0 0.0
  %650 = vmatpush2.msra.mxu0 0.0
  %651 = vmatprep.subr.mxu0 0.0
  %652 = vmatpush2.msra.mxu0 0.0
  %653 = vmatprep.subr.mxu0 0.0
  %654 = vmatpush2.msra.mxu0 0.0
  %655 = vmatprep.subr.mxu0 0.0
  %656 = vmatpush2.msra.mxu0 0.0
  %657 = vmatprep.mubr.f32.mxu0 0.0
  %658 = vmatmul.mubr.f32.gmra.mxu0 %v583
  %v659 = vpop.f32.mrf.mxu0
  %v660 = vadd.f32 0.0, %v659
  %v661 = vpop.f32.mrf.mxu0
  %v662 = vadd.f32 0.0, %v661
  %663 = vdwg.mxu0
  %664 = vmatprep.subr.mxu0 %v453
  %665 = vmatpush1.msra.mxu0 %v452
  %666 = vmatprep.subr.mxu0 %v449
  %667 = vmatpush1.msra.mxu0 %v448
  %668 = vmatprep.subr.mxu0 %v445
  %669 = vmatpush1.msra.mxu0 %v444
  %670 = vmatprep.subr.mxu0 %v441
  %671 = vmatpush1.msra.mxu0 %v440
  %672 = vmatprep.subr.mxu0 %v437
  %673 = vmatpush1.msra.mxu0 %v436
  %674 = vmatprep.subr.mxu0 %v433
  %675 = vmatpush1.msra.mxu0 %v432
  %676 = vmatprep.subr.mxu0 %v429
  %677 = vmatpush1.msra.mxu0 %v428
  %678 = vmatprep.subr.mxu0 %v425
  %679 = vmatpush1.msra.mxu0 %v424
  %680 = vmatprep.subr.mxu0 %v421
  %681 = vmatpush1.msra.mxu0 %v420
  %682 = vmatprep.subr.mxu0 %v417
  %683 = vmatpush1.msra.mxu0 %v416
  %684 = vmatprep.subr.mxu0 %v413
  %685 = vmatpush1.msra.mxu0 %v412
  %686 = vmatprep.subr.mxu0 %v409
  %687 = vmatpush1.msra.mxu0 %v408
  %688 = vmatprep.subr.mxu0 %v405
  %689 = vmatpush1.msra.mxu0 %v404
  %690 = vmatprep.subr.mxu0 %v401
  %691 = vmatpush1.msra.mxu0 %v400
  %692 = vmatprep.subr.mxu0 %v397
  %693 = vmatpush1.msra.mxu0 %v396
  %694 = vmatprep.subr.mxu0 %v393
  %695 = vmatpush1.msra.mxu0 %v392
  %696 = vmatprep.subr.mxu0 0.0
  %697 = vmatpush2.msra.mxu0 0.0
  %698 = vmatprep.subr.mxu0 0.0
  %699 = vmatpush2.msra.mxu0 0.0
  %700 = vmatprep.subr.mxu0 0.0
  %701 = vmatpush2.msra.mxu0 0.0
  %702 = vmatprep.subr.mxu0 0.0
  %703 = vmatpush2.msra.mxu0 0.0
  %704 = vmatprep.subr.mxu0 0.0
  %705 = vmatpush2.msra.mxu0 0.0
  %706 = vmatprep.subr.mxu0 0.0
  %707 = vmatpush2.msra.mxu0 0.0
  %708 = vmatprep.subr.mxu0 0.0
  %709 = vmatpush2.msra.mxu0 0.0
  %710 = vmatprep.subr.mxu0 0.0
  %711 = vmatpush2.msra.mxu0 0.0
  %712 = vmatprep.subr.mxu0 0.0
  %713 = vmatpush2.msra.mxu0 0.0
  %714 = vmatprep.subr.mxu0 0.0
  %715 = vmatpush2.msra.mxu0 0.0
  %716 = vmatprep.subr.mxu0 0.0
  %717 = vmatpush2.msra.mxu0 0.0
  %718 = vmatprep.subr.mxu0 0.0
  %719 = vmatpush2.msra.mxu0 0.0
  %720 = vmatprep.subr.mxu0 0.0
  %721 = vmatpush2.msra.mxu0 0.0
  %722 = vmatprep.subr.mxu0 0.0
  %723 = vmatpush2.msra.mxu0 0.0
  %724 = vmatprep.subr.mxu0 0.0
  %725 = vmatpush2.msra.mxu0 0.0
  %726 = vmatprep.subr.mxu0 0.0
  %727 = vmatpush2.msra.mxu0 0.0
  %728 = vmatprep.mubr.f32.mxu0 0.0
  %729 = vmatmul.mubr.f32.gmra.mxu0 %v583
  %v730 = vpop.f32.mrf.mxu0
  %v731 = vadd.f32 0.0, %v730
  %v732 = vpop.f32.mrf.mxu0
  %v733 = vadd.f32 0.0, %v732
  %734 = vdwg.mxu0
  %v735 = vadd.f32 %v589, %v660
  %v736 = vadd.f32 %v590, %v662
  %v737 = vadd.f32 %v591, %v731
  %v738 = vadd.f32 %v592, %v733
  %v739 = vxor.u32 %v735, 2147483648
  %v740 = vmul.f32 %v739, 1.442695
  %v741 = vpow.pop %v740
  %v742 = vadd.f32 %v741, 1.0
  %v743 = vrcp.pop %v742
  %v744 = vmul.f32 1.0, %v743
  %v745 = vxor.u32 %v736, 2147483648
  %v746 = vmul.f32 %v745, 1.442695
  %v747 = vpow.pop %v746
  %v748 = vadd.f32 %v747, 1.0
  %v749 = vrcp.pop %v748
  %v750 = vmul.f32 1.0, %v749
  %v751 = vtanh.pop %v737
  %v752 = vxor.u32 %v738, 2147483648
  %v753 = vmul.f32 %v752, 1.442695
  %v754 = vpow.pop %v753
  %v755 = vadd.f32 %v754, 1.0
  %v756 = vrcp.pop %v755
  %v757 = vmul.f32 1.0, %v756
  %v758 = vmul.f32 %v750, %v584
  %v759 = vmul.f32 %v744, %v751
  %v760 = vadd.f32 %v758, %v759
  %v761 = vtanh.pop %v760
  %v762 = vmul.f32 %v757, %v761
  %v764 = vlaneseq
  %v765 = vshrl.u32 %v764, 7
  %v766 = vsub.s32 0, %v765
  %v767 = vrot.slane %v582, %v766
  %v768 = vlaneseq
  %v769 = vshrl.u32 %v768, 7
  %v770 = vsub.s32 1, %v769
  %v771 = vrot.slane %v582, %v770
  %v772 = vlaneseq
  %v773 = vshrl.u32 %v772, 7
  %v774 = vsub.s32 2, %v773
  %v775 = vrot.slane %v582, %v774
  %v776 = vlaneseq
  %v777 = vshrl.u32 %v776, 7
  %v778 = vsub.s32 3, %v777
  %v779 = vrot.slane %v582, %v778
  %784 = vmatprep.subr.mxu0 %v515
  %785 = vmatpush1.msra.mxu0 %v514
  %786 = vmatprep.subr.mxu0 %v511
  %787 = vmatpush1.msra.mxu0 %v510
  %788 = vmatprep.subr.mxu0 %v507
  %789 = vmatpush1.msra.mxu0 %v506
  %790 = vmatprep.subr.mxu0 %v503
  %791 = vmatpush1.msra.mxu0 %v502
  %792 = vmatprep.subr.mxu0 %v499
  %793 = vmatpush1.msra.mxu0 %v498
  %794 = vmatprep.subr.mxu0 %v495
  %795 = vmatpush1.msra.mxu0 %v494
  %796 = vmatprep.subr.mxu0 %v491
  %797 = vmatpush1.msra.mxu0 %v490
  %798 = vmatprep.subr.mxu0 %v487
  %799 = vmatpush1.msra.mxu0 %v486
  %800 = vmatprep.subr.mxu0 %v483
  %801 = vmatpush1.msra.mxu0 %v482
  %802 = vmatprep.subr.mxu0 %v479
  %803 = vmatpush1.msra.mxu0 %v478
  %804 = vmatprep.subr.mxu0 %v475
  %805 = vmatpush1.msra.mxu0 %v474
  %806 = vmatprep.subr.mxu0 %v471
  %807 = vmatpush1.msra.mxu0 %v470
  %808 = vmatprep.subr.mxu0 %v467
  %809 = vmatpush1.msra.mxu0 %v466
  %810 = vmatprep.subr.mxu0 %v463
  %811 = vmatpush1.msra.mxu0 %v462
  %812 = vmatprep.subr.mxu0 %v459
  %813 = vmatpush1.msra.mxu0 %v458
  %814 = vmatprep.subr.mxu0 %v455
  %815 = vmatpush1.msra.mxu0 %v454
  %816 = vmatprep.subr.mxu0 %v579
  %817 = vmatpush2.msra.mxu0 %v578
  %818 = vmatprep.subr.mxu0 %v575
  %819 = vmatpush2.msra.mxu0 %v574
  %820 = vmatprep.subr.mxu0 %v571
  %821 = vmatpush2.msra.mxu0 %v570
  %822 = vmatprep.subr.mxu0 %v567
  %823 = vmatpush2.msra.mxu0 %v566
  %824 = vmatprep.subr.mxu0 %v563
  %825 = vmatpush2.msra.mxu0 %v562
  %826 = vmatprep.subr.mxu0 %v559
  %827 = vmatpush2.msra.mxu0 %v558
  %828 = vmatprep.subr.mxu0 %v555
  %829 = vmatpush2.msra.mxu0 %v554
  %830 = vmatprep.subr.mxu0 %v551
  %831 = vmatpush2.msra.mxu0 %v550
  %832 = vmatprep.subr.mxu0 %v547
  %833 = vmatpush2.msra.mxu0 %v546
  %834 = vmatprep.subr.mxu0 %v543
  %835 = vmatpush2.msra.mxu0 %v542
  %836 = vmatprep.subr.mxu0 %v539
  %837 = vmatpush2.msra.mxu0 %v538
  %838 = vmatprep.subr.mxu0 %v535
  %839 = vmatpush2.msra.mxu0 %v534
  %840 = vmatprep.subr.mxu0 %v531
  %841 = vmatpush2.msra.mxu0 %v530
  %842 = vmatprep.subr.mxu0 %v527
  %843 = vmatpush2.msra.mxu0 %v526
  %844 = vmatprep.subr.mxu0 %v523
  %845 = vmatpush2.msra.mxu0 %v522
  %846 = vmatprep.subr.mxu0 %v519
  %847 = vmatpush2.msra.mxu0 %v518
  %848 = vmatprep.mubr.f32.mxu0 %v586
  %849 = vmatmul.mubr.f32.gmra.mxu0 %v762
  %v850 = vpop.f32.mrf.mxu0
  %v851 = vadd.f32 %v767, %v850
  %v852 = vpop.f32.mrf.mxu0
  %v853 = vadd.f32 %v771, %v852
  %854 = vdwg.mxu0
  %855 = vmatprep.subr.mxu0 %v517
  %856 = vmatpush1.msra.mxu0 %v516
  %857 = vmatprep.subr.mxu0 %v513
  %858 = vmatpush1.msra.mxu0 %v512
  %859 = vmatprep.subr.mxu0 %v509
  %860 = vmatpush1.msra.mxu0 %v508
  %861 = vmatprep.subr.mxu0 %v505
  %862 = vmatpush1.msra.mxu0 %v504
  %863 = vmatprep.subr.mxu0 %v501
  %864 = vmatpush1.msra.mxu0 %v500
  %865 = vmatprep.subr.mxu0 %v497
  %866 = vmatpush1.msra.mxu0 %v496
  %867 = vmatprep.subr.mxu0 %v493
  %868 = vmatpush1.msra.mxu0 %v492
  %869 = vmatprep.subr.mxu0 %v489
  %870 = vmatpush1.msra.mxu0 %v488
  %871 = vmatprep.subr.mxu0 %v485
  %872 = vmatpush1.msra.mxu0 %v484
  %873 = vmatprep.subr.mxu0 %v481
  %874 = vmatpush1.msra.mxu0 %v480
  %875 = vmatprep.subr.mxu0 %v477
  %876 = vmatpush1.msra.mxu0 %v476
  %877 = vmatprep.subr.mxu0 %v473
  %878 = vmatpush1.msra.mxu0 %v472
  %879 = vmatprep.subr.mxu0 %v469
  %880 = vmatpush1.msra.mxu0 %v468
  %881 = vmatprep.subr.mxu0 %v465
  %882 = vmatpush1.msra.mxu0 %v464
  %883 = vmatprep.subr.mxu0 %v461
  %884 = vmatpush1.msra.mxu0 %v460
  %885 = vmatprep.subr.mxu0 %v457
  %886 = vmatpush1.msra.mxu0 %v456
  %887 = vmatprep.subr.mxu0 %v581
  %888 = vmatpush2.msra.mxu0 %v580
  %889 = vmatprep.subr.mxu0 %v577
  %890 = vmatpush2.msra.mxu0 %v576
  %891 = vmatprep.subr.mxu0 %v573
  %892 = vmatpush2.msra.mxu0 %v572
  %893 = vmatprep.subr.mxu0 %v569
  %894 = vmatpush2.msra.mxu0 %v568
  %895 = vmatprep.subr.mxu0 %v565
  %896 = vmatpush2.msra.mxu0 %v564
  %897 = vmatprep.subr.mxu0 %v561
  %898 = vmatpush2.msra.mxu0 %v560
  %899 = vmatprep.subr.mxu0 %v557
  %900 = vmatpush2.msra.mxu0 %v556
  %901 = vmatprep.subr.mxu0 %v553
  %902 = vmatpush2.msra.mxu0 %v552
  %903 = vmatprep.subr.mxu0 %v549
  %904 = vmatpush2.msra.mxu0 %v548
  %905 = vmatprep.subr.mxu0 %v545
  %906 = vmatpush2.msra.mxu0 %v544
  %907 = vmatprep.subr.mxu0 %v541
  %908 = vmatpush2.msra.mxu0 %v540
  %909 = vmatprep.subr.mxu0 %v537
  %910 = vmatpush2.msra.mxu0 %v536
  %911 = vmatprep.subr.mxu0 %v533
  %912 = vmatpush2.msra.mxu0 %v532
  %913 = vmatprep.subr.mxu0 %v529
  %914 = vmatpush2.msra.mxu0 %v528
  %915 = vmatprep.subr.mxu0 %v525
  %916 = vmatpush2.msra.mxu0 %v524
  %917 = vmatprep.subr.mxu0 %v521
  %918 = vmatpush2.msra.mxu0 %v520
  %919 = vmatprep.mubr.f32.mxu0 %v586
  %920 = vmatmul.mubr.f32.gmra.mxu0 %v762
  %v921 = vpop.f32.mrf.mxu0
  %v922 = vadd.f32 %v775, %v921
  %v923 = vpop.f32.mrf.mxu0
  %v924 = vadd.f32 %v779, %v923
  %925 = vdwg.mxu0
  %v926 = vxor.u32 %v851, 2147483648
  %v927 = vmul.f32 %v926, 1.442695
  %v928 = vpow.pop %v927
  %v929 = vadd.f32 %v928, 1.0
  %v930 = vrcp.pop %v929
  %v931 = vmul.f32 1.0, %v930
  %v932 = vxor.u32 %v853, 2147483648
  %v933 = vmul.f32 %v932, 1.442695
  %v934 = vpow.pop %v933
  %v935 = vadd.f32 %v934, 1.0
  %v936 = vrcp.pop %v935
  %v937 = vmul.f32 1.0, %v936
  %v938 = vtanh.pop %v922
  %v939 = vxor.u32 %v924, 2147483648
  %v940 = vmul.f32 %v939, 1.442695
  %v941 = vpow.pop %v940
  %v942 = vadd.f32 %v941, 1.0
  %v943 = vrcp.pop %v942
  %v944 = vmul.f32 1.0, %v943
  %v945 = vmul.f32 %v937, %v588
  %v946 = vmul.f32 %v931, %v938
  %v947 = vadd.f32 %v945, %v946
  %v948 = vtanh.pop %v947
  %v949 = vmul.f32 %v944, %v948
  %950 = vst [vmem:[#allocation3] sm:$0xff] %v949
  %s951 = scalar_lea.vmem [#allocation2], 32
  %v952 = vld [vmem:[%s951] sm:$0xff]
  %v953 = vld [vmem:[%s951 + $0x8] sm:$0xff]
  %v954 = vld [vmem:[%s951 + $0x10] sm:$0xff]
  %v955 = vld [vmem:[%s951 + $0x18] sm:$0xff]
  %956 = vmatprep.subr.mxu0 %v451
  %957 = vmatpush1.msra.mxu0 %v450
  %958 = vmatprep.subr.mxu0 %v447
  %959 = vmatpush1.msra.mxu0 %v446
  %960 = vmatprep.subr.mxu0 %v443
  %961 = vmatpush1.msra.mxu0 %v442
  %962 = vmatprep.subr.mxu0 %v439
  %963 = vmatpush1.msra.mxu0 %v438
  %964 = vmatprep.subr.mxu0 %v435
  %965 = vmatpush1.msra.mxu0 %v434
  %966 = vmatprep.subr.mxu0 %v431
  %967 = vmatpush1.msra.mxu0 %v430
  %968 = vmatprep.subr.mxu0 %v427
  %969 = vmatpush1.msra.mxu0 %v426
  %970 = vmatprep.subr.mxu0 %v423
  %971 = vmatpush1.msra.mxu0 %v422
  %972 = vmatprep.subr.mxu0 %v419
  %973 = vmatpush1.msra.mxu0 %v418
  %974 = vmatprep.subr.mxu0 %v415
  %975 = vmatpush1.msra.mxu0 %v414
  %976 = vmatprep.subr.mxu0 %v411
  %977 = vmatpush1.msra.mxu0 %v410
  %978 = vmatprep.subr.mxu0 %v407
  %979 = vmatpush1.msra.mxu0 %v406
  %980 = vmatprep.subr.mxu0 %v403
  %981 = vmatpush1.msra.mxu0 %v402
  %982 = vmatprep.subr.mxu0 %v399
  %983 = vmatpush1.msra.mxu0 %v398
  %984 = vmatprep.subr.mxu0 %v395
  %985 = vmatpush1.msra.mxu0 %v394
  %986 = vmatprep.subr.mxu0 %v391
  %987 = vmatpush1.msra.mxu0 %v390
  %988 = vmatprep.subr.mxu0 0.0
  %989 = vmatpush2.msra.mxu0 0.0
  %990 = vmatprep.subr.mxu0 0.0
  %991 = vmatpush2.msra.mxu0 0.0
  %992 = vmatprep.subr.mxu0 0.0
  %993 = vmatpush2.msra.mxu0 0.0
  %994 = vmatprep.subr.mxu0 0.0
  %995 = vmatpush2.msra.mxu0 0.0
  %996 = vmatprep.subr.mxu0 0.0
  %997 = vmatpush2.msra.mxu0 0.0
  %998 = vmatprep.subr.mxu0 0.0
  %999 = vmatpush2.msra.mxu0 0.0
  %1000 = vmatprep.subr.mxu0 0.0
  %1001 = vmatpush2.msra.mxu0 0.0
  %1002 = vmatprep.subr.mxu0 0.0
  %1003 = vmatpush2.msra.mxu0 0.0
  %1004 = vmatprep.subr.mxu0 0.0
  %1005 = vmatpush2.msra.mxu0 0.0
  %1006 = vmatprep.subr.mxu0 0.0
  %1007 = vmatpush2.msra.mxu0 0.0
  %1008 = vmatprep.subr.mxu0 0.0
  %1009 = vmatpush2.msra.mxu0 0.0
  %1010 = vmatprep.subr.mxu0 0.0
  %1011 = vmatpush2.msra.mxu0 0.0
  %1012 = vmatprep.subr.mxu0 0.0
  %1013 = vmatpush2.msra.mxu0 0.0
  %1014 = vmatprep.subr.mxu0 0.0
  %1015 = vmatpush2.msra.mxu0 0.0
  %1016 = vmatprep.subr.mxu0 0.0
  %1017 = vmatpush2.msra.mxu0 0.0
  %1018 = vmatprep.subr.mxu0 0.0
  %1019 = vmatpush2.msra.mxu0 0.0
  %1020 = vmatprep.mubr.f32.mxu0 0.0
  %1021 = vmatmul.mubr.f32.gmra.mxu0 %v762
  %v1022 = vpop.f32.mrf.mxu0
  %v1023 = vadd.f32 0.0, %v1022
  %v1024 = vpop.f32.mrf.mxu0
  %v1025 = vadd.f32 0.0, %v1024
  %1026 = vdwg.mxu0
  %1027 = vmatprep.subr.mxu0 %v453
  %1028 = vmatpush1.msra.mxu0 %v452
  %1029 = vmatprep.subr.mxu0 %v449
  %1030 = vmatpush1.msra.mxu0 %v448
  %1031 = vmatprep.subr.mxu0 %v445
  %1032 = vmatpush1.msra.mxu0 %v444
  %1033 = vmatprep.subr.mxu0 %v441
  %1034 = vmatpush1.msra.mxu0 %v440
  %1035 = vmatprep.subr.mxu0 %v437
  %1036 = vmatpush1.msra.mxu0 %v436
  %1037 = vmatprep.subr.mxu0 %v433
  %1038 = vmatpush1.msra.mxu0 %v432
  %1039 = vmatprep.subr.mxu0 %v429
  %1040 = vmatpush1.msra.mxu0 %v428
  %1041 = vmatprep.subr.mxu0 %v425
  %1042 = vmatpush1.msra.mxu0 %v424
  %1043 = vmatprep.subr.mxu0 %v421
  %1044 = vmatpush1.msra.mxu0 %v420
  %1045 = vmatprep.subr.mxu0 %v417
  %1046 = vmatpush1.msra.mxu0 %v416
  %1047 = vmatprep.subr.mxu0 %v413
  %1048 = vmatpush1.msra.mxu0 %v412
  %1049 = vmatprep.subr.mxu0 %v409
  %1050 = vmatpush1.msra.mxu0 %v408
  %1051 = vmatprep.subr.mxu0 %v405
  %1052 = vmatpush1.msra.mxu0 %v404
  %1053 = vmatprep.subr.mxu0 %v401
  %1054 = vmatpush1.msra.mxu0 %v400
  %1055 = vmatprep.subr.mxu0 %v397
  %1056 = vmatpush1.msra.mxu0 %v396
  %1057 = vmatprep.subr.mxu0 %v393
  %1058 = vmatpush1.msra.mxu0 %v392
  %1059 = vmatprep.subr.mxu0 0.0
  %1060 = vmatpush2.msra.mxu0 0.0
  %1061 = vmatprep.subr.mxu0 0.0
  %1062 = vmatpush2.msra.mxu0 0.0
  %1063 = vmatprep.subr.mxu0 0.0
  %1064 = vmatpush2.msra.mxu0 0.0
  %1065 = vmatprep.subr.mxu0 0.0
  %1066 = vmatpush2.msra.mxu0 0.0
  %1067 = vmatprep.subr.mxu0 0.0
  %1068 = vmatpush2.msra.mxu0 0.0
  %1069 = vmatprep.subr.mxu0 0.0
  %1070 = vmatpush2.msra.mxu0 0.0
  %1071 = vmatprep.subr.mxu0 0.0
  %1072 = vmatpush2.msra.mxu0 0.0
  %1073 = vmatprep.subr.mxu0 0.0
  %1074 = vmatpush2.msra.mxu0 0.0
  %1075 = vmatprep.subr.mxu0 0.0
  %1076 = vmatpush2.msra.mxu0 0.0
  %1077 = vmatprep.subr.mxu0 0.0
  %1078 = vmatpush2.msra.mxu0 0.0
  %1079 = vmatprep.subr.mxu0 0.0
  %1080 = vmatpush2.msra.mxu0 0.0
  %1081 = vmatprep.subr.mxu0 0.0
  %1082 = vmatpush2.msra.mxu0 0.0
  %1083 = vmatprep.subr.mxu0 0.0
  %1084 = vmatpush2.msra.mxu0 0.0
  %1085 = vmatprep.subr.mxu0 0.0
  %1086 = vmatpush2.msra.mxu0 0.0
  %1087 = vmatprep.subr.mxu0 0.0
  %1088 = vmatpush2.msra.mxu0 0.0
  %1089 = vmatprep.subr.mxu0 0.0
  %1090 = vmatpush2.msra.mxu0 0.0
  %1091 = vmatprep.mubr.f32.mxu0 0.0
  %1092 = vmatmul.mubr.f32.gmra.mxu0 %v762
  %v1093 = vpop.f32.mrf.mxu0
  %v1094 = vadd.f32 0.0, %v1093
  %v1095 = vpop.f32.mrf.mxu0
  %v1096 = vadd.f32 0.0, %v1095
  %1097 = vdwg.mxu0
  %v1098 = vadd.f32 %v952, %v1023
  %v1099 = vadd.f32 %v953, %v1025
  %v1100 = vadd.f32 %v954, %v1094
  %v1101 = vadd.f32 %v955, %v1096
  %v1102 = vxor.u32 %v1098, 2147483648
  %v1103 = vmul.f32 %v1102, 1.442695
  %v1104 = vpow.pop %v1103
  %v1105 = vadd.f32 %v1104, 1.0
  %v1106 = vrcp.pop %v1105
  %v1107 = vmul.f32 1.0, %v1106
  %v1108 = vxor.u32 %v1099, 2147483648
  %v1109 = vmul.f32 %v1108, 1.442695
  %v1110 = vpow.pop %v1109
  %v1111 = vadd.f32 %v1110, 1.0
  %v1112 = vrcp.pop %v1111
  %v1113 = vmul.f32 1.0, %v1112
  %v1114 = vtanh.pop %v1100
  %v1115 = vxor.u32 %v1101, 2147483648
  %v1116 = vmul.f32 %v1115, 1.442695
  %v1117 = vpow.pop %v1116
  %v1118 = vadd.f32 %v1117, 1.0
  %v1119 = vrcp.pop %v1118
  %v1120 = vmul.f32 1.0, %v1119
  %v1121 = vmul.f32 %v1113, %v760
  %v1122 = vmul.f32 %v1107, %v1114
  %v1123 = vadd.f32 %v1121, %v1122
  %v1124 = vtanh.pop %v1123
  %v1125 = vmul.f32 %v1120, %v1124
  %1126 = vmatprep.subr.mxu0 %v515
  %1127 = vmatpush1.msra.mxu0 %v514
  %1128 = vmatprep.subr.mxu0 %v511
  %1129 = vmatpush1.msra.mxu0 %v510
  %1130 = vmatprep.subr.mxu0 %v507
  %1131 = vmatpush1.msra.mxu0 %v506
  %1132 = vmatprep.subr.mxu0 %v503
  %1133 = vmatpush1.msra.mxu0 %v502
  %1134 = vmatprep.subr.mxu0 %v499
  %1135 = vmatpush1.msra.mxu0 %v498
  %1136 = vmatprep.subr.mxu0 %v495
  %1137 = vmatpush1.msra.mxu0 %v494
  %1138 = vmatprep.subr.mxu0 %v491
  %1139 = vmatpush1.msra.mxu0 %v490
  %1140 = vmatprep.subr.mxu0 %v487
  %1141 = vmatpush1.msra.mxu0 %v486
  %1142 = vmatprep.subr.mxu0 %v483
  %1143 = vmatpush1.msra.mxu0 %v482
  %1144 = vmatprep.subr.mxu0 %v479
  %1145 = vmatpush1.msra.mxu0 %v478
  %1146 = vmatprep.subr.mxu0 %v475
  %1147 = vmatpush1.msra.mxu0 %v474
  %1148 = vmatprep.subr.mxu0 %v471
  %1149 = vmatpush1.msra.mxu0 %v470
  %1150 = vmatprep.subr.mxu0 %v467
  %1151 = vmatpush1.msra.mxu0 %v466
  %1152 = vmatprep.subr.mxu0 %v463
  %1153 = vmatpush1.msra.mxu0 %v462
  %1154 = vmatprep.subr.mxu0 %v459
  %1155 = vmatpush1.msra.mxu0 %v458
  %1156 = vmatprep.subr.mxu0 %v455
  %1157 = vmatpush1.msra.mxu0 %v454
  %1158 = vmatprep.subr.mxu0 %v579
  %1159 = vmatpush2.msra.mxu0 %v578
  %1160 = vmatprep.subr.mxu0 %v575
  %1161 = vmatpush2.msra.mxu0 %v574
  %1162 = vmatprep.subr.mxu0 %v571
  %1163 = vmatpush2.msra.mxu0 %v570
  %1164 = vmatprep.subr.mxu0 %v567
  %1165 = vmatpush2.msra.mxu0 %v566
  %1166 = vmatprep.subr.mxu0 %v563
  %1167 = vmatpush2.msra.mxu0 %v562
  %1168 = vmatprep.subr.mxu0 %v559
  %1169 = vmatpush2.msra.mxu0 %v558
  %1170 = vmatprep.subr.mxu0 %v555
  %1171 = vmatpush2.msra.mxu0 %v554
  %1172 = vmatprep.subr.mxu0 %v551
  %1173 = vmatpush2.msra.mxu0 %v550
  %1174 = vmatprep.subr.mxu0 %v547
  %1175 = vmatpush2.msra.mxu0 %v546
  %1176 = vmatprep.subr.mxu0 %v543
  %1177 = vmatpush2.msra.mxu0 %v542
  %1178 = vmatprep.subr.mxu0 %v539
  %1179 = vmatpush2.msra.mxu0 %v538
  %1180 = vmatprep.subr.mxu0 %v535
  %1181 = vmatpush2.msra.mxu0 %v534
  %1182 = vmatprep.subr.mxu0 %v531
  %1183 = vmatpush2.msra.mxu0 %v530
  %1184 = vmatprep.subr.mxu0 %v527
  %1185 = vmatpush2.msra.mxu0 %v526
  %1186 = vmatprep.subr.mxu0 %v523
  %1187 = vmatpush2.msra.mxu0 %v522
  %1188 = vmatprep.subr.mxu0 %v519
  %1189 = vmatpush2.msra.mxu0 %v518
  %1190 = vmatprep.mubr.f32.mxu0 %v949
  %1191 = vmatmul.mubr.f32.gmra.mxu0 %v1125
  %v1192 = vpop.f32.mrf.mxu0
  %v1193 = vadd.f32 %v767, %v1192
  %v1194 = vpop.f32.mrf.mxu0
  %v1195 = vadd.f32 %v771, %v1194
  %1196 = vdwg.mxu0
  %1197 = vmatprep.subr.mxu0 %v517
  %1198 = vmatpush1.msra.mxu0 %v516
  %1199 = vmatprep.subr.mxu0 %v513
  %1200 = vmatpush1.msra.mxu0 %v512
  %1201 = vmatprep.subr.mxu0 %v509
  %1202 = vmatpush1.msra.mxu0 %v508
  %1203 = vmatprep.subr.mxu0 %v505
  %1204 = vmatpush1.msra.mxu0 %v504
  %1205 = vmatprep.subr.mxu0 %v501
  %1206 = vmatpush1.msra.mxu0 %v500
  %1207 = vmatprep.subr.mxu0 %v497
  %1208 = vmatpush1.msra.mxu0 %v496
  %1209 = vmatprep.subr.mxu0 %v493
  %1210 = vmatpush1.msra.mxu0 %v492
  %1211 = vmatprep.subr.mxu0 %v489
  %1212 = vmatpush1.msra.mxu0 %v488
  %1213 = vmatprep.subr.mxu0 %v485
  %1214 = vmatpush1.msra.mxu0 %v484
  %1215 = vmatprep.subr.mxu0 %v481
  %1216 = vmatpush1.msra.mxu0 %v480
  %1217 = vmatprep.subr.mxu0 %v477
  %1218 = vmatpush1.msra.mxu0 %v476
  %1219 = vmatprep.subr.mxu0 %v473
  %1220 = vmatpush1.msra.mxu0 %v472
  %1221 = vmatprep.subr.mxu0 %v469
  %1222 = vmatpush1.msra.mxu0 %v468
  %1223 = vmatprep.subr.mxu0 %v465
  %1224 = vmatpush1.msra.mxu0 %v464
  %1225 = vmatprep.subr.mxu0 %v461
  %1226 = vmatpush1.msra.mxu0 %v460
  %1227 = vmatprep.subr.mxu0 %v457
  %1228 = vmatpush1.msra.mxu0 %v456
  %1229 = vmatprep.subr.mxu0 %v581
  %1230 = vmatpush2.msra.mxu0 %v580
  %1231 = vmatprep.subr.mxu0 %v577
  %1232 = vmatpush2.msra.mxu0 %v576
  %1233 = vmatprep.subr.mxu0 %v573
  %1234 = vmatpush2.msra.mxu0 %v572
  %1235 = vmatprep.subr.mxu0 %v569
  %1236 = vmatpush2.msra.mxu0 %v568
  %1237 = vmatprep.subr.mxu0 %v565
  %1238 = vmatpush2.msra.mxu0 %v564
  %1239 = vmatprep.subr.mxu0 %v561
  %1240 = vmatpush2.msra.mxu0 %v560
  %1241 = vmatprep.subr.mxu0 %v557
  %1242 = vmatpush2.msra.mxu0 %v556
  %1243 = vmatprep.subr.mxu0 %v553
  %1244 = vmatpush2.msra.mxu0 %v552
  %1245 = vmatprep.subr.mxu0 %v549
  %1246 = vmatpush2.msra.mxu0 %v548
  %1247 = vmatprep.subr.mxu0 %v545
  %1248 = vmatpush2.msra.mxu0 %v544
  %1249 = vmatprep.subr.mxu0 %v541
  %1250 = vmatpush2.msra.mxu0 %v540
  %1251 = vmatprep.subr.mxu0 %v537
  %1252 = vmatpush2.msra.mxu0 %v536
  %1253 = vmatprep.subr.mxu0 %v533
  %1254 = vmatpush2.msra.mxu0 %v532
  %1255 = vmatprep.subr.mxu0 %v529
  %1256 = vmatpush2.msra.mxu0 %v528
  %1257 = vmatprep.subr.mxu0 %v525
  %1258 = vmatpush2.msra.mxu0 %v524
  %1259 = vmatprep.subr.mxu0 %v521
  %1260 = vmatpush2.msra.mxu0 %v520
  %1261 = vmatprep.mubr.f32.mxu0 %v949
  %1262 = vmatmul.mubr.f32.gmra.mxu0 %v1125
  %v1263 = vpop.f32.mrf.mxu0
  %v1264 = vadd.f32 %v775, %v1263
  %v1265 = vpop.f32.mrf.mxu0
  %v1266 = vadd.f32 %v779, %v1265
  %1267 = vdwg.mxu0
  %v1268 = vxor.u32 %v1193, 2147483648
  %v1269 = vmul.f32 %v1268, 1.442695
  %v1270 = vpow.pop %v1269
  %v1271 = vadd.f32 %v1270, 1.0
  %v1272 = vrcp.pop %v1271
  %v1273 = vmul.f32 1.0, %v1272
  %v1274 = vxor.u32 %v1195, 2147483648
  %v1275 = vmul.f32 %v1274, 1.442695
  %v1276 = vpow.pop %v1275
  %v1277 = vadd.f32 %v1276, 1.0
  %v1278 = vrcp.pop %v1277
  %v1279 = vmul.f32 1.0, %v1278
  %v1280 = vtanh.pop %v1264
  %v1281 = vxor.u32 %v1266, 2147483648
  %v1282 = vmul.f32 %v1281, 1.442695
  %v1283 = vpow.pop %v1282
  %v1284 = vadd.f32 %v1283, 1.0
  %v1285 = vrcp.pop %v1284
  %v1286 = vmul.f32 1.0, %v1285
  %v1287 = vmul.f32 %v1279, %v947
  %v1288 = vmul.f32 %v1273, %v1280
  %v1289 = vadd.f32 %v1287, %v1288
  %v1290 = vtanh.pop %v1289
  %v1291 = vmul.f32 %v1286, %v1290
  %s1292 = scalar_lea.vmem [#allocation3], 8
  %1293 = vst [vmem:[%s1292] sm:$0xff] %v1291
  %s1294 = scalar_lea.vmem [#allocation2], 64
  %v1295 = vld [vmem:[%s1294] sm:$0xff]
  %v1296 = vld [vmem:[%s1294 + $0x8] sm:$0xff]
  %v1297 = vld [vmem:[%s1294 + $0x10] sm:$0xff]
  %v1298 = vld [vmem:[%s1294 + $0x18] sm:$0xff]
  %1299 = vmatprep.subr.mxu0 %v451
  %1300 = vmatpush1.msra.mxu0 %v450
  %1301 = vmatprep.subr.mxu0 %v447
  %1302 = vmatpush1.msra.mxu0 %v446
  %1303 = vmatprep.subr.mxu0 %v443
  %1304 = vmatpush1.msra.mxu0 %v442
  %1305 = vmatprep.subr.mxu0 %v439
  %1306 = vmatpush1.msra.mxu0 %v438
  %1307 = vmatprep.subr.mxu0 %v435
  %1308 = vmatpush1.msra.mxu0 %v434
  %1309 = vmatprep.subr.mxu0 %v431
  %1310 = vmatpush1.msra.mxu0 %v430
  %1311 = vmatprep.subr.mxu0 %v427
  %1312 = vmatpush1.msra.mxu0 %v426
  %1313 = vmatprep.subr.mxu0 %v423
  %1314 = vmatpush1.msra.mxu0 %v422
  %1315 = vmatprep.subr.mxu0 %v419
  %1316 = vmatpush1.msra.mxu0 %v418
  %1317 = vmatprep.subr.mxu0 %v415
  %1318 = vmatpush1.msra.mxu0 %v414
  %1319 = vmatprep.subr.mxu0 %v411
  %1320 = vmatpush1.msra.mxu0 %v410
  %1321 = vmatprep.subr.mxu0 %v407
  %1322 = vmatpush1.msra.mxu0 %v406
  %1323 = vmatprep.subr.mxu0 %v403
  %1324 = vmatpush1.msra.mxu0 %v402
  %1325 = vmatprep.subr.mxu0 %v399
  %1326 = vmatpush1.msra.mxu0 %v398
  %1327 = vmatprep.subr.mxu0 %v395
  %1328 = vmatpush1.msra.mxu0 %v394
  %1329 = vmatprep.subr.mxu0 %v391
  %1330 = vmatpush1.msra.mxu0 %v390
  %1331 = vmatprep.subr.mxu0 0.0
  %1332 = vmatpush2.msra.mxu0 0.0
  %1333 = vmatprep.subr.mxu0 0.0
  %1334 = vmatpush2.msra.mxu0 0.0
  %1335 = vmatprep.subr.mxu0 0.0
  %1336 = vmatpush2.msra.mxu0 0.0
  %1337 = vmatprep.subr.mxu0 0.0
  %1338 = vmatpush2.msra.mxu0 0.0
  %1339 = vmatprep.subr.mxu0 0.0
  %1340 = vmatpush2.msra.mxu0 0.0
  %1341 = vmatprep.subr.mxu0 0.0
  %1342 = vmatpush2.msra.mxu0 0.0
  %1343 = vmatprep.subr.mxu0 0.0
  %1344 = vmatpush2.msra.mxu0 0.0
  %1345 = vmatprep.subr.mxu0 0.0
  %1346 = vmatpush2.msra.mxu0 0.0
  %1347 = vmatprep.subr.mxu0 0.0
  %1348 = vmatpush2.msra.mxu0 0.0
  %1349 = vmatprep.subr.mxu0 0.0
  %1350 = vmatpush2.msra.mxu0 0.0
  %1351 = vmatprep.subr.mxu0 0.0
  %1352 = vmatpush2.msra.mxu0 0.0
  %1353 = vmatprep.subr.mxu0 0.0
  %1354 = vmatpush2.msra.mxu0 0.0
  %1355 = vmatprep.subr.mxu0 0.0
  %1356 = vmatpush2.msra.mxu0 0.0
  %1357 = vmatprep.subr.mxu0 0.0
  %1358 = vmatpush2.msra.mxu0 0.0
  %1359 = vmatprep.subr.mxu0 0.0
  %1360 = vmatpush2.msra.mxu0 0.0
  %1361 = vmatprep.subr.mxu0 0.0
  %1362 = vmatpush2.msra.mxu0 0.0
  %1363 = vmatprep.mubr.f32.mxu0 0.0
  %1364 = vmatmul.mubr.f32.gmra.mxu0 %v1125
  %v1365 = vpop.f32.mrf.mxu0
  %v1366 = vadd.f32 0.0, %v1365
  %v1367 = vpop.f32.mrf.mxu0
  %v1368 = vadd.f32 0.0, %v1367
  %1369 = vdwg.mxu0
  %1370 = vmatprep.subr.mxu0 %v453
  %1371 = vmatpush1.msra.mxu0 %v452
  %1372 = vmatprep.subr.mxu0 %v449
  %1373 = vmatpush1.msra.mxu0 %v448
  %1374 = vmatprep.subr.mxu0 %v445
  %1375 = vmatpush1.msra.mxu0 %v444
  %1376 = vmatprep.subr.mxu0 %v441
  %1377 = vmatpush1.msra.mxu0 %v440
  %1378 = vmatprep.subr.mxu0 %v437
  %1379 = vmatpush1.msra.mxu0 %v436
  %1380 = vmatprep.subr.mxu0 %v433
  %1381 = vmatpush1.msra.mxu0 %v432
  %1382 = vmatprep.subr.mxu0 %v429
  %1383 = vmatpush1.msra.mxu0 %v428
  %1384 = vmatprep.subr.mxu0 %v425
  %1385 = vmatpush1.msra.mxu0 %v424
  %1386 = vmatprep.subr.mxu0 %v421
  %1387 = vmatpush1.msra.mxu0 %v420
  %1388 = vmatprep.subr.mxu0 %v417
  %1389 = vmatpush1.msra.mxu0 %v416
  %1390 = vmatprep.subr.mxu0 %v413
  %1391 = vmatpush1.msra.mxu0 %v412
  %1392 = vmatprep.subr.mxu0 %v409
  %1393 = vmatpush1.msra.mxu0 %v408
  %1394 = vmatprep.subr.mxu0 %v405
  %1395 = vmatpush1.msra.mxu0 %v404
  %1396 = vmatprep.subr.mxu0 %v401
  %1397 = vmatpush1.msra.mxu0 %v400
  %1398 = vmatprep.subr.mxu0 %v397
  %1399 = vmatpush1.msra.mxu0 %v396
  %1400 = vmatprep.subr.mxu0 %v393
  %1401 = vmatpush1.msra.mxu0 %v392
  %1402 = vmatprep.subr.mxu0 0.0
  %1403 = vmatpush2.msra.mxu0 0.0
  %1404 = vmatprep.subr.mxu0 0.0
  %1405 = vmatpush2.msra.mxu0 0.0
  %1406 = vmatprep.subr.mxu0 0.0
  %1407 = vmatpush2.msra.mxu0 0.0
  %1408 = vmatprep.subr.mxu0 0.0
  %1409 = vmatpush2.msra.mxu0 0.0
  %1410 = vmatprep.subr.mxu0 0.0
  %1411 = vmatpush2.msra.mxu0 0.0
  %1412 = vmatprep.subr.mxu0 0.0
  %1413 = vmatpush2.msra.mxu0 0.0
  %1414 = vmatprep.subr.mxu0 0.0
  %1415 = vmatpush2.msra.mxu0 0.0
  %1416 = vmatprep.subr.mxu0 0.0
  %1417 = vmatpush2.msra.mxu0 0.0
  %1418 = vmatprep.subr.mxu0 0.0
  %1419 = vmatpush2.msra.mxu0 0.0
  %1420 = vmatprep.subr.mxu0 0.0
  %1421 = vmatpush2.msra.mxu0 0.0
  %1422 = vmatprep.subr.mxu0 0.0
  %1423 = vmatpush2.msra.mxu0 0.0
  %1424 = vmatprep.subr.mxu0 0.0
  %1425 = vmatpush2.msra.mxu0 0.0
  %1426 = vmatprep.subr.mxu0 0.0
  %1427 = vmatpush2.msra.mxu0 0.0
  %1428 = vmatprep.subr.mxu0 0.0
  %1429 = vmatpush2.msra.mxu0 0.0
  %1430 = vmatprep.subr.mxu0 0.0
  %1431 = vmatpush2.msra.mxu0 0.0
  %1432 = vmatprep.subr.mxu0 0.0
  %1433 = vmatpush2.msra.mxu0 0.0
  %1434 = vmatprep.mubr.f32.mxu0 0.0
  %1435 = vmatmul.mubr.f32.gmra.mxu0 %v1125
  %v1436 = vpop.f32.mrf.mxu0
  %v1437 = vadd.f32 0.0, %v1436
  %v1438 = vpop.f32.mrf.mxu0
  %v1439 = vadd.f32 0.0, %v1438
  %1440 = vdwg.mxu0
  %v1441 = vadd.f32 %v1295, %v1366
  %v1442 = vadd.f32 %v1296, %v1368
  %v1443 = vadd.f32 %v1297, %v1437
  %v1444 = vadd.f32 %v1298, %v1439
  %v1445 = vxor.u32 %v1441, 2147483648
  %v1446 = vmul.f32 %v1445, 1.442695
  %v1447 = vpow.pop %v1446
  %v1448 = vadd.f32 %v1447, 1.0
  %v1449 = vrcp.pop %v1448
  %v1450 = vmul.f32 1.0, %v1449
  %v1451 = vxor.u32 %v1442, 2147483648
  %v1452 = vmul.f32 %v1451, 1.442695
  %v1453 = vpow.pop %v1452
  %v1454 = vadd.f32 %v1453, 1.0
  %v1455 = vrcp.pop %v1454
  %v1456 = vmul.f32 1.0, %v1455
  %v1457 = vtanh.pop %v1443
  %v1458 = vxor.u32 %v1444, 2147483648
  %v1459 = vmul.f32 %v1458, 1.442695
  %v1460 = vpow.pop %v1459
  %v1461 = vadd.f32 %v1460, 1.0
  %v1462 = vrcp.pop %v1461
  %v1463 = vmul.f32 1.0, %v1462
  %v1464 = vmul.f32 %v1456, %v1123
  %v1465 = vmul.f32 %v1450, %v1457
  %v1466 = vadd.f32 %v1464, %v1465
  %v1467 = vtanh.pop %v1466
  %v1468 = vmul.f32 %v1463, %v1467
  %1469 = vmatprep.subr.mxu0 %v515
  %1470 = vmatpush1.msra.mxu0 %v514
  %1471 = vmatprep.subr.mxu0 %v511
  %1472 = vmatpush1.msra.mxu0 %v510
  %1473 = vmatprep.subr.mxu0 %v507
  %1474 = vmatpush1.msra.mxu0 %v506
  %1475 = vmatprep.subr.mxu0 %v503
  %1476 = vmatpush1.msra.mxu0 %v502
  %1477 = vmatprep.subr.mxu0 %v499
  %1478 = vmatpush1.msra.mxu0 %v498
  %1479 = vmatprep.subr.mxu0 %v495
  %1480 = vmatpush1.msra.mxu0 %v494
  %1481 = vmatprep.subr.mxu0 %v491
  %1482 = vmatpush1.msra.mxu0 %v490
  %1483 = vmatprep.subr.mxu0 %v487
  %1484 = vmatpush1.msra.mxu0 %v486
  %1485 = vmatprep.subr.mxu0 %v483
  %1486 = vmatpush1.msra.mxu0 %v482
  %1487 = vmatprep.subr.mxu0 %v479
  %1488 = vmatpush1.msra.mxu0 %v478
  %1489 = vmatprep.subr.mxu0 %v475
  %1490 = vmatpush1.msra.mxu0 %v474
  %1491 = vmatprep.subr.mxu0 %v471
  %1492 = vmatpush1.msra.mxu0 %v470
  %1493 = vmatprep.subr.mxu0 %v467
  %1494 = vmatpush1.msra.mxu0 %v466
  %1495 = vmatprep.subr.mxu0 %v463
  %1496 = vmatpush1.msra.mxu0 %v462
  %1497 = vmatprep.subr.mxu0 %v459
  %1498 = vmatpush1.msra.mxu0 %v458
  %1499 = vmatprep.subr.mxu0 %v455
  %1500 = vmatpush1.msra.mxu0 %v454
  %1501 = vmatprep.subr.mxu0 %v579
  %1502 = vmatpush2.msra.mxu0 %v578
  %1503 = vmatprep.subr.mxu0 %v575
  %1504 = vmatpush2.msra.mxu0 %v574
  %1505 = vmatprep.subr.mxu0 %v571
  %1506 = vmatpush2.msra.mxu0 %v570
  %1507 = vmatprep.subr.mxu0 %v567
  %1508 = vmatpush2.msra.mxu0 %v566
  %1509 = vmatprep.subr.mxu0 %v563
  %1510 = vmatpush2.msra.mxu0 %v562
  %1511 = vmatprep.subr.mxu0 %v559
  %1512 = vmatpush2.msra.mxu0 %v558
  %1513 = vmatprep.subr.mxu0 %v555
  %1514 = vmatpush2.msra.mxu0 %v554
  %1515 = vmatprep.subr.mxu0 %v551
  %1516 = vmatpush2.msra.mxu0 %v550
  %1517 = vmatprep.subr.mxu0 %v547
  %1518 = vmatpush2.msra.mxu0 %v546
  %1519 = vmatprep.subr.mxu0 %v543
  %1520 = vmatpush2.msra.mxu0 %v542
  %1521 = vmatprep.subr.mxu0 %v539
  %1522 = vmatpush2.msra.mxu0 %v538
  %1523 = vmatprep.subr.mxu0 %v535
  %1524 = vmatpush2.msra.mxu0 %v534
  %1525 = vmatprep.subr.mxu0 %v531
  %1526 = vmatpush2.msra.mxu0 %v530
  %1527 = vmatprep.subr.mxu0 %v527
  %1528 = vmatpush2.msra.mxu0 %v526
  %1529 = vmatprep.subr.mxu0 %v523
  %1530 = vmatpush2.msra.mxu0 %v522
  %1531 = vmatprep.subr.mxu0 %v519
  %1532 = vmatpush2.msra.mxu0 %v518
  %1533 = vmatprep.mubr.f32.mxu0 %v1291
  %1534 = vmatmul.mubr.f32.gmra.mxu0 %v1468
  %v1535 = vpop.f32.mrf.mxu0
  %v1536 = vadd.f32 %v767, %v1535
  %v1537 = vpop.f32.mrf.mxu0
  %v1538 = vadd.f32 %v771, %v1537
  %1539 = vdwg.mxu0
  %1540 = vmatprep.subr.mxu0 %v517
  %1541 = vmatpush1.msra.mxu0 %v516
  %1542 = vmatprep.subr.mxu0 %v513
  %1543 = vmatpush1.msra.mxu0 %v512
  %1544 = vmatprep.subr.mxu0 %v509
  %1545 = vmatpush1.msra.mxu0 %v508
  %1546 = vmatprep.subr.mxu0 %v505
  %1547 = vmatpush1.msra.mxu0 %v504
  %1548 = vmatprep.subr.mxu0 %v501
  %1549 = vmatpush1.msra.mxu0 %v500
  %1550 = vmatprep.subr.mxu0 %v497
  %1551 = vmatpush1.msra.mxu0 %v496
  %1552 = vmatprep.subr.mxu0 %v493
  %1553 = vmatpush1.msra.mxu0 %v492
  %1554 = vmatprep.subr.mxu0 %v489
  %1555 = vmatpush1.msra.mxu0 %v488
  %1556 = vmatprep.subr.mxu0 %v485
  %1557 = vmatpush1.msra.mxu0 %v484
  %1558 = vmatprep.subr.mxu0 %v481
  %1559 = vmatpush1.msra.mxu0 %v480
  %1560 = vmatprep.subr.mxu0 %v477
  %1561 = vmatpush1.msra.mxu0 %v476
  %1562 = vmatprep.subr.mxu0 %v473
  %1563 = vmatpush1.msra.mxu0 %v472
  %1564 = vmatprep.subr.mxu0 %v469
  %1565 = vmatpush1.msra.mxu0 %v468
  %1566 = vmatprep.subr.mxu0 %v465
  %1567 = vmatpush1.msra.mxu0 %v464
  %1568 = vmatprep.subr.mxu0 %v461
  %1569 = vmatpush1.msra.mxu0 %v460
  %1570 = vmatprep.subr.mxu0 %v457
  %1571 = vmatpush1.msra.mxu0 %v456
  %1572 = vmatprep.subr.mxu0 %v581
  %1573 = vmatpush2.msra.mxu0 %v580
  %1574 = vmatprep.subr.mxu0 %v577
  %1575 = vmatpush2.msra.mxu0 %v576
  %1576 = vmatprep.subr.mxu0 %v573
  %1577 = vmatpush2.msra.mxu0 %v572
  %1578 = vmatprep.subr.mxu0 %v569
  %1579 = vmatpush2.msra.mxu0 %v568
  %1580 = vmatprep.subr.mxu0 %v565
  %1581 = vmatpush2.msra.mxu0 %v564
  %1582 = vmatprep.subr.mxu0 %v561
  %1583 = vmatpush2.msra.mxu0 %v560
  %1584 = vmatprep.subr.mxu0 %v557
  %1585 = vmatpush2.msra.mxu0 %v556
  %1586 = vmatprep.subr.mxu0 %v553
  %1587 = vmatpush2.msra.mxu0 %v552
  %1588 = vmatprep.subr.mxu0 %v549
  %1589 = vmatpush2.msra.mxu0 %v548
  %1590 = vmatprep.subr.mxu0 %v545
  %1591 = vmatpush2.msra.mxu0 %v544
  %1592 = vmatprep.subr.mxu0 %v541
  %1593 = vmatpush2.msra.mxu0 %v540
  %1594 = vmatprep.subr.mxu0 %v537
  %1595 = vmatpush2.msra.mxu0 %v536
  %1596 = vmatprep.subr.mxu0 %v533
  %1597 = vmatpush2.msra.mxu0 %v532
  %1598 = vmatprep.subr.mxu0 %v529
  %1599 = vmatpush2.msra.mxu0 %v528
  %1600 = vmatprep.subr.mxu0 %v525
  %1601 = vmatpush2.msra.mxu0 %v524
  %1602 = vmatprep.subr.mxu0 %v521
  %1603 = vmatpush2.msra.mxu0 %v520
  %1604 = vmatprep.mubr.f32.mxu0 %v1291
  %1605 = vmatmul.mubr.f32.gmra.mxu0 %v1468
  %v1606 = vpop.f32.mrf.mxu0
  %v1607 = vadd.f32 %v775, %v1606
  %v1608 = vpop.f32.mrf.mxu0
  %v1609 = vadd.f32 %v779, %v1608
  %1610 = vdwg.mxu0
  %v1611 = vxor.u32 %v1536, 2147483648
  %v1612 = vmul.f32 %v1611, 1.442695
  %v1613 = vpow.pop %v1612
  %v1614 = vadd.f32 %v1613, 1.0
  %v1615 = vrcp.pop %v1614
  %v1616 = vmul.f32 1.0, %v1615
  %v1617 = vxor.u32 %v1538, 2147483648
  %v1618 = vmul.f32 %v1617, 1.442695
  %v1619 = vpow.pop %v1618
  %v1620 = vadd.f32 %v1619, 1.0
  %v1621 = vrcp.pop %v1620
  %v1622 = vmul.f32 1.0, %v1621
  %v1623 = vtanh.pop %v1607
  %v1624 = vxor.u32 %v1609, 2147483648
  %v1625 = vmul.f32 %v1624, 1.442695
  %v1626 = vpow.pop %v1625
  %v1627 = vadd.f32 %v1626, 1.0
  %v1628 = vrcp.pop %v1627
  %v1629 = vmul.f32 1.0, %v1628
  %v1630 = vmul.f32 %v1622, %v1289
  %v1631 = vmul.f32 %v1616, %v1623
  %v1632 = vadd.f32 %v1630, %v1631
  %v1633 = vtanh.pop %v1632
  %v1634 = vmul.f32 %v1629, %v1633
  %s1635 = scalar_lea.vmem [#allocation3], 16
  %1636 = vst [vmem:[%s1635] sm:$0xff] %v1634
  %s1637 = scalar_lea.vmem [#allocation2], 96
  %v1638 = vld [vmem:[%s1637] sm:$0xff]
  %v1639 = vld [vmem:[%s1637 + $0x8] sm:$0xff]
  %v1640 = vld [vmem:[%s1637 + $0x10] sm:$0xff]
  %v1641 = vld [vmem:[%s1637 + $0x18] sm:$0xff]
  %1642 = vmatprep.subr.mxu0 %v451
  %1643 = vmatpush1.msra.mxu0 %v450
  %1644 = vmatprep.subr.mxu0 %v447
  %1645 = vmatpush1.msra.mxu0 %v446
  %1646 = vmatprep.subr.mxu0 %v443
  %1647 = vmatpush1.msra.mxu0 %v442
  %1648 = vmatprep.subr.mxu0 %v439
  %1649 = vmatpush1.msra.mxu0 %v438
  %1650 = vmatprep.subr.mxu0 %v435
  %1651 = vmatpush1.msra.mxu0 %v434
  %1652 = vmatprep.subr.mxu0 %v431
  %1653 = vmatpush1.msra.mxu0 %v430
  %1654 = vmatprep.subr.mxu0 %v427
  %1655 = vmatpush1.msra.mxu0 %v426
  %1656 = vmatprep.subr.mxu0 %v423
  %1657 = vmatpush1.msra.mxu0 %v422
  %1658 = vmatprep.subr.mxu0 %v419
  %1659 = vmatpush1.msra.mxu0 %v418
  %1660 = vmatprep.subr.mxu0 %v415
  %1661 = vmatpush1.msra.mxu0 %v414
  %1662 = vmatprep.subr.mxu0 %v411
  %1663 = vmatpush1.msra.mxu0 %v410
  %1664 = vmatprep.subr.mxu0 %v407
  %1665 = vmatpush1.msra.mxu0 %v406
  %1666 = vmatprep.subr.mxu0 %v403
  %1667 = vmatpush1.msra.mxu0 %v402
  %1668 = vmatprep.subr.mxu0 %v399
  %1669 = vmatpush1.msra.mxu0 %v398
  %1670 = vmatprep.subr.mxu0 %v395
  %1671 = vmatpush1.msra.mxu0 %v394
  %1672 = vmatprep.subr.mxu0 %v391
  %1673 = vmatpush1.msra.mxu0 %v390
  %1674 = vmatprep.subr.mxu0 0.0
  %1675 = vmatpush2.msra.mxu0 0.0
  %1676 = vmatprep.subr.mxu0 0.0
  %1677 = vmatpush2.msra.mxu0 0.0
  %1678 = vmatprep.subr.mxu0 0.0
  %1679 = vmatpush2.msra.mxu0 0.0
  %1680 = vmatprep.subr.mxu0 0.0
  %1681 = vmatpush2.msra.mxu0 0.0
  %1682 = vmatprep.subr.mxu0 0.0
  %1683 = vmatpush2.msra.mxu0 0.0
  %1684 = vmatprep.subr.mxu0 0.0
  %1685 = vmatpush2.msra.mxu0 0.0
  %1686 = vmatprep.subr.mxu0 0.0
  %1687 = vmatpush2.msra.mxu0 0.0
  %1688 = vmatprep.subr.mxu0 0.0
  %1689 = vmatpush2.msra.mxu0 0.0
  %1690 = vmatprep.subr.mxu0 0.0
  %1691 = vmatpush2.msra.mxu0 0.0
  %1692 = vmatprep.subr.mxu0 0.0
  %1693 = vmatpush2.msra.mxu0 0.0
  %1694 = vmatprep.subr.mxu0 0.0
  %1695 = vmatpush2.msra.mxu0 0.0
  %1696 = vmatprep.subr.mxu0 0.0
  %1697 = vmatpush2.msra.mxu0 0.0
  %1698 = vmatprep.subr.mxu0 0.0
  %1699 = vmatpush2.msra.mxu0 0.0
  %1700 = vmatprep.subr.mxu0 0.0
  %1701 = vmatpush2.msra.mxu0 0.0
  %1702 = vmatprep.subr.mxu0 0.0
  %1703 = vmatpush2.msra.mxu0 0.0
  %1704 = vmatprep.subr.mxu0 0.0
  %1705 = vmatpush2.msra.mxu0 0.0
  %1706 = vmatprep.mubr.f32.mxu0 0.0
  %1707 = vmatmul.mubr.f32.gmra.mxu0 %v1468
  %v1708 = vpop.f32.mrf.mxu0
  %v1709 = vadd.f32 0.0, %v1708
  %v1710 = vpop.f32.mrf.mxu0
  %v1711 = vadd.f32 0.0, %v1710
  %1712 = vdwg.mxu0
  %1713 = vmatprep.subr.mxu0 %v453
  %1714 = vmatpush1.msra.mxu0 %v452
  %1715 = vmatprep.subr.mxu0 %v449
  %1716 = vmatpush1.msra.mxu0 %v448
  %1717 = vmatprep.subr.mxu0 %v445
  %1718 = vmatpush1.msra.mxu0 %v444
  %1719 = vmatprep.subr.mxu0 %v441
  %1720 = vmatpush1.msra.mxu0 %v440
  %1721 = vmatprep.subr.mxu0 %v437
  %1722 = vmatpush1.msra.mxu0 %v436
  %1723 = vmatprep.subr.mxu0 %v433
  %1724 = vmatpush1.msra.mxu0 %v432
  %1725 = vmatprep.subr.mxu0 %v429
  %1726 = vmatpush1.msra.mxu0 %v428
  %1727 = vmatprep.subr.mxu0 %v425
  %1728 = vmatpush1.msra.mxu0 %v424
  %1729 = vmatprep.subr.mxu0 %v421
  %1730 = vmatpush1.msra.mxu0 %v420
  %1731 = vmatprep.subr.mxu0 %v417
  %1732 = vmatpush1.msra.mxu0 %v416
  %1733 = vmatprep.subr.mxu0 %v413
  %1734 = vmatpush1.msra.mxu0 %v412
  %1735 = vmatprep.subr.mxu0 %v409
  %1736 = vmatpush1.msra.mxu0 %v408
  %1737 = vmatprep.subr.mxu0 %v405
  %1738 = vmatpush1.msra.mxu0 %v404
  %1739 = vmatprep.subr.mxu0 %v401
  %1740 = vmatpush1.msra.mxu0 %v400
  %1741 = vmatprep.subr.mxu0 %v397
  %1742 = vmatpush1.msra.mxu0 %v396
  %1743 = vmatprep.subr.mxu0 %v393
  %1744 = vmatpush1.msra.mxu0 %v392
  %1745 = vmatprep.subr.mxu0 0.0
  %1746 = vmatpush2.msra.mxu0 0.0
  %1747 = vmatprep.subr.mxu0 0.0
  %1748 = vmatpush2.msra.mxu0 0.0
  %1749 = vmatprep.subr.mxu0 0.0
  %1750 = vmatpush2.msra.mxu0 0.0
  %1751 = vmatprep.subr.mxu0 0.0
  %1752 = vmatpush2.msra.mxu0 0.0
  %1753 = vmatprep.subr.mxu0 0.0
  %1754 = vmatpush2.msra.mxu0 0.0
  %1755 = vmatprep.subr.mxu0 0.0
  %1756 = vmatpush2.msra.mxu0 0.0
  %1757 = vmatprep.subr.mxu0 0.0
  %1758 = vmatpush2.msra.mxu0 0.0
  %1759 = vmatprep.subr.mxu0 0.0
  %1760 = vmatpush2.msra.mxu0 0.0
  %1761 = vmatprep.subr.mxu0 0.0
  %1762 = vmatpush2.msra.mxu0 0.0
  %1763 = vmatprep.subr.mxu0 0.0
  %1764 = vmatpush2.msra.mxu0 0.0
  %1765 = vmatprep.subr.mxu0 0.0
  %1766 = vmatpush2.msra.mxu0 0.0
  %1767 = vmatprep.subr.mxu0 0.0
  %1768 = vmatpush2.msra.mxu0 0.0
  %1769 = vmatprep.subr.mxu0 0.0
  %1770 = vmatpush2.msra.mxu0 0.0
  %1771 = vmatprep.subr.mxu0 0.0
  %1772 = vmatpush2.msra.mxu0 0.0
  %1773 = vmatprep.subr.mxu0 0.0
  %1774 = vmatpush2.msra.mxu0 0.0
  %1775 = vmatprep.subr.mxu0 0.0
  %1776 = vmatpush2.msra.mxu0 0.0
  %1777 = vmatprep.mubr.f32.mxu0 0.0
  %1778 = vmatmul.mubr.f32.gmra.mxu0 %v1468
  %v1779 = vpop.f32.mrf.mxu0
  %v1780 = vadd.f32 0.0, %v1779
  %v1781 = vpop.f32.mrf.mxu0
  %v1782 = vadd.f32 0.0, %v1781
  %1783 = vdwg.mxu0
  %v1784 = vadd.f32 %v1638, %v1709
  %v1785 = vadd.f32 %v1639, %v1711
  %v1786 = vadd.f32 %v1640, %v1780
  %v1787 = vadd.f32 %v1641, %v1782
  %v1788 = vxor.u32 %v1784, 2147483648
  %v1789 = vmul.f32 %v1788, 1.442695
  %v1790 = vpow.pop %v1789
  %v1791 = vadd.f32 %v1790, 1.0
  %v1792 = vrcp.pop %v1791
  %v1793 = vmul.f32 1.0, %v1792
  %v1794 = vxor.u32 %v1785, 2147483648
  %v1795 = vmul.f32 %v1794, 1.442695
  %v1796 = vpow.pop %v1795
  %v1797 = vadd.f32 %v1796, 1.0
  %v1798 = vrcp.pop %v1797
  %v1799 = vmul.f32 1.0, %v1798
  %v1800 = vtanh.pop %v1786
  %v1801 = vxor.u32 %v1787, 2147483648
  %v1802 = vmul.f32 %v1801, 1.442695
  %v1803 = vpow.pop %v1802
  %v1804 = vadd.f32 %v1803, 1.0
  %v1805 = vrcp.pop %v1804
  %v1806 = vmul.f32 1.0, %v1805
  %v1807 = vmul.f32 %v1799, %v1466
  %v1808 = vmul.f32 %v1793, %v1800
  %v1809 = vadd.f32 %v1807, %v1808
  %v1810 = vtanh.pop %v1809
  %v1811 = vmul.f32 %v1806, %v1810
  %1812 = vmatprep.subr.mxu0 %v515
  %1813 = vmatpush1.msra.mxu0 %v514
  %1814 = vmatprep.subr.mxu0 %v511
  %1815 = vmatpush1.msra.mxu0 %v510
  %1816 = vmatprep.subr.mxu0 %v507
  %1817 = vmatpush1.msra.mxu0 %v506
  %1818 = vmatprep.subr.mxu0 %v503
  %1819 = vmatpush1.msra.mxu0 %v502
  %1820 = vmatprep.subr.mxu0 %v499
  %1821 = vmatpush1.msra.mxu0 %v498
  %1822 = vmatprep.subr.mxu0 %v495
  %1823 = vmatpush1.msra.mxu0 %v494
  %1824 = vmatprep.subr.mxu0 %v491
  %1825 = vmatpush1.msra.mxu0 %v490
  %1826 = vmatprep.subr.mxu0 %v487
  %1827 = vmatpush1.msra.mxu0 %v486
  %1828 = vmatprep.subr.mxu0 %v483
  %1829 = vmatpush1.msra.mxu0 %v482
  %1830 = vmatprep.subr.mxu0 %v479
  %1831 = vmatpush1.msra.mxu0 %v478
  %1832 = vmatprep.subr.mxu0 %v475
  %1833 = vmatpush1.msra.mxu0 %v474
  %1834 = vmatprep.subr.mxu0 %v471
  %1835 = vmatpush1.msra.mxu0 %v470
  %1836 = vmatprep.subr.mxu0 %v467
  %1837 = vmatpush1.msra.mxu0 %v466
  %1838 = vmatprep.subr.mxu0 %v463
  %1839 = vmatpush1.msra.mxu0 %v462
  %1840 = vmatprep.subr.mxu0 %v459
  %1841 = vmatpush1.msra.mxu0 %v458
  %1842 = vmatprep.subr.mxu0 %v455
  %1843 = vmatpush1.msra.mxu0 %v454
  %1844 = vmatprep.subr.mxu0 %v579
  %1845 = vmatpush2.msra.mxu0 %v578
  %1846 = vmatprep.subr.mxu0 %v575
  %1847 = vmatpush2.msra.mxu0 %v574
  %1848 = vmatprep.subr.mxu0 %v571
  %1849 = vmatpush2.msra.mxu0 %v570
  %1850 = vmatprep.subr.mxu0 %v567
  %1851 = vmatpush2.msra.mxu0 %v566
  %1852 = vmatprep.subr.mxu0 %v563
  %1853 = vmatpush2.msra.mxu0 %v562
  %1854 = vmatprep.subr.mxu0 %v559
  %1855 = vmatpush2.msra.mxu0 %v558
  %1856 = vmatprep.subr.mxu0 %v555
  %1857 = vmatpush2.msra.mxu0 %v554
  %1858 = vmatprep.subr.mxu0 %v551
  %1859 = vmatpush2.msra.mxu0 %v550
  %1860 = vmatprep.subr.mxu0 %v547
  %1861 = vmatpush2.msra.mxu0 %v546
  %1862 = vmatprep.subr.mxu0 %v543
  %1863 = vmatpush2.msra.mxu0 %v542
  %1864 = vmatprep.subr.mxu0 %v539
  %1865 = vmatpush2.msra.mxu0 %v538
  %1866 = vmatprep.subr.mxu0 %v535
  %1867 = vmatpush2.msra.mxu0 %v534
  %1868 = vmatprep.subr.mxu0 %v531
  %1869 = vmatpush2.msra.mxu0 %v530
  %1870 = vmatprep.subr.mxu0 %v527
  %1871 = vmatpush2.msra.mxu0 %v526
  %1872 = vmatprep.subr.mxu0 %v523
  %1873 = vmatpush2.msra.mxu0 %v522
  %1874 = vmatprep.subr.mxu0 %v519
  %1875 = vmatpush2.msra.mxu0 %v518
  %1876 = vmatprep.mubr.f32.mxu0 %v1634
  %1877 = vmatmul.mubr.f32.gmra.mxu0 %v1811
  %v1878 = vpop.f32.mrf.mxu0
  %v1879 = vadd.f32 %v767, %v1878
  %v1880 = vpop.f32.mrf.mxu0
  %v1881 = vadd.f32 %v771, %v1880
  %1882 = vdwg.mxu0
  %1883 = vmatprep.subr.mxu0 %v517
  %1884 = vmatpush1.msra.mxu0 %v516
  %1885 = vmatprep.subr.mxu0 %v513
  %1886 = vmatpush1.msra.mxu0 %v512
  %1887 = vmatprep.subr.mxu0 %v509
  %1888 = vmatpush1.msra.mxu0 %v508
  %1889 = vmatprep.subr.mxu0 %v505
  %1890 = vmatpush1.msra.mxu0 %v504
  %1891 = vmatprep.subr.mxu0 %v501
  %1892 = vmatpush1.msra.mxu0 %v500
  %1893 = vmatprep.subr.mxu0 %v497
  %1894 = vmatpush1.msra.mxu0 %v496
  %1895 = vmatprep.subr.mxu0 %v493
  %1896 = vmatpush1.msra.mxu0 %v492
  %1897 = vmatprep.subr.mxu0 %v489
  %1898 = vmatpush1.msra.mxu0 %v488
  %1899 = vmatprep.subr.mxu0 %v485
  %1900 = vmatpush1.msra.mxu0 %v484
  %1901 = vmatprep.subr.mxu0 %v481
  %1902 = vmatpush1.msra.mxu0 %v480
  %1903 = vmatprep.subr.mxu0 %v477
  %1904 = vmatpush1.msra.mxu0 %v476
  %1905 = vmatprep.subr.mxu0 %v473
  %1906 = vmatpush1.msra.mxu0 %v472
  %1907 = vmatprep.subr.mxu0 %v469
  %1908 = vmatpush1.msra.mxu0 %v468
  %1909 = vmatprep.subr.mxu0 %v465
  %1910 = vmatpush1.msra.mxu0 %v464
  %1911 = vmatprep.subr.mxu0 %v461
  %1912 = vmatpush1.msra.mxu0 %v460
  %1913 = vmatprep.subr.mxu0 %v457
  %1914 = vmatpush1.msra.mxu0 %v456
  %1915 = vmatprep.subr.mxu0 %v581
  %1916 = vmatpush2.msra.mxu0 %v580
  %1917 = vmatprep.subr.mxu0 %v577
  %1918 = vmatpush2.msra.mxu0 %v576
  %1919 = vmatprep.subr.mxu0 %v573
  %1920 = vmatpush2.msra.mxu0 %v572
  %1921 = vmatprep.subr.mxu0 %v569
  %1922 = vmatpush2.msra.mxu0 %v568
  %1923 = vmatprep.subr.mxu0 %v565
  %1924 = vmatpush2.msra.mxu0 %v564
  %1925 = vmatprep.subr.mxu0 %v561
  %1926 = vmatpush2.msra.mxu0 %v560
  %1927 = vmatprep.subr.mxu0 %v557
  %1928 = vmatpush2.msra.mxu0 %v556
  %1929 = vmatprep.subr.mxu0 %v553
  %1930 = vmatpush2.msra.mxu0 %v552
  %1931 = vmatprep.subr.mxu0 %v549
  %1932 = vmatpush2.msra.mxu0 %v548
  %1933 = vmatprep.subr.mxu0 %v545
  %1934 = vmatpush2.msra.mxu0 %v544
  %1935 = vmatprep.subr.mxu0 %v541
  %1936 = vmatpush2.msra.mxu0 %v540
  %1937 = vmatprep.subr.mxu0 %v537
  %1938 = vmatpush2.msra.mxu0 %v536
  %1939 = vmatprep.subr.mxu0 %v533
  %1940 = vmatpush2.msra.mxu0 %v532
  %1941 = vmatprep.subr.mxu0 %v529
  %1942 = vmatpush2.msra.mxu0 %v528
  %1943 = vmatprep.subr.mxu0 %v525
  %1944 = vmatpush2.msra.mxu0 %v524
  %1945 = vmatprep.subr.mxu0 %v521
  %1946 = vmatpush2.msra.mxu0 %v520
  %1947 = vmatprep.mubr.f32.mxu0 %v1634
  %1948 = vmatmul.mubr.f32.gmra.mxu0 %v1811
  %v1949 = vpop.f32.mrf.mxu0
  %v1950 = vadd.f32 %v775, %v1949
  %v1951 = vpop.f32.mrf.mxu0
  %v1952 = vadd.f32 %v779, %v1951
  %1953 = vdwg.mxu0
  %v1954 = vxor.u32 %v1879, 2147483648
  %v1955 = vmul.f32 %v1954, 1.442695
  %v1956 = vpow.pop %v1955
  %v1957 = vadd.f32 %v1956, 1.0
  %v1958 = vrcp.pop %v1957
  %v1959 = vmul.f32 1.0, %v1958
  %v1960 = vxor.u32 %v1881, 2147483648
  %v1961 = vmul.f32 %v1960, 1.442695
  %v1962 = vpow.pop %v1961
  %v1963 = vadd.f32 %v1962, 1.0
  %v1964 = vrcp.pop %v1963
  %v1965 = vmul.f32 1.0, %v1964
  %v1966 = vtanh.pop %v1950
  %v1967 = vxor.u32 %v1952, 2147483648
  %v1968 = vmul.f32 %v1967, 1.442695
  %v1969 = vpow.pop %v1968
  %v1970 = vadd.f32 %v1969, 1.0
  %v1971 = vrcp.pop %v1970
  %v1972 = vmul.f32 1.0, %v1971
  %v1973 = vmul.f32 %v1965, %v1632
  %v1974 = vmul.f32 %v1959, %v1966
  %v1975 = vadd.f32 %v1973, %v1974
  %v1976 = vtanh.pop %v1975
  %v1977 = vmul.f32 %v1972, %v1976
  %s1978 = scalar_lea.vmem [#allocation3], 24
  %1979 = vst [vmem:[%s1978] sm:$0xff] %v1977
  %s1980 = scalar_lea.vmem [#allocation2], 128
  %v1981 = vld [vmem:[%s1980] sm:$0xff]
  %v1982 = vld [vmem:[%s1980 + $0x8] sm:$0xff]
  %v1983 = vld [vmem:[%s1980 + $0x10] sm:$0xff]
  %v1984 = vld [vmem:[%s1980 + $0x18] sm:$0xff]
  %1985 = vmatprep.subr.mxu0 %v451
  %1986 = vmatpush1.msra.mxu0 %v450
  %1987 = vmatprep.subr.mxu0 %v447
  %1988 = vmatpush1.msra.mxu0 %v446
  %1989 = vmatprep.subr.mxu0 %v443
  %1990 = vmatpush1.msra.mxu0 %v442
  %1991 = vmatprep.subr.mxu0 %v439
  %1992 = vmatpush1.msra.mxu0 %v438
  %1993 = vmatprep.subr.mxu0 %v435
  %1994 = vmatpush1.msra.mxu0 %v434
  %1995 = vmatprep.subr.mxu0 %v431
  %1996 = vmatpush1.msra.mxu0 %v430
  %1997 = vmatprep.subr.mxu0 %v427
  %1998 = vmatpush1.msra.mxu0 %v426
  %1999 = vmatprep.subr.mxu0 %v423
  %2000 = vmatpush1.msra.mxu0 %v422
  %2001 = vmatprep.subr.mxu0 %v419
  %2002 = vmatpush1.msra.mxu0 %v418
  %2003 = vmatprep.subr.mxu0 %v415
  %2004 = vmatpush1.msra.mxu0 %v414
  %2005 = vmatprep.subr.mxu0 %v411
  %2006 = vmatpush1.msra.mxu0 %v410
  %2007 = vmatprep.subr.mxu0 %v407
  %2008 = vmatpush1.msra.mxu0 %v406
  %2009 = vmatprep.subr.mxu0 %v403
  %2010 = vmatpush1.msra.mxu0 %v402
  %2011 = vmatprep.subr.mxu0 %v399
  %2012 = vmatpush1.msra.mxu0 %v398
  %2013 = vmatprep.subr.mxu0 %v395
  %2014 = vmatpush1.msra.mxu0 %v394
  %2015 = vmatprep.subr.mxu0 %v391
  %2016 = vmatpush1.msra.mxu0 %v390
  %2017 = vmatprep.subr.mxu0 0.0
  %2018 = vmatpush2.msra.mxu0 0.0
  %2019 = vmatprep.subr.mxu0 0.0
  %2020 = vmatpush2.msra.mxu0 0.0
  %2021 = vmatprep.subr.mxu0 0.0
  %2022 = vmatpush2.msra.mxu0 0.0
  %2023 = vmatprep.subr.mxu0 0.0
  %2024 = vmatpush2.msra.mxu0 0.0
  %2025 = vmatprep.subr.mxu0 0.0
  %2026 = vmatpush2.msra.mxu0 0.0
  %2027 = vmatprep.subr.mxu0 0.0
  %2028 = vmatpush2.msra.mxu0 0.0
  %2029 = vmatprep.subr.mxu0 0.0
  %2030 = vmatpush2.msra.mxu0 0.0
  %2031 = vmatprep.subr.mxu0 0.0
  %2032 = vmatpush2.msra.mxu0 0.0
  %2033 = vmatprep.subr.mxu0 0.0
  %2034 = vmatpush2.msra.mxu0 0.0
  %2035 = vmatprep.subr.mxu0 0.0
  %2036 = vmatpush2.msra.mxu0 0.0
  %2037 = vmatprep.subr.mxu0 0.0
  %2038 = vmatpush2.msra.mxu0 0.0
  %2039 = vmatprep.subr.mxu0 0.0
  %2040 = vmatpush2.msra.mxu0 0.0
  %2041 = vmatprep.subr.mxu0 0.0
  %2042 = vmatpush2.msra.mxu0 0.0
  %2043 = vmatprep.subr.mxu0 0.0
  %2044 = vmatpush2.msra.mxu0 0.0
  %2045 = vmatprep.subr.mxu0 0.0
  %2046 = vmatpush2.msra.mxu0 0.0
  %2047 = vmatprep.subr.mxu0 0.0
  %2048 = vmatpush2.msra.mxu0 0.0
  %2049 = vmatprep.mubr.f32.mxu0 0.0
  %2050 = vmatmul.mubr.f32.gmra.mxu0 %v1811
  %v2051 = vpop.f32.mrf.mxu0
  %v2052 = vadd.f32 0.0, %v2051
  %v2053 = vpop.f32.mrf.mxu0
  %v2054 = vadd.f32 0.0, %v2053
  %2055 = vdwg.mxu0
  %2056 = vmatprep.subr.mxu0 %v453
  %2057 = vmatpush1.msra.mxu0 %v452
  %2058 = vmatprep.subr.mxu0 %v449
  %2059 = vmatpush1.msra.mxu0 %v448
  %2060 = vmatprep.subr.mxu0 %v445
  %2061 = vmatpush1.msra.mxu0 %v444
  %2062 = vmatprep.subr.mxu0 %v441
  %2063 = vmatpush1.msra.mxu0 %v440
  %2064 = vmatprep.subr.mxu0 %v437
  %2065 = vmatpush1.msra.mxu0 %v436
  %2066 = vmatprep.subr.mxu0 %v433
  %2067 = vmatpush1.msra.mxu0 %v432
  %2068 = vmatprep.subr.mxu0 %v429
  %2069 = vmatpush1.msra.mxu0 %v428
  %2070 = vmatprep.subr.mxu0 %v425
  %2071 = vmatpush1.msra.mxu0 %v424
  %2072 = vmatprep.subr.mxu0 %v421
  %2073 = vmatpush1.msra.mxu0 %v420
  %2074 = vmatprep.subr.mxu0 %v417
  %2075 = vmatpush1.msra.mxu0 %v416
  %2076 = vmatprep.subr.mxu0 %v413
  %2077 = vmatpush1.msra.mxu0 %v412
  %2078 = vmatprep.subr.mxu0 %v409
  %2079 = vmatpush1.msra.mxu0 %v408
  %2080 = vmatprep.subr.mxu0 %v405
  %2081 = vmatpush1.msra.mxu0 %v404
  %2082 = vmatprep.subr.mxu0 %v401
  %2083 = vmatpush1.msra.mxu0 %v400
  %2084 = vmatprep.subr.mxu0 %v397
  %2085 = vmatpush1.msra.mxu0 %v396
  %2086 = vmatprep.subr.mxu0 %v393
  %2087 = vmatpush1.msra.mxu0 %v392
  %2088 = vmatprep.subr.mxu0 0.0
  %2089 = vmatpush2.msra.mxu0 0.0
  %2090 = vmatprep.subr.mxu0 0.0
  %2091 = vmatpush2.msra.mxu0 0.0
  %2092 = vmatprep.subr.mxu0 0.0
  %2093 = vmatpush2.msra.mxu0 0.0
  %2094 = vmatprep.subr.mxu0 0.0
  %2095 = vmatpush2.msra.mxu0 0.0
  %2096 = vmatprep.subr.mxu0 0.0
  %2097 = vmatpush2.msra.mxu0 0.0
  %2098 = vmatprep.subr.mxu0 0.0
  %2099 = vmatpush2.msra.mxu0 0.0
  %2100 = vmatprep.subr.mxu0 0.0
  %2101 = vmatpush2.msra.mxu0 0.0
  %2102 = vmatprep.subr.mxu0 0.0
  %2103 = vmatpush2.msra.mxu0 0.0
  %2104 = vmatprep.subr.mxu0 0.0
  %2105 = vmatpush2.msra.mxu0 0.0
  %2106 = vmatprep.subr.mxu0 0.0
  %2107 = vmatpush2.msra.mxu0 0.0
  %2108 = vmatprep.subr.mxu0 0.0
  %2109 = vmatpush2.msra.mxu0 0.0
  %2110 = vmatprep.subr.mxu0 0.0
  %2111 = vmatpush2.msra.mxu0 0.0
  %2112 = vmatprep.subr.mxu0 0.0
  %2113 = vmatpush2.msra.mxu0 0.0
  %2114 = vmatprep.subr.mxu0 0.0
  %2115 = vmatpush2.msra.mxu0 0.0
  %2116 = vmatprep.subr.mxu0 0.0
  %2117 = vmatpush2.msra.mxu0 0.0
  %2118 = vmatprep.subr.mxu0 0.0
  %2119 = vmatpush2.msra.mxu0 0.0
  %2120 = vmatprep.mubr.f32.mxu0 0.0
  %2121 = vmatmul.mubr.f32.gmra.mxu0 %v1811
  %v2122 = vpop.f32.mrf.mxu0
  %v2123 = vadd.f32 0.0, %v2122
  %v2124 = vpop.f32.mrf.mxu0
  %v2125 = vadd.f32 0.0, %v2124
  %2126 = vdwg.mxu0
  %v2127 = vadd.f32 %v1981, %v2052
  %v2128 = vadd.f32 %v1982, %v2054
  %v2129 = vadd.f32 %v1983, %v2123
  %v2130 = vadd.f32 %v1984, %v2125
  %v2131 = vxor.u32 %v2127, 2147483648
  %v2132 = vmul.f32 %v2131, 1.442695
  %v2133 = vpow.pop %v2132
  %v2134 = vadd.f32 %v2133, 1.0
  %v2135 = vrcp.pop %v2134
  %v2136 = vmul.f32 1.0, %v2135
  %v2137 = vxor.u32 %v2128, 2147483648
  %v2138 = vmul.f32 %v2137, 1.442695
  %v2139 = vpow.pop %v2138
  %v2140 = vadd.f32 %v2139, 1.0
  %v2141 = vrcp.pop %v2140
  %v2142 = vmul.f32 1.0, %v2141
  %v2143 = vtanh.pop %v2129
  %v2144 = vxor.u32 %v2130, 2147483648
  %v2145 = vmul.f32 %v2144, 1.442695
  %v2146 = vpow.pop %v2145
  %v2147 = vadd.f32 %v2146, 1.0
  %v2148 = vrcp.pop %v2147
  %v2149 = vmul.f32 1.0, %v2148
  %v2150 = vmul.f32 %v2142, %v1809
  %v2151 = vmul.f32 %v2136, %v2143
  %v2152 = vadd.f32 %v2150, %v2151
  %v2153 = vtanh.pop %v2152
  %v2154 = vmul.f32 %v2149, %v2153
  %2155 = vmatprep.subr.mxu0 %v515
  %2156 = vmatpush1.msra.mxu0 %v514
  %2157 = vmatprep.subr.mxu0 %v511
  %2158 = vmatpush1.msra.mxu0 %v510
  %2159 = vmatprep.subr.mxu0 %v507
  %2160 = vmatpush1.msra.mxu0 %v506
  %2161 = vmatprep.subr.mxu0 %v503
  %2162 = vmatpush1.msra.mxu0 %v502
  %2163 = vmatprep.subr.mxu0 %v499
  %2164 = vmatpush1.msra.mxu0 %v498
  %2165 = vmatprep.subr.mxu0 %v495
  %2166 = vmatpush1.msra.mxu0 %v494
  %2167 = vmatprep.subr.mxu0 %v491
  %2168 = vmatpush1.msra.mxu0 %v490
  %2169 = vmatprep.subr.mxu0 %v487
  %2170 = vmatpush1.msra.mxu0 %v486
  %2171 = vmatprep.subr.mxu0 %v483
  %2172 = vmatpush1.msra.mxu0 %v482
  %2173 = vmatprep.subr.mxu0 %v479
  %2174 = vmatpush1.msra.mxu0 %v478
  %2175 = vmatprep.subr.mxu0 %v475
  %2176 = vmatpush1.msra.mxu0 %v474
  %2177 = vmatprep.subr.mxu0 %v471
  %2178 = vmatpush1.msra.mxu0 %v470
  %2179 = vmatprep.subr.mxu0 %v467
  %2180 = vmatpush1.msra.mxu0 %v466
  %2181 = vmatprep.subr.mxu0 %v463
  %2182 = vmatpush1.msra.mxu0 %v462
  %2183 = vmatprep.subr.mxu0 %v459
  %2184 = vmatpush1.msra.mxu0 %v458
  %2185 = vmatprep.subr.mxu0 %v455
  %2186 = vmatpush1.msra.mxu0 %v454
  %2187 = vmatprep.subr.mxu0 %v579
  %2188 = vmatpush2.msra.mxu0 %v578
  %2189 = vmatprep.subr.mxu0 %v575
  %2190 = vmatpush2.msra.mxu0 %v574
  %2191 = vmatprep.subr.mxu0 %v571
  %2192 = vmatpush2.msra.mxu0 %v570
  %2193 = vmatprep.subr.mxu0 %v567
  %2194 = vmatpush2.msra.mxu0 %v566
  %2195 = vmatprep.subr.mxu0 %v563
  %2196 = vmatpush2.msra.mxu0 %v562
  %2197 = vmatprep.subr.mxu0 %v559
  %2198 = vmatpush2.msra.mxu0 %v558
  %2199 = vmatprep.subr.mxu0 %v555
  %2200 = vmatpush2.msra.mxu0 %v554
  %2201 = vmatprep.subr.mxu0 %v551
  %2202 = vmatpush2.msra.mxu0 %v550
  %2203 = vmatprep.subr.mxu0 %v547
  %2204 = vmatpush2.msra.mxu0 %v546
  %2205 = vmatprep.subr.mxu0 %v543
  %2206 = vmatpush2.msra.mxu0 %v542
  %2207 = vmatprep.subr.mxu0 %v539
  %2208 = vmatpush2.msra.mxu0 %v538
  %2209 = vmatprep.subr.mxu0 %v535
  %2210 = vmatpush2.msra.mxu0 %v534
  %2211 = vmatprep.subr.mxu0 %v531
  %2212 = vmatpush2.msra.mxu0 %v530
  %2213 = vmatprep.subr.mxu0 %v527
  %2214 = vmatpush2.msra.mxu0 %v526
  %2215 = vmatprep.subr.mxu0 %v523
  %2216 = vmatpush2.msra.mxu0 %v522
  %2217 = vmatprep.subr.mxu0 %v519
  %2218 = vmatpush2.msra.mxu0 %v518
  %2219 = vmatprep.mubr.f32.mxu0 %v1977
  %2220 = vmatmul.mubr.f32.gmra.mxu0 %v2154
  %v2221 = vpop.f32.mrf.mxu0
  %v2222 = vadd.f32 %v767, %v2221
  %v2223 = vpop.f32.mrf.mxu0
  %v2224 = vadd.f32 %v771, %v2223
  %2225 = vdwg.mxu0
  %2226 = vmatprep.subr.mxu0 %v517
  %2227 = vmatpush1.msra.mxu0 %v516
  %2228 = vmatprep.subr.mxu0 %v513
  %2229 = vmatpush1.msra.mxu0 %v512
  %2230 = vmatprep.subr.mxu0 %v509
  %2231 = vmatpush1.msra.mxu0 %v508
  %2232 = vmatprep.subr.mxu0 %v505
  %2233 = vmatpush1.msra.mxu0 %v504
  %2234 = vmatprep.subr.mxu0 %v501
  %2235 = vmatpush1.msra.mxu0 %v500
  %2236 = vmatprep.subr.mxu0 %v497
  %2237 = vmatpush1.msra.mxu0 %v496
  %2238 = vmatprep.subr.mxu0 %v493
  %2239 = vmatpush1.msra.mxu0 %v492
  %2240 = vmatprep.subr.mxu0 %v489
  %2241 = vmatpush1.msra.mxu0 %v488
  %2242 = vmatprep.subr.mxu0 %v485
  %2243 = vmatpush1.msra.mxu0 %v484
  %2244 = vmatprep.subr.mxu0 %v481
  %2245 = vmatpush1.msra.mxu0 %v480
  %2246 = vmatprep.subr.mxu0 %v477
  %2247 = vmatpush1.msra.mxu0 %v476
  %2248 = vmatprep.subr.mxu0 %v473
  %2249 = vmatpush1.msra.mxu0 %v472
  %2250 = vmatprep.subr.mxu0 %v469
  %2251 = vmatpush1.msra.mxu0 %v468
  %2252 = vmatprep.subr.mxu0 %v465
  %2253 = vmatpush1.msra.mxu0 %v464
  %2254 = vmatprep.subr.mxu0 %v461
  %2255 = vmatpush1.msra.mxu0 %v460
  %2256 = vmatprep.subr.mxu0 %v457
  %2257 = vmatpush1.msra.mxu0 %v456
  %2258 = vmatprep.subr.mxu0 %v581
  %2259 = vmatpush2.msra.mxu0 %v580
  %2260 = vmatprep.subr.mxu0 %v577
  %2261 = vmatpush2.msra.mxu0 %v576
  %2262 = vmatprep.subr.mxu0 %v573
  %2263 = vmatpush2.msra.mxu0 %v572
  %2264 = vmatprep.subr.mxu0 %v569
  %2265 = vmatpush2.msra.mxu0 %v568
  %2266 = vmatprep.subr.mxu0 %v565
  %2267 = vmatpush2.msra.mxu0 %v564
  %2268 = vmatprep.subr.mxu0 %v561
  %2269 = vmatpush2.msra.mxu0 %v560
  %2270 = vmatprep.subr.mxu0 %v557
  %2271 = vmatpush2.msra.mxu0 %v556
  %2272 = vmatprep.subr.mxu0 %v553
  %2273 = vmatpush2.msra.mxu0 %v552
  %2274 = vmatprep.subr.mxu0 %v549
  %2275 = vmatpush2.msra.mxu0 %v548
  %2276 = vmatprep.subr.mxu0 %v545
  %2277 = vmatpush2.msra.mxu0 %v544
  %2278 = vmatprep.subr.mxu0 %v541
  %2279 = vmatpush2.msra.mxu0 %v540
  %2280 = vmatprep.subr.mxu0 %v537
  %2281 = vmatpush2.msra.mxu0 %v536
  %2282 = vmatprep.subr.mxu0 %v533
  %2283 = vmatpush2.msra.mxu0 %v532
  %2284 = vmatprep.subr.mxu0 %v529
  %2285 = vmatpush2.msra.mxu0 %v528
  %2286 = vmatprep.subr.mxu0 %v525
  %2287 = vmatpush2.msra.mxu0 %v524
  %2288 = vmatprep.subr.mxu0 %v521
  %2289 = vmatpush2.msra.mxu0 %v520
  %2290 = vmatprep.mubr.f32.mxu0 %v1977
  %2291 = vmatmul.mubr.f32.gmra.mxu0 %v2154
  %v2292 = vpop.f32.mrf.mxu0
  %v2293 = vadd.f32 %v775, %v2292
  %v2294 = vpop.f32.mrf.mxu0
  %v2295 = vadd.f32 %v779, %v2294
  %2296 = vdwg.mxu0
  %v2297 = vxor.u32 %v2222, 2147483648
  %v2298 = vmul.f32 %v2297, 1.442695
  %v2299 = vpow.pop %v2298
  %v2300 = vadd.f32 %v2299, 1.0
  %v2301 = vrcp.pop %v2300
  %v2302 = vmul.f32 1.0, %v2301
  %v2303 = vxor.u32 %v2224, 2147483648
  %v2304 = vmul.f32 %v2303, 1.442695
  %v2305 = vpow.pop %v2304
  %v2306 = vadd.f32 %v2305, 1.0
  %v2307 = vrcp.pop %v2306
  %v2308 = vmul.f32 1.0, %v2307
  %v2309 = vtanh.pop %v2293
  %v2310 = vxor.u32 %v2295, 2147483648
  %v2311 = vmul.f32 %v2310, 1.442695
  %v2312 = vpow.pop %v2311
  %v2313 = vadd.f32 %v2312, 1.0
  %v2314 = vrcp.pop %v2313
  %v2315 = vmul.f32 1.0, %v2314
  %v2316 = vmul.f32 %v2308, %v1975
  %v2317 = vmul.f32 %v2302, %v2309
  %v2318 = vadd.f32 %v2316, %v2317
  %v2319 = vtanh.pop %v2318
  %v2320 = vmul.f32 %v2315, %v2319
  %s2321 = scalar_lea.vmem [#allocation3], 32
  %2322 = vst [vmem:[%s2321] sm:$0xff] %v2320
  %s2323 = scalar_lea.vmem [#allocation2], 160
  %v2324 = vld [vmem:[%s2323] sm:$0xff]
  %v2325 = vld [vmem:[%s2323 + $0x8] sm:$0xff]
  %v2326 = vld [vmem:[%s2323 + $0x10] sm:$0xff]
  %v2327 = vld [vmem:[%s2323 + $0x18] sm:$0xff]
  %2328 = vmatprep.subr.mxu0 %v451
  %2329 = vmatpush1.msra.mxu0 %v450
  %2330 = vmatprep.subr.mxu0 %v447
  %2331 = vmatpush1.msra.mxu0 %v446
  %2332 = vmatprep.subr.mxu0 %v443
  %2333 = vmatpush1.msra.mxu0 %v442
  %2334 = vmatprep.subr.mxu0 %v439
  %2335 = vmatpush1.msra.mxu0 %v438
  %2336 = vmatprep.subr.mxu0 %v435
  %2337 = vmatpush1.msra.mxu0 %v434
  %2338 = vmatprep.subr.mxu0 %v431
  %2339 = vmatpush1.msra.mxu0 %v430
  %2340 = vmatprep.subr.mxu0 %v427
  %2341 = vmatpush1.msra.mxu0 %v426
  %2342 = vmatprep.subr.mxu0 %v423
  %2343 = vmatpush1.msra.mxu0 %v422
  %2344 = vmatprep.subr.mxu0 %v419
  %2345 = vmatpush1.msra.mxu0 %v418
  %2346 = vmatprep.subr.mxu0 %v415
  %2347 = vmatpush1.msra.mxu0 %v414
  %2348 = vmatprep.subr.mxu0 %v411
  %2349 = vmatpush1.msra.mxu0 %v410
  %2350 = vmatprep.subr.mxu0 %v407
  %2351 = vmatpush1.msra.mxu0 %v406
  %2352 = vmatprep.subr.mxu0 %v403
  %2353 = vmatpush1.msra.mxu0 %v402
  %2354 = vmatprep.subr.mxu0 %v399
  %2355 = vmatpush1.msra.mxu0 %v398
  %2356 = vmatprep.subr.mxu0 %v395
  %2357 = vmatpush1.msra.mxu0 %v394
  %2358 = vmatprep.subr.mxu0 %v391
  %2359 = vmatpush1.msra.mxu0 %v390
  %2360 = vmatprep.subr.mxu0 0.0
  %2361 = vmatpush2.msra.mxu0 0.0
  %2362 = vmatprep.subr.mxu0 0.0
  %2363 = vmatpush2.msra.mxu0 0.0
  %2364 = vmatprep.subr.mxu0 0.0
  %2365 = vmatpush2.msra.mxu0 0.0
  %2366 = vmatprep.subr.mxu0 0.0
  %2367 = vmatpush2.msra.mxu0 0.0
  %2368 = vmatprep.subr.mxu0 0.0
  %2369 = vmatpush2.msra.mxu0 0.0
  %2370 = vmatprep.subr.mxu0 0.0
  %2371 = vmatpush2.msra.mxu0 0.0
  %2372 = vmatprep.subr.mxu0 0.0
  %2373 = vmatpush2.msra.mxu0 0.0
  %2374 = vmatprep.subr.mxu0 0.0
  %2375 = vmatpush2.msra.mxu0 0.0
  %2376 = vmatprep.subr.mxu0 0.0
  %2377 = vmatpush2.msra.mxu0 0.0
  %2378 = vmatprep.subr.mxu0 0.0
  %2379 = vmatpush2.msra.mxu0 0.0
  %2380 = vmatprep.subr.mxu0 0.0
  %2381 = vmatpush2.msra.mxu0 0.0
  %2382 = vmatprep.subr.mxu0 0.0
  %2383 = vmatpush2.msra.mxu0 0.0
  %2384 = vmatprep.subr.mxu0 0.0
  %2385 = vmatpush2.msra.mxu0 0.0
  %2386 = vmatprep.subr.mxu0 0.0
  %2387 = vmatpush2.msra.mxu0 0.0
  %2388 = vmatprep.subr.mxu0 0.0
  %2389 = vmatpush2.msra.mxu0 0.0
  %2390 = vmatprep.subr.mxu0 0.0
  %2391 = vmatpush2.msra.mxu0 0.0
  %2392 = vmatprep.mubr.f32.mxu0 0.0
  %2393 = vmatmul.mubr.f32.gmra.mxu0 %v2154
  %v2394 = vpop.f32.mrf.mxu0
  %v2395 = vadd.f32 0.0, %v2394
  %v2396 = vpop.f32.mrf.mxu0
  %v2397 = vadd.f32 0.0, %v2396
  %2398 = vdwg.mxu0
  %2399 = vmatprep.subr.mxu0 %v453
  %2400 = vmatpush1.msra.mxu0 %v452
  %2401 = vmatprep.subr.mxu0 %v449
  %2402 = vmatpush1.msra.mxu0 %v448
  %2403 = vmatprep.subr.mxu0 %v445
  %2404 = vmatpush1.msra.mxu0 %v444
  %2405 = vmatprep.subr.mxu0 %v441
  %2406 = vmatpush1.msra.mxu0 %v440
  %2407 = vmatprep.subr.mxu0 %v437
  %2408 = vmatpush1.msra.mxu0 %v436
  %2409 = vmatprep.subr.mxu0 %v433
  %2410 = vmatpush1.msra.mxu0 %v432
  %2411 = vmatprep.subr.mxu0 %v429
  %2412 = vmatpush1.msra.mxu0 %v428
  %2413 = vmatprep.subr.mxu0 %v425
  %2414 = vmatpush1.msra.mxu0 %v424
  %2415 = vmatprep.subr.mxu0 %v421
  %2416 = vmatpush1.msra.mxu0 %v420
  %2417 = vmatprep.subr.mxu0 %v417
  %2418 = vmatpush1.msra.mxu0 %v416
  %2419 = vmatprep.subr.mxu0 %v413
  %2420 = vmatpush1.msra.mxu0 %v412
  %2421 = vmatprep.subr.mxu0 %v409
  %2422 = vmatpush1.msra.mxu0 %v408
  %2423 = vmatprep.subr.mxu0 %v405
  %2424 = vmatpush1.msra.mxu0 %v404
  %2425 = vmatprep.subr.mxu0 %v401
  %2426 = vmatpush1.msra.mxu0 %v400
  %2427 = vmatprep.subr.mxu0 %v397
  %2428 = vmatpush1.msra.mxu0 %v396
  %2429 = vmatprep.subr.mxu0 %v393
  %2430 = vmatpush1.msra.mxu0 %v392
  %2431 = vmatprep.subr.mxu0 0.0
  %2432 = vmatpush2.msra.mxu0 0.0
  %2433 = vmatprep.subr.mxu0 0.0
  %2434 = vmatpush2.msra.mxu0 0.0
  %2435 = vmatprep.subr.mxu0 0.0
  %2436 = vmatpush2.msra.mxu0 0.0
  %2437 = vmatprep.subr.mxu0 0.0
  %2438 = vmatpush2.msra.mxu0 0.0
  %2439 = vmatprep.subr.mxu0 0.0
  %2440 = vmatpush2.msra.mxu0 0.0
  %2441 = vmatprep.subr.mxu0 0.0
  %2442 = vmatpush2.msra.mxu0 0.0
  %2443 = vmatprep.subr.mxu0 0.0
  %2444 = vmatpush2.msra.mxu0 0.0
  %2445 = vmatprep.subr.mxu0 0.0
  %2446 = vmatpush2.msra.mxu0 0.0
  %2447 = vmatprep.subr.mxu0 0.0
  %2448 = vmatpush2.msra.mxu0 0.0
  %2449 = vmatprep.subr.mxu0 0.0
  %2450 = vmatpush2.msra.mxu0 0.0
  %2451 = vmatprep.subr.mxu0 0.0
  %2452 = vmatpush2.msra.mxu0 0.0
  %2453 = vmatprep.subr.mxu0 0.0
  %2454 = vmatpush2.msra.mxu0 0.0
  %2455 = vmatprep.subr.mxu0 0.0
  %2456 = vmatpush2.msra.mxu0 0.0
  %2457 = vmatprep.subr.mxu0 0.0
  %2458 = vmatpush2.msra.mxu0 0.0
  %2459 = vmatprep.subr.mxu0 0.0
  %2460 = vmatpush2.msra.mxu0 0.0
  %2461 = vmatprep.subr.mxu0 0.0
  %2462 = vmatpush2.msra.mxu0 0.0
  %2463 = vmatprep.mubr.f32.mxu0 0.0
  %2464 = vmatmul.mubr.f32.gmra.mxu0 %v2154
  %v2465 = vpop.f32.mrf.mxu0
  %v2466 = vadd.f32 0.0, %v2465
  %v2467 = vpop.f32.mrf.mxu0
  %v2468 = vadd.f32 0.0, %v2467
  %2469 = vdwg.mxu0
  %v2470 = vadd.f32 %v2324, %v2395
  %v2471 = vadd.f32 %v2325, %v2397
  %v2472 = vadd.f32 %v2326, %v2466
  %v2473 = vadd.f32 %v2327, %v2468
  %v2474 = vxor.u32 %v2470, 2147483648
  %v2475 = vmul.f32 %v2474, 1.442695
  %v2476 = vpow.pop %v2475
  %v2477 = vadd.f32 %v2476, 1.0
  %v2478 = vrcp.pop %v2477
  %v2479 = vmul.f32 1.0, %v2478
  %v2480 = vxor.u32 %v2471, 2147483648
  %v2481 = vmul.f32 %v2480, 1.442695
  %v2482 = vpow.pop %v2481
  %v2483 = vadd.f32 %v2482, 1.0
  %v2484 = vrcp.pop %v2483
  %v2485 = vmul.f32 1.0, %v2484
  %v2486 = vtanh.pop %v2472
  %v2487 = vxor.u32 %v2473, 2147483648
  %v2488 = vmul.f32 %v2487, 1.442695
  %v2489 = vpow.pop %v2488
  %v2490 = vadd.f32 %v2489, 1.0
  %v2491 = vrcp.pop %v2490
  %v2492 = vmul.f32 1.0, %v2491
  %v2493 = vmul.f32 %v2485, %v2152
  %v2494 = vmul.f32 %v2479, %v2486
  %v2495 = vadd.f32 %v2493, %v2494
  %v2496 = vtanh.pop %v2495
  %v2497 = vmul.f32 %v2492, %v2496
  %2498 = vmatprep.subr.mxu0 %v515
  %2499 = vmatpush1.msra.mxu0 %v514
  %2500 = vmatprep.subr.mxu0 %v511
  %2501 = vmatpush1.msra.mxu0 %v510
  %2502 = vmatprep.subr.mxu0 %v507
  %2503 = vmatpush1.msra.mxu0 %v506
  %2504 = vmatprep.subr.mxu0 %v503
  %2505 = vmatpush1.msra.mxu0 %v502
  %2506 = vmatprep.subr.mxu0 %v499
  %2507 = vmatpush1.msra.mxu0 %v498
  %2508 = vmatprep.subr.mxu0 %v495
  %2509 = vmatpush1.msra.mxu0 %v494
  %2510 = vmatprep.subr.mxu0 %v491
  %2511 = vmatpush1.msra.mxu0 %v490
  %2512 = vmatprep.subr.mxu0 %v487
  %2513 = vmatpush1.msra.mxu0 %v486
  %2514 = vmatprep.subr.mxu0 %v483
  %2515 = vmatpush1.msra.mxu0 %v482
  %2516 = vmatprep.subr.mxu0 %v479
  %2517 = vmatpush1.msra.mxu0 %v478
  %2518 = vmatprep.subr.mxu0 %v475
  %2519 = vmatpush1.msra.mxu0 %v474
  %2520 = vmatprep.subr.mxu0 %v471
  %2521 = vmatpush1.msra.mxu0 %v470
  %2522 = vmatprep.subr.mxu0 %v467
  %2523 = vmatpush1.msra.mxu0 %v466
  %2524 = vmatprep.subr.mxu0 %v463
  %2525 = vmatpush1.msra.mxu0 %v462
  %2526 = vmatprep.subr.mxu0 %v459
  %2527 = vmatpush1.msra.mxu0 %v458
  %2528 = vmatprep.subr.mxu0 %v455
  %2529 = vmatpush1.msra.mxu0 %v454
  %2530 = vmatprep.subr.mxu0 %v579
  %2531 = vmatpush2.msra.mxu0 %v578
  %2532 = vmatprep.subr.mxu0 %v575
  %2533 = vmatpush2.msra.mxu0 %v574
  %2534 = vmatprep.subr.mxu0 %v571
  %2535 = vmatpush2.msra.mxu0 %v570
  %2536 = vmatprep.subr.mxu0 %v567
  %2537 = vmatpush2.msra.mxu0 %v566
  %2538 = vmatprep.subr.mxu0 %v563
  %2539 = vmatpush2.msra.mxu0 %v562
  %2540 = vmatprep.subr.mxu0 %v559
  %2541 = vmatpush2.msra.mxu0 %v558
  %2542 = vmatprep.subr.mxu0 %v555
  %2543 = vmatpush2.msra.mxu0 %v554
  %2544 = vmatprep.subr.mxu0 %v551
  %2545 = vmatpush2.msra.mxu0 %v550
  %2546 = vmatprep.subr.mxu0 %v547
  %2547 = vmatpush2.msra.mxu0 %v546
  %2548 = vmatprep.subr.mxu0 %v543
  %2549 = vmatpush2.msra.mxu0 %v542
  %2550 = vmatprep.subr.mxu0 %v539
  %2551 = vmatpush2.msra.mxu0 %v538
  %2552 = vmatprep.subr.mxu0 %v535
  %2553 = vmatpush2.msra.mxu0 %v534
  %2554 = vmatprep.subr.mxu0 %v531
  %2555 = vmatpush2.msra.mxu0 %v530
  %2556 = vmatprep.subr.mxu0 %v527
  %2557 = vmatpush2.msra.mxu0 %v526
  %2558 = vmatprep.subr.mxu0 %v523
  %2559 = vmatpush2.msra.mxu0 %v522
  %2560 = vmatprep.subr.mxu0 %v519
  %2561 = vmatpush2.msra.mxu0 %v518
  %2562 = vmatprep.mubr.f32.mxu0 %v2320
  %2563 = vmatmul.mubr.f32.gmra.mxu0 %v2497
  %v2564 = vpop.f32.mrf.mxu0
  %v2565 = vadd.f32 %v767, %v2564
  %v2566 = vpop.f32.mrf.mxu0
  %v2567 = vadd.f32 %v771, %v2566
  %2568 = vdwg.mxu0
  %2569 = vmatprep.subr.mxu0 %v517
  %2570 = vmatpush1.msra.mxu0 %v516
  %2571 = vmatprep.subr.mxu0 %v513
  %2572 = vmatpush1.msra.mxu0 %v512
  %2573 = vmatprep.subr.mxu0 %v509
  %2574 = vmatpush1.msra.mxu0 %v508
  %2575 = vmatprep.subr.mxu0 %v505
  %2576 = vmatpush1.msra.mxu0 %v504
  %2577 = vmatprep.subr.mxu0 %v501
  %2578 = vmatpush1.msra.mxu0 %v500
  %2579 = vmatprep.subr.mxu0 %v497
  %2580 = vmatpush1.msra.mxu0 %v496
  %2581 = vmatprep.subr.mxu0 %v493
  %2582 = vmatpush1.msra.mxu0 %v492
  %2583 = vmatprep.subr.mxu0 %v489
  %2584 = vmatpush1.msra.mxu0 %v488
  %2585 = vmatprep.subr.mxu0 %v485
  %2586 = vmatpush1.msra.mxu0 %v484
  %2587 = vmatprep.subr.mxu0 %v481
  %2588 = vmatpush1.msra.mxu0 %v480
  %2589 = vmatprep.subr.mxu0 %v477
  %2590 = vmatpush1.msra.mxu0 %v476
  %2591 = vmatprep.subr.mxu0 %v473
  %2592 = vmatpush1.msra.mxu0 %v472
  %2593 = vmatprep.subr.mxu0 %v469
  %2594 = vmatpush1.msra.mxu0 %v468
  %2595 = vmatprep.subr.mxu0 %v465
  %2596 = vmatpush1.msra.mxu0 %v464
  %2597 = vmatprep.subr.mxu0 %v461
  %2598 = vmatpush1.msra.mxu0 %v460
  %2599 = vmatprep.subr.mxu0 %v457
  %2600 = vmatpush1.msra.mxu0 %v456
  %2601 = vmatprep.subr.mxu0 %v581
  %2602 = vmatpush2.msra.mxu0 %v580
  %2603 = vmatprep.subr.mxu0 %v577
  %2604 = vmatpush2.msra.mxu0 %v576
  %2605 = vmatprep.subr.mxu0 %v573
  %2606 = vmatpush2.msra.mxu0 %v572
  %2607 = vmatprep.subr.mxu0 %v569
  %2608 = vmatpush2.msra.mxu0 %v568
  %2609 = vmatprep.subr.mxu0 %v565
  %2610 = vmatpush2.msra.mxu0 %v564
  %2611 = vmatprep.subr.mxu0 %v561
  %2612 = vmatpush2.msra.mxu0 %v560
  %2613 = vmatprep.subr.mxu0 %v557
  %2614 = vmatpush2.msra.mxu0 %v556
  %2615 = vmatprep.subr.mxu0 %v553
  %2616 = vmatpush2.msra.mxu0 %v552
  %2617 = vmatprep.subr.mxu0 %v549
  %2618 = vmatpush2.msra.mxu0 %v548
  %2619 = vmatprep.subr.mxu0 %v545
  %2620 = vmatpush2.msra.mxu0 %v544
  %2621 = vmatprep.subr.mxu0 %v541
  %2622 = vmatpush2.msra.mxu0 %v540
  %2623 = vmatprep.subr.mxu0 %v537
  %2624 = vmatpush2.msra.mxu0 %v536
  %2625 = vmatprep.subr.mxu0 %v533
  %2626 = vmatpush2.msra.mxu0 %v532
  %2627 = vmatprep.subr.mxu0 %v529
  %2628 = vmatpush2.msra.mxu0 %v528
  %2629 = vmatprep.subr.mxu0 %v525
  %2630 = vmatpush2.msra.mxu0 %v524
  %2631 = vmatprep.subr.mxu0 %v521
  %2632 = vmatpush2.msra.mxu0 %v520
  %2633 = vmatprep.mubr.f32.mxu0 %v2320
  %2634 = vmatmul.mubr.f32.gmra.mxu0 %v2497
  %v2635 = vpop.f32.mrf.mxu0
  %v2636 = vadd.f32 %v775, %v2635
  %v2637 = vpop.f32.mrf.mxu0
  %v2638 = vadd.f32 %v779, %v2637
  %2639 = vdwg.mxu0
  %v2640 = vxor.u32 %v2565, 2147483648
  %v2641 = vmul.f32 %v2640, 1.442695
  %v2642 = vpow.pop %v2641
  %v2643 = vadd.f32 %v2642, 1.0
  %v2644 = vrcp.pop %v2643
  %v2645 = vmul.f32 1.0, %v2644
  %v2646 = vxor.u32 %v2567, 2147483648
  %v2647 = vmul.f32 %v2646, 1.442695
  %v2648 = vpow.pop %v2647
  %v2649 = vadd.f32 %v2648, 1.0
  %v2650 = vrcp.pop %v2649
  %v2651 = vmul.f32 1.0, %v2650
  %v2652 = vtanh.pop %v2636
  %v2653 = vxor.u32 %v2638, 2147483648
  %v2654 = vmul.f32 %v2653, 1.442695
  %v2655 = vpow.pop %v2654
  %v2656 = vadd.f32 %v2655, 1.0
  %v2657 = vrcp.pop %v2656
  %v2658 = vmul.f32 1.0, %v2657
  %v2659 = vmul.f32 %v2651, %v2318
  %v2660 = vmul.f32 %v2645, %v2652
  %v2661 = vadd.f32 %v2659, %v2660
  %v2662 = vtanh.pop %v2661
  %v2663 = vmul.f32 %v2658, %v2662
  %s2664 = scalar_lea.vmem [#allocation3], 40
  %2665 = vst [vmem:[%s2664] sm:$0xff] %v2663
  %s2666 = scalar_lea.vmem [#allocation2], 192
  %v2667 = vld [vmem:[%s2666] sm:$0xff]
  %v2668 = vld [vmem:[%s2666 + $0x8] sm:$0xff]
  %v2669 = vld [vmem:[%s2666 + $0x10] sm:$0xff]
  %v2670 = vld [vmem:[%s2666 + $0x18] sm:$0xff]
  %2671 = vmatprep.subr.mxu0 %v451
  %2672 = vmatpush1.msra.mxu0 %v450
  %2673 = vmatprep.subr.mxu0 %v447
  %2674 = vmatpush1.msra.mxu0 %v446
  %2675 = vmatprep.subr.mxu0 %v443
  %2676 = vmatpush1.msra.mxu0 %v442
  %2677 = vmatprep.subr.mxu0 %v439
  %2678 = vmatpush1.msra.mxu0 %v438
  %2679 = vmatprep.subr.mxu0 %v435
  %2680 = vmatpush1.msra.mxu0 %v434
  %2681 = vmatprep.subr.mxu0 %v431
  %2682 = vmatpush1.msra.mxu0 %v430
  %2683 = vmatprep.subr.mxu0 %v427
  %2684 = vmatpush1.msra.mxu0 %v426
  %2685 = vmatprep.subr.mxu0 %v423
  %2686 = vmatpush1.msra.mxu0 %v422
  %2687 = vmatprep.subr.mxu0 %v419
  %2688 = vmatpush1.msra.mxu0 %v418
  %2689 = vmatprep.subr.mxu0 %v415
  %2690 = vmatpush1.msra.mxu0 %v414
  %2691 = vmatprep.subr.mxu0 %v411
  %2692 = vmatpush1.msra.mxu0 %v410
  %2693 = vmatprep.subr.mxu0 %v407
  %2694 = vmatpush1.msra.mxu0 %v406
  %2695 = vmatprep.subr.mxu0 %v403
  %2696 = vmatpush1.msra.mxu0 %v402
  %2697 = vmatprep.subr.mxu0 %v399
  %2698 = vmatpush1.msra.mxu0 %v398
  %2699 = vmatprep.subr.mxu0 %v395
  %2700 = vmatpush1.msra.mxu0 %v394
  %2701 = vmatprep.subr.mxu0 %v391
  %2702 = vmatpush1.msra.mxu0 %v390
  %2703 = vmatprep.subr.mxu0 0.0
  %2704 = vmatpush2.msra.mxu0 0.0
  %2705 = vmatprep.subr.mxu0 0.0
  %2706 = vmatpush2.msra.mxu0 0.0
  %2707 = vmatprep.subr.mxu0 0.0
  %2708 = vmatpush2.msra.mxu0 0.0
  %2709 = vmatprep.subr.mxu0 0.0
  %2710 = vmatpush2.msra.mxu0 0.0
  %2711 = vmatprep.subr.mxu0 0.0
  %2712 = vmatpush2.msra.mxu0 0.0
  %2713 = vmatprep.subr.mxu0 0.0
  %2714 = vmatpush2.msra.mxu0 0.0
  %2715 = vmatprep.subr.mxu0 0.0
  %2716 = vmatpush2.msra.mxu0 0.0
  %2717 = vmatprep.subr.mxu0 0.0
  %2718 = vmatpush2.msra.mxu0 0.0
  %2719 = vmatprep.subr.mxu0 0.0
  %2720 = vmatpush2.msra.mxu0 0.0
  %2721 = vmatprep.subr.mxu0 0.0
  %2722 = vmatpush2.msra.mxu0 0.0
  %2723 = vmatprep.subr.mxu0 0.0
  %2724 = vmatpush2.msra.mxu0 0.0
  %2725 = vmatprep.subr.mxu0 0.0
  %2726 = vmatpush2.msra.mxu0 0.0
  %2727 = vmatprep.subr.mxu0 0.0
  %2728 = vmatpush2.msra.mxu0 0.0
  %2729 = vmatprep.subr.mxu0 0.0
  %2730 = vmatpush2.msra.mxu0 0.0
  %2731 = vmatprep.subr.mxu0 0.0
  %2732 = vmatpush2.msra.mxu0 0.0
  %2733 = vmatprep.subr.mxu0 0.0
  %2734 = vmatpush2.msra.mxu0 0.0
  %2735 = vmatprep.mubr.f32.mxu0 0.0
  %2736 = vmatmul.mubr.f32.gmra.mxu0 %v2497
  %v2737 = vpop.f32.mrf.mxu0
  %v2738 = vadd.f32 0.0, %v2737
  %v2739 = vpop.f32.mrf.mxu0
  %v2740 = vadd.f32 0.0, %v2739
  %2741 = vdwg.mxu0
  %2742 = vmatprep.subr.mxu0 %v453
  %2743 = vmatpush1.msra.mxu0 %v452
  %2744 = vmatprep.subr.mxu0 %v449
  %2745 = vmatpush1.msra.mxu0 %v448
  %2746 = vmatprep.subr.mxu0 %v445
  %2747 = vmatpush1.msra.mxu0 %v444
  %2748 = vmatprep.subr.mxu0 %v441
  %2749 = vmatpush1.msra.mxu0 %v440
  %2750 = vmatprep.subr.mxu0 %v437
  %2751 = vmatpush1.msra.mxu0 %v436
  %2752 = vmatprep.subr.mxu0 %v433
  %2753 = vmatpush1.msra.mxu0 %v432
  %2754 = vmatprep.subr.mxu0 %v429
  %2755 = vmatpush1.msra.mxu0 %v428
  %2756 = vmatprep.subr.mxu0 %v425
  %2757 = vmatpush1.msra.mxu0 %v424
  %2758 = vmatprep.subr.mxu0 %v421
  %2759 = vmatpush1.msra.mxu0 %v420
  %2760 = vmatprep.subr.mxu0 %v417
  %2761 = vmatpush1.msra.mxu0 %v416
  %2762 = vmatprep.subr.mxu0 %v413
  %2763 = vmatpush1.msra.mxu0 %v412
  %2764 = vmatprep.subr.mxu0 %v409
  %2765 = vmatpush1.msra.mxu0 %v408
  %2766 = vmatprep.subr.mxu0 %v405
  %2767 = vmatpush1.msra.mxu0 %v404
  %2768 = vmatprep.subr.mxu0 %v401
  %2769 = vmatpush1.msra.mxu0 %v400
  %2770 = vmatprep.subr.mxu0 %v397
  %2771 = vmatpush1.msra.mxu0 %v396
  %2772 = vmatprep.subr.mxu0 %v393
  %2773 = vmatpush1.msra.mxu0 %v392
  %2774 = vmatprep.subr.mxu0 0.0
  %2775 = vmatpush2.msra.mxu0 0.0
  %2776 = vmatprep.subr.mxu0 0.0
  %2777 = vmatpush2.msra.mxu0 0.0
  %2778 = vmatprep.subr.mxu0 0.0
  %2779 = vmatpush2.msra.mxu0 0.0
  %2780 = vmatprep.subr.mxu0 0.0
  %2781 = vmatpush2.msra.mxu0 0.0
  %2782 = vmatprep.subr.mxu0 0.0
  %2783 = vmatpush2.msra.mxu0 0.0
  %2784 = vmatprep.subr.mxu0 0.0
  %2785 = vmatpush2.msra.mxu0 0.0
  %2786 = vmatprep.subr.mxu0 0.0
  %2787 = vmatpush2.msra.mxu0 0.0
  %2788 = vmatprep.subr.mxu0 0.0
  %2789 = vmatpush2.msra.mxu0 0.0
  %2790 = vmatprep.subr.mxu0 0.0
  %2791 = vmatpush2.msra.mxu0 0.0
  %2792 = vmatprep.subr.mxu0 0.0
  %2793 = vmatpush2.msra.mxu0 0.0
  %2794 = vmatprep.subr.mxu0 0.0
  %2795 = vmatpush2.msra.mxu0 0.0
  %2796 = vmatprep.subr.mxu0 0.0
  %2797 = vmatpush2.msra.mxu0 0.0
  %2798 = vmatprep.subr.mxu0 0.0
  %2799 = vmatpush2.msra.mxu0 0.0
  %2800 = vmatprep.subr.mxu0 0.0
  %2801 = vmatpush2.msra.mxu0 0.0
  %2802 = vmatprep.subr.mxu0 0.0
  %2803 = vmatpush2.msra.mxu0 0.0
  %2804 = vmatprep.subr.mxu0 0.0
  %2805 = vmatpush2.msra.mxu0 0.0
  %2806 = vmatprep.mubr.f32.mxu0 0.0
  %2807 = vmatmul.mubr.f32.gmra.mxu0 %v2497
  %v2808 = vpop.f32.mrf.mxu0
  %v2809 = vadd.f32 0.0, %v2808
  %v2810 = vpop.f32.mrf.mxu0
  %v2811 = vadd.f32 0.0, %v2810
  %2812 = vdwg.mxu0
  %v2813 = vadd.f32 %v2667, %v2738
  %v2814 = vadd.f32 %v2668, %v2740
  %v2815 = vadd.f32 %v2669, %v2809
  %v2816 = vadd.f32 %v2670, %v2811
  %v2817 = vxor.u32 %v2813, 2147483648
  %v2818 = vmul.f32 %v2817, 1.442695
  %v2819 = vpow.pop %v2818
  %v2820 = vadd.f32 %v2819, 1.0
  %v2821 = vrcp.pop %v2820
  %v2822 = vmul.f32 1.0, %v2821
  %v2823 = vxor.u32 %v2814, 2147483648
  %v2824 = vmul.f32 %v2823, 1.442695
  %v2825 = vpow.pop %v2824
  %v2826 = vadd.f32 %v2825, 1.0
  %v2827 = vrcp.pop %v2826
  %v2828 = vmul.f32 1.0, %v2827
  %v2829 = vtanh.pop %v2815
  %v2830 = vxor.u32 %v2816, 2147483648
  %v2831 = vmul.f32 %v2830, 1.442695
  %v2832 = vpow.pop %v2831
  %v2833 = vadd.f32 %v2832, 1.0
  %v2834 = vrcp.pop %v2833
  %v2835 = vmul.f32 1.0, %v2834
  %v2836 = vmul.f32 %v2828, %v2495
  %v2837 = vmul.f32 %v2822, %v2829
  %v2838 = vadd.f32 %v2836, %v2837
  %v2839 = vtanh.pop %v2838
  %v2840 = vmul.f32 %v2835, %v2839
  %2841 = vmatprep.subr.mxu0 %v515
  %2842 = vmatpush1.msra.mxu0 %v514
  %2843 = vmatprep.subr.mxu0 %v511
  %2844 = vmatpush1.msra.mxu0 %v510
  %2845 = vmatprep.subr.mxu0 %v507
  %2846 = vmatpush1.msra.mxu0 %v506
  %2847 = vmatprep.subr.mxu0 %v503
  %2848 = vmatpush1.msra.mxu0 %v502
  %2849 = vmatprep.subr.mxu0 %v499
  %2850 = vmatpush1.msra.mxu0 %v498
  %2851 = vmatprep.subr.mxu0 %v495
  %2852 = vmatpush1.msra.mxu0 %v494
  %2853 = vmatprep.subr.mxu0 %v491
  %2854 = vmatpush1.msra.mxu0 %v490
  %2855 = vmatprep.subr.mxu0 %v487
  %2856 = vmatpush1.msra.mxu0 %v486
  %2857 = vmatprep.subr.mxu0 %v483
  %2858 = vmatpush1.msra.mxu0 %v482
  %2859 = vmatprep.subr.mxu0 %v479
  %2860 = vmatpush1.msra.mxu0 %v478
  %2861 = vmatprep.subr.mxu0 %v475
  %2862 = vmatpush1.msra.mxu0 %v474
  %2863 = vmatprep.subr.mxu0 %v471
  %2864 = vmatpush1.msra.mxu0 %v470
  %2865 = vmatprep.subr.mxu0 %v467
  %2866 = vmatpush1.msra.mxu0 %v466
  %2867 = vmatprep.subr.mxu0 %v463
  %2868 = vmatpush1.msra.mxu0 %v462
  %2869 = vmatprep.subr.mxu0 %v459
  %2870 = vmatpush1.msra.mxu0 %v458
  %2871 = vmatprep.subr.mxu0 %v455
  %2872 = vmatpush1.msra.mxu0 %v454
  %2873 = vmatprep.subr.mxu0 %v579
  %2874 = vmatpush2.msra.mxu0 %v578
  %2875 = vmatprep.subr.mxu0 %v575
  %2876 = vmatpush2.msra.mxu0 %v574
  %2877 = vmatprep.subr.mxu0 %v571
  %2878 = vmatpush2.msra.mxu0 %v570
  %2879 = vmatprep.subr.mxu0 %v567
  %2880 = vmatpush2.msra.mxu0 %v566
  %2881 = vmatprep.subr.mxu0 %v563
  %2882 = vmatpush2.msra.mxu0 %v562
  %2883 = vmatprep.subr.mxu0 %v559
  %2884 = vmatpush2.msra.mxu0 %v558
  %2885 = vmatprep.subr.mxu0 %v555
  %2886 = vmatpush2.msra.mxu0 %v554
  %2887 = vmatprep.subr.mxu0 %v551
  %2888 = vmatpush2.msra.mxu0 %v550
  %2889 = vmatprep.subr.mxu0 %v547
  %2890 = vmatpush2.msra.mxu0 %v546
  %2891 = vmatprep.subr.mxu0 %v543
  %2892 = vmatpush2.msra.mxu0 %v542
  %2893 = vmatprep.subr.mxu0 %v539
  %2894 = vmatpush2.msra.mxu0 %v538
  %2895 = vmatprep.subr.mxu0 %v535
  %2896 = vmatpush2.msra.mxu0 %v534
  %2897 = vmatprep.subr.mxu0 %v531
  %2898 = vmatpush2.msra.mxu0 %v530
  %2899 = vmatprep.subr.mxu0 %v527
  %2900 = vmatpush2.msra.mxu0 %v526
  %2901 = vmatprep.subr.mxu0 %v523
  %2902 = vmatpush2.msra.mxu0 %v522
  %2903 = vmatprep.subr.mxu0 %v519
  %2904 = vmatpush2.msra.mxu0 %v518
  %2905 = vmatprep.mubr.f32.mxu0 %v2663
  %2906 = vmatmul.mubr.f32.gmra.mxu0 %v2840
  %v2907 = vpop.f32.mrf.mxu0
  %v2908 = vadd.f32 %v767, %v2907
  %v2909 = vpop.f32.mrf.mxu0
  %v2910 = vadd.f32 %v771, %v2909
  %2911 = vdwg.mxu0
  %2912 = vmatprep.subr.mxu0 %v517
  %2913 = vmatpush1.msra.mxu0 %v516
  %2914 = vmatprep.subr.mxu0 %v513
  %2915 = vmatpush1.msra.mxu0 %v512
  %2916 = vmatprep.subr.mxu0 %v509
  %2917 = vmatpush1.msra.mxu0 %v508
  %2918 = vmatprep.subr.mxu0 %v505
  %2919 = vmatpush1.msra.mxu0 %v504
  %2920 = vmatprep.subr.mxu0 %v501
  %2921 = vmatpush1.msra.mxu0 %v500
  %2922 = vmatprep.subr.mxu0 %v497
  %2923 = vmatpush1.msra.mxu0 %v496
  %2924 = vmatprep.subr.mxu0 %v493
  %2925 = vmatpush1.msra.mxu0 %v492
  %2926 = vmatprep.subr.mxu0 %v489
  %2927 = vmatpush1.msra.mxu0 %v488
  %2928 = vmatprep.subr.mxu0 %v485
  %2929 = vmatpush1.msra.mxu0 %v484
  %2930 = vmatprep.subr.mxu0 %v481
  %2931 = vmatpush1.msra.mxu0 %v480
  %2932 = vmatprep.subr.mxu0 %v477
  %2933 = vmatpush1.msra.mxu0 %v476
  %2934 = vmatprep.subr.mxu0 %v473
  %2935 = vmatpush1.msra.mxu0 %v472
  %2936 = vmatprep.subr.mxu0 %v469
  %2937 = vmatpush1.msra.mxu0 %v468
  %2938 = vmatprep.subr.mxu0 %v465
  %2939 = vmatpush1.msra.mxu0 %v464
  %2940 = vmatprep.subr.mxu0 %v461
  %2941 = vmatpush1.msra.mxu0 %v460
  %2942 = vmatprep.subr.mxu0 %v457
  %2943 = vmatpush1.msra.mxu0 %v456
  %2944 = vmatprep.subr.mxu0 %v581
  %2945 = vmatpush2.msra.mxu0 %v580
  %2946 = vmatprep.subr.mxu0 %v577
  %2947 = vmatpush2.msra.mxu0 %v576
  %2948 = vmatprep.subr.mxu0 %v573
  %2949 = vmatpush2.msra.mxu0 %v572
  %2950 = vmatprep.subr.mxu0 %v569
  %2951 = vmatpush2.msra.mxu0 %v568
  %2952 = vmatprep.subr.mxu0 %v565
  %2953 = vmatpush2.msra.mxu0 %v564
  %2954 = vmatprep.subr.mxu0 %v561
  %2955 = vmatpush2.msra.mxu0 %v560
  %2956 = vmatprep.subr.mxu0 %v557
  %2957 = vmatpush2.msra.mxu0 %v556
  %2958 = vmatprep.subr.mxu0 %v553
  %2959 = vmatpush2.msra.mxu0 %v552
  %2960 = vmatprep.subr.mxu0 %v549
  %2961 = vmatpush2.msra.mxu0 %v548
  %2962 = vmatprep.subr.mxu0 %v545
  %2963 = vmatpush2.msra.mxu0 %v544
  %2964 = vmatprep.subr.mxu0 %v541
  %2965 = vmatpush2.msra.mxu0 %v540
  %2966 = vmatprep.subr.mxu0 %v537
  %2967 = vmatpush2.msra.mxu0 %v536
  %2968 = vmatprep.subr.mxu0 %v533
  %2969 = vmatpush2.msra.mxu0 %v532
  %2970 = vmatprep.subr.mxu0 %v529
  %2971 = vmatpush2.msra.mxu0 %v528
  %2972 = vmatprep.subr.mxu0 %v525
  %2973 = vmatpush2.msra.mxu0 %v524
  %2974 = vmatprep.subr.mxu0 %v521
  %2975 = vmatpush2.msra.mxu0 %v520
  %2976 = vmatprep.mubr.f32.mxu0 %v2663
  %2977 = vmatmul.mubr.f32.gmra.mxu0 %v2840
  %v2978 = vpop.f32.mrf.mxu0
  %v2979 = vadd.f32 %v775, %v2978
  %v2980 = vpop.f32.mrf.mxu0
  %v2981 = vadd.f32 %v779, %v2980
  %2982 = vdwg.mxu0
  %v2983 = vxor.u32 %v2908, 2147483648
  %v2984 = vmul.f32 %v2983, 1.442695
  %v2985 = vpow.pop %v2984
  %v2986 = vadd.f32 %v2985, 1.0
  %v2987 = vrcp.pop %v2986
  %v2988 = vmul.f32 1.0, %v2987
  %v2989 = vxor.u32 %v2910, 2147483648
  %v2990 = vmul.f32 %v2989, 1.442695
  %v2991 = vpow.pop %v2990
  %v2992 = vadd.f32 %v2991, 1.0
  %v2993 = vrcp.pop %v2992
  %v2994 = vmul.f32 1.0, %v2993
  %v2995 = vtanh.pop %v2979
  %v2996 = vxor.u32 %v2981, 2147483648
  %v2997 = vmul.f32 %v2996, 1.442695
  %v2998 = vpow.pop %v2997
  %v2999 = vadd.f32 %v2998, 1.0
  %v3000 = vrcp.pop %v2999
  %v3001 = vmul.f32 1.0, %v3000
  %v3002 = vmul.f32 %v2994, %v2661
  %v3003 = vmul.f32 %v2988, %v2995
  %v3004 = vadd.f32 %v3002, %v3003
  %v3005 = vtanh.pop %v3004
  %v3006 = vmul.f32 %v3001, %v3005
  %s3007 = scalar_lea.vmem [#allocation3], 48
  %3008 = vst [vmem:[%s3007] sm:$0xff] %v3006
  %s3009 = scalar_lea.vmem [#allocation2], 224
  %v3010 = vld [vmem:[%s3009] sm:$0xff]
  %v3011 = vld [vmem:[%s3009 + $0x8] sm:$0xff]
  %v3012 = vld [vmem:[%s3009 + $0x10] sm:$0xff]
  %v3013 = vld [vmem:[%s3009 + $0x18] sm:$0xff]
  %3014 = vmatprep.subr.mxu0 %v451
  %3015 = vmatpush1.msra.mxu0 %v450
  %3016 = vmatprep.subr.mxu0 %v447
  %3017 = vmatpush1.msra.mxu0 %v446
  %3018 = vmatprep.subr.mxu0 %v443
  %3019 = vmatpush1.msra.mxu0 %v442
  %3020 = vmatprep.subr.mxu0 %v439
  %3021 = vmatpush1.msra.mxu0 %v438
  %3022 = vmatprep.subr.mxu0 %v435
  %3023 = vmatpush1.msra.mxu0 %v434
  %3024 = vmatprep.subr.mxu0 %v431
  %3025 = vmatpush1.msra.mxu0 %v430
  %3026 = vmatprep.subr.mxu0 %v427
  %3027 = vmatpush1.msra.mxu0 %v426
  %3028 = vmatprep.subr.mxu0 %v423
  %3029 = vmatpush1.msra.mxu0 %v422
  %3030 = vmatprep.subr.mxu0 %v419
  %3031 = vmatpush1.msra.mxu0 %v418
  %3032 = vmatprep.subr.mxu0 %v415
  %3033 = vmatpush1.msra.mxu0 %v414
  %3034 = vmatprep.subr.mxu0 %v411
  %3035 = vmatpush1.msra.mxu0 %v410
  %3036 = vmatprep.subr.mxu0 %v407
  %3037 = vmatpush1.msra.mxu0 %v406
  %3038 = vmatprep.subr.mxu0 %v403
  %3039 = vmatpush1.msra.mxu0 %v402
  %3040 = vmatprep.subr.mxu0 %v399
  %3041 = vmatpush1.msra.mxu0 %v398
  %3042 = vmatprep.subr.mxu0 %v395
  %3043 = vmatpush1.msra.mxu0 %v394
  %3044 = vmatprep.subr.mxu0 %v391
  %3045 = vmatpush1.msra.mxu0 %v390
  %3046 = vmatprep.subr.mxu0 0.0
  %3047 = vmatpush2.msra.mxu0 0.0
  %3048 = vmatprep.subr.mxu0 0.0
  %3049 = vmatpush2.msra.mxu0 0.0
  %3050 = vmatprep.subr.mxu0 0.0
  %3051 = vmatpush2.msra.mxu0 0.0
  %3052 = vmatprep.subr.mxu0 0.0
  %3053 = vmatpush2.msra.mxu0 0.0
  %3054 = vmatprep.subr.mxu0 0.0
  %3055 = vmatpush2.msra.mxu0 0.0
  %3056 = vmatprep.subr.mxu0 0.0
  %3057 = vmatpush2.msra.mxu0 0.0
  %3058 = vmatprep.subr.mxu0 0.0
  %3059 = vmatpush2.msra.mxu0 0.0
  %3060 = vmatprep.subr.mxu0 0.0
  %3061 = vmatpush2.msra.mxu0 0.0
  %3062 = vmatprep.subr.mxu0 0.0
  %3063 = vmatpush2.msra.mxu0 0.0
  %3064 = vmatprep.subr.mxu0 0.0
  %3065 = vmatpush2.msra.mxu0 0.0
  %3066 = vmatprep.subr.mxu0 0.0
  %3067 = vmatpush2.msra.mxu0 0.0
  %3068 = vmatprep.subr.mxu0 0.0
  %3069 = vmatpush2.msra.mxu0 0.0
  %3070 = vmatprep.subr.mxu0 0.0
  %3071 = vmatpush2.msra.mxu0 0.0
  %3072 = vmatprep.subr.mxu0 0.0
  %3073 = vmatpush2.msra.mxu0 0.0
  %3074 = vmatprep.subr.mxu0 0.0
  %3075 = vmatpush2.msra.mxu0 0.0
  %3076 = vmatprep.subr.mxu0 0.0
  %3077 = vmatpush2.msra.mxu0 0.0
  %3078 = vmatprep.mubr.f32.mxu0 0.0
  %3079 = vmatmul.mubr.f32.gmra.mxu0 %v2840
  %v3080 = vpop.f32.mrf.mxu0
  %v3081 = vadd.f32 0.0, %v3080
  %v3082 = vpop.f32.mrf.mxu0
  %v3083 = vadd.f32 0.0, %v3082
  %3084 = vdwg.mxu0
  %3085 = vmatprep.subr.mxu0 %v453
  %3086 = vmatpush1.msra.mxu0 %v452
  %3087 = vmatprep.subr.mxu0 %v449
  %3088 = vmatpush1.msra.mxu0 %v448
  %3089 = vmatprep.subr.mxu0 %v445
  %3090 = vmatpush1.msra.mxu0 %v444
  %3091 = vmatprep.subr.mxu0 %v441
  %3092 = vmatpush1.msra.mxu0 %v440
  %3093 = vmatprep.subr.mxu0 %v437
  %3094 = vmatpush1.msra.mxu0 %v436
  %3095 = vmatprep.subr.mxu0 %v433
  %3096 = vmatpush1.msra.mxu0 %v432
  %3097 = vmatprep.subr.mxu0 %v429
  %3098 = vmatpush1.msra.mxu0 %v428
  %3099 = vmatprep.subr.mxu0 %v425
  %3100 = vmatpush1.msra.mxu0 %v424
  %3101 = vmatprep.subr.mxu0 %v421
  %3102 = vmatpush1.msra.mxu0 %v420
  %3103 = vmatprep.subr.mxu0 %v417
  %3104 = vmatpush1.msra.mxu0 %v416
  %3105 = vmatprep.subr.mxu0 %v413
  %3106 = vmatpush1.msra.mxu0 %v412
  %3107 = vmatprep.subr.mxu0 %v409
  %3108 = vmatpush1.msra.mxu0 %v408
  %3109 = vmatprep.subr.mxu0 %v405
  %3110 = vmatpush1.msra.mxu0 %v404
  %3111 = vmatprep.subr.mxu0 %v401
  %3112 = vmatpush1.msra.mxu0 %v400
  %3113 = vmatprep.subr.mxu0 %v397
  %3114 = vmatpush1.msra.mxu0 %v396
  %3115 = vmatprep.subr.mxu0 %v393
  %3116 = vmatpush1.msra.mxu0 %v392
  %3117 = vmatprep.subr.mxu0 0.0
  %3118 = vmatpush2.msra.mxu0 0.0
  %3119 = vmatprep.subr.mxu0 0.0
  %3120 = vmatpush2.msra.mxu0 0.0
  %3121 = vmatprep.subr.mxu0 0.0
  %3122 = vmatpush2.msra.mxu0 0.0
  %3123 = vmatprep.subr.mxu0 0.0
  %3124 = vmatpush2.msra.mxu0 0.0
  %3125 = vmatprep.subr.mxu0 0.0
  %3126 = vmatpush2.msra.mxu0 0.0
  %3127 = vmatprep.subr.mxu0 0.0
  %3128 = vmatpush2.msra.mxu0 0.0
  %3129 = vmatprep.subr.mxu0 0.0
  %3130 = vmatpush2.msra.mxu0 0.0
  %3131 = vmatprep.subr.mxu0 0.0
  %3132 = vmatpush2.msra.mxu0 0.0
  %3133 = vmatprep.subr.mxu0 0.0
  %3134 = vmatpush2.msra.mxu0 0.0
  %3135 = vmatprep.subr.mxu0 0.0
  %3136 = vmatpush2.msra.mxu0 0.0
  %3137 = vmatprep.subr.mxu0 0.0
  %3138 = vmatpush2.msra.mxu0 0.0
  %3139 = vmatprep.subr.mxu0 0.0
  %3140 = vmatpush2.msra.mxu0 0.0
  %3141 = vmatprep.subr.mxu0 0.0
  %3142 = vmatpush2.msra.mxu0 0.0
  %3143 = vmatprep.subr.mxu0 0.0
  %3144 = vmatpush2.msra.mxu0 0.0
  %3145 = vmatprep.subr.mxu0 0.0
  %3146 = vmatpush2.msra.mxu0 0.0
  %3147 = vmatprep.subr.mxu0 0.0
  %3148 = vmatpush2.msra.mxu0 0.0
  %3149 = vmatprep.mubr.f32.mxu0 0.0
  %3150 = vmatmul.mubr.f32.gmra.mxu0 %v2840
  %v3151 = vpop.f32.mrf.mxu0
  %v3152 = vadd.f32 0.0, %v3151
  %v3153 = vpop.f32.mrf.mxu0
  %v3154 = vadd.f32 0.0, %v3153
  %3155 = vdwg.mxu0
  %v3156 = vadd.f32 %v3010, %v3081
  %v3157 = vadd.f32 %v3011, %v3083
  %v3158 = vadd.f32 %v3012, %v3152
  %v3159 = vadd.f32 %v3013, %v3154
  %v3160 = vxor.u32 %v3156, 2147483648
  %v3161 = vmul.f32 %v3160, 1.442695
  %v3162 = vpow.pop %v3161
  %v3163 = vadd.f32 %v3162, 1.0
  %v3164 = vrcp.pop %v3163
  %v3165 = vmul.f32 1.0, %v3164
  %v3166 = vxor.u32 %v3157, 2147483648
  %v3167 = vmul.f32 %v3166, 1.442695
  %v3168 = vpow.pop %v3167
  %v3169 = vadd.f32 %v3168, 1.0
  %v3170 = vrcp.pop %v3169
  %v3171 = vmul.f32 1.0, %v3170
  %v3172 = vtanh.pop %v3158
  %v3173 = vxor.u32 %v3159, 2147483648
  %v3174 = vmul.f32 %v3173, 1.442695
  %v3175 = vpow.pop %v3174
  %v3176 = vadd.f32 %v3175, 1.0
  %v3177 = vrcp.pop %v3176
  %v3178 = vmul.f32 1.0, %v3177
  %v3179 = vmul.f32 %v3171, %v2838
  %v3180 = vmul.f32 %v3165, %v3172
  %v3181 = vadd.f32 %v3179, %v3180
  %v3182 = vtanh.pop %v3181
  %v3183 = vmul.f32 %v3178, %v3182
  %3184 = vmatprep.subr.mxu0 %v515
  %3185 = vmatpush1.msra.mxu0 %v514
  %3186 = vmatprep.subr.mxu0 %v511
  %3187 = vmatpush1.msra.mxu0 %v510
  %3188 = vmatprep.subr.mxu0 %v507
  %3189 = vmatpush1.msra.mxu0 %v506
  %3190 = vmatprep.subr.mxu0 %v503
  %3191 = vmatpush1.msra.mxu0 %v502
  %3192 = vmatprep.subr.mxu0 %v499
  %3193 = vmatpush1.msra.mxu0 %v498
  %3194 = vmatprep.subr.mxu0 %v495
  %3195 = vmatpush1.msra.mxu0 %v494
  %3196 = vmatprep.subr.mxu0 %v491
  %3197 = vmatpush1.msra.mxu0 %v490
  %3198 = vmatprep.subr.mxu0 %v487
  %3199 = vmatpush1.msra.mxu0 %v486
  %3200 = vmatprep.subr.mxu0 %v483
  %3201 = vmatpush1.msra.mxu0 %v482
  %3202 = vmatprep.subr.mxu0 %v479
  %3203 = vmatpush1.msra.mxu0 %v478
  %3204 = vmatprep.subr.mxu0 %v475
  %3205 = vmatpush1.msra.mxu0 %v474
  %3206 = vmatprep.subr.mxu0 %v471
  %3207 = vmatpush1.msra.mxu0 %v470
  %3208 = vmatprep.subr.mxu0 %v467
  %3209 = vmatpush1.msra.mxu0 %v466
  %3210 = vmatprep.subr.mxu0 %v463
  %3211 = vmatpush1.msra.mxu0 %v462
  %3212 = vmatprep.subr.mxu0 %v459
  %3213 = vmatpush1.msra.mxu0 %v458
  %3214 = vmatprep.subr.mxu0 %v455
  %3215 = vmatpush1.msra.mxu0 %v454
  %3216 = vmatprep.subr.mxu0 %v579
  %3217 = vmatpush2.msra.mxu0 %v578
  %3218 = vmatprep.subr.mxu0 %v575
  %3219 = vmatpush2.msra.mxu0 %v574
  %3220 = vmatprep.subr.mxu0 %v571
  %3221 = vmatpush2.msra.mxu0 %v570
  %3222 = vmatprep.subr.mxu0 %v567
  %3223 = vmatpush2.msra.mxu0 %v566
  %3224 = vmatprep.subr.mxu0 %v563
  %3225 = vmatpush2.msra.mxu0 %v562
  %3226 = vmatprep.subr.mxu0 %v559
  %3227 = vmatpush2.msra.mxu0 %v558
  %3228 = vmatprep.subr.mxu0 %v555
  %3229 = vmatpush2.msra.mxu0 %v554
  %3230 = vmatprep.subr.mxu0 %v551
  %3231 = vmatpush2.msra.mxu0 %v550
  %3232 = vmatprep.subr.mxu0 %v547
  %3233 = vmatpush2.msra.mxu0 %v546
  %3234 = vmatprep.subr.mxu0 %v543
  %3235 = vmatpush2.msra.mxu0 %v542
  %3236 = vmatprep.subr.mxu0 %v539
  %3237 = vmatpush2.msra.mxu0 %v538
  %3238 = vmatprep.subr.mxu0 %v535
  %3239 = vmatpush2.msra.mxu0 %v534
  %3240 = vmatprep.subr.mxu0 %v531
  %3241 = vmatpush2.msra.mxu0 %v530
  %3242 = vmatprep.subr.mxu0 %v527
  %3243 = vmatpush2.msra.mxu0 %v526
  %3244 = vmatprep.subr.mxu0 %v523
  %3245 = vmatpush2.msra.mxu0 %v522
  %3246 = vmatprep.subr.mxu0 %v519
  %3247 = vmatpush2.msra.mxu0 %v518
  %3248 = vmatprep.mubr.f32.mxu0 %v3006
  %3249 = vmatmul.mubr.f32.gmra.mxu0 %v3183
  %v3250 = vpop.f32.mrf.mxu0
  %v3251 = vadd.f32 %v767, %v3250
  %v3252 = vpop.f32.mrf.mxu0
  %v3253 = vadd.f32 %v771, %v3252
  %3254 = vdwg.mxu0
  %3255 = vmatprep.subr.mxu0 %v517
  %3256 = vmatpush1.msra.mxu0 %v516
  %3257 = vmatprep.subr.mxu0 %v513
  %3258 = vmatpush1.msra.mxu0 %v512
  %3259 = vmatprep.subr.mxu0 %v509
  %3260 = vmatpush1.msra.mxu0 %v508
  %3261 = vmatprep.subr.mxu0 %v505
  %3262 = vmatpush1.msra.mxu0 %v504
  %3263 = vmatprep.subr.mxu0 %v501
  %3264 = vmatpush1.msra.mxu0 %v500
  %3265 = vmatprep.subr.mxu0 %v497
  %3266 = vmatpush1.msra.mxu0 %v496
  %3267 = vmatprep.subr.mxu0 %v493
  %3268 = vmatpush1.msra.mxu0 %v492
  %3269 = vmatprep.subr.mxu0 %v489
  %3270 = vmatpush1.msra.mxu0 %v488
  %3271 = vmatprep.subr.mxu0 %v485
  %3272 = vmatpush1.msra.mxu0 %v484
  %3273 = vmatprep.subr.mxu0 %v481
  %3274 = vmatpush1.msra.mxu0 %v480
  %3275 = vmatprep.subr.mxu0 %v477
  %3276 = vmatpush1.msra.mxu0 %v476
  %3277 = vmatprep.subr.mxu0 %v473
  %3278 = vmatpush1.msra.mxu0 %v472
  %3279 = vmatprep.subr.mxu0 %v469
  %3280 = vmatpush1.msra.mxu0 %v468
  %3281 = vmatprep.subr.mxu0 %v465
  %3282 = vmatpush1.msra.mxu0 %v464
  %3283 = vmatprep.subr.mxu0 %v461
  %3284 = vmatpush1.msra.mxu0 %v460
  %3285 = vmatprep.subr.mxu0 %v457
  %3286 = vmatpush1.msra.mxu0 %v456
  %3287 = vmatprep.subr.mxu0 %v581
  %3288 = vmatpush2.msra.mxu0 %v580
  %3289 = vmatprep.subr.mxu0 %v577
  %3290 = vmatpush2.msra.mxu0 %v576
  %3291 = vmatprep.subr.mxu0 %v573
  %3292 = vmatpush2.msra.mxu0 %v572
  %3293 = vmatprep.subr.mxu0 %v569
  %3294 = vmatpush2.msra.mxu0 %v568
  %3295 = vmatprep.subr.mxu0 %v565
  %3296 = vmatpush2.msra.mxu0 %v564
  %3297 = vmatprep.subr.mxu0 %v561
  %3298 = vmatpush2.msra.mxu0 %v560
  %3299 = vmatprep.subr.mxu0 %v557
  %3300 = vmatpush2.msra.mxu0 %v556
  %3301 = vmatprep.subr.mxu0 %v553
  %3302 = vmatpush2.msra.mxu0 %v552
  %3303 = vmatprep.subr.mxu0 %v549
  %3304 = vmatpush2.msra.mxu0 %v548
  %3305 = vmatprep.subr.mxu0 %v545
  %3306 = vmatpush2.msra.mxu0 %v544
  %3307 = vmatprep.subr.mxu0 %v541
  %3308 = vmatpush2.msra.mxu0 %v540
  %3309 = vmatprep.subr.mxu0 %v537
  %3310 = vmatpush2.msra.mxu0 %v536
  %3311 = vmatprep.subr.mxu0 %v533
  %3312 = vmatpush2.msra.mxu0 %v532
  %3313 = vmatprep.subr.mxu0 %v529
  %3314 = vmatpush2.msra.mxu0 %v528
  %3315 = vmatprep.subr.mxu0 %v525
  %3316 = vmatpush2.msra.mxu0 %v524
  %3317 = vmatprep.subr.mxu0 %v521
  %3318 = vmatpush2.msra.mxu0 %v520
  %3319 = vmatprep.mubr.f32.mxu0 %v3006
  %3320 = vmatmul.mubr.f32.gmra.mxu0 %v3183
  %v3321 = vpop.f32.mrf.mxu0
  %v3322 = vadd.f32 %v775, %v3321
  %v3323 = vpop.f32.mrf.mxu0
  %v3324 = vadd.f32 %v779, %v3323
  %3325 = vdwg.mxu0
  %v3326 = vxor.u32 %v3251, 2147483648
  %v3327 = vmul.f32 %v3326, 1.442695
  %v3328 = vpow.pop %v3327
  %v3329 = vadd.f32 %v3328, 1.0
  %v3330 = vrcp.pop %v3329
  %v3331 = vmul.f32 1.0, %v3330
  %v3332 = vxor.u32 %v3253, 2147483648
  %v3333 = vmul.f32 %v3332, 1.442695
  %v3334 = vpow.pop %v3333
  %v3335 = vadd.f32 %v3334, 1.0
  %v3336 = vrcp.pop %v3335
  %v3337 = vmul.f32 1.0, %v3336
  %v3338 = vtanh.pop %v3322
  %v3339 = vxor.u32 %v3324, 2147483648
  %v3340 = vmul.f32 %v3339, 1.442695
  %v3341 = vpow.pop %v3340
  %v3342 = vadd.f32 %v3341, 1.0
  %v3343 = vrcp.pop %v3342
  %v3344 = vmul.f32 1.0, %v3343
  %v3345 = vmul.f32 %v3337, %v3004
  %v3346 = vmul.f32 %v3331, %v3338
  %v3347 = vadd.f32 %v3345, %v3346
  %v3348 = vtanh.pop %v3347
  %v3349 = vmul.f32 %v3344, %v3348
  %s3350 = scalar_lea.vmem [#allocation3], 56
  %3351 = vst [vmem:[%s3350] sm:$0xff] %v3349
  %3352 = vst [vmem:[%s11] sm:$0xff] %v3183
  %s3353 = scalar_lea.vmem %s11, 8
  %3354 = vst [vmem:[%s3353] sm:$0xff] %v3349
  %3355 = vst [vmem:[%s12] sm:$0xff] %v3181
  %s3356 = scalar_lea.vmem %s12, 8
  %3357 = vst [vmem:[%s3356] sm:$0xff] %v3347
  %v3358 = vld [vmem:[#allocation3] sm:$0xff]
  %v3359 = vld [vmem:[#allocation3 + $0x8] sm:$0xff]
  %v3360 = vld [vmem:[#allocation3 + $0x10] sm:$0xff]
  %v3361 = vld [vmem:[#allocation3 + $0x18] sm:$0xff]
  %v3362 = vld [vmem:[#allocation3 + $0x20] sm:$0xff]
  %v3363 = vld [vmem:[#allocation3 + $0x28] sm:$0xff]
  %v3364 = vld [vmem:[#allocation3 + $0x30] sm:$0xff]
  %v3365 = vld [vmem:[#allocation3 + $0x38] sm:$0xff]
  %v3366 = vld [vmem:[%s8] sm:$0xff]
  %v3367 = vld [vmem:[%s8 + $0x8] sm:$0xff]
  %v3368 = vld [vmem:[%s8 + $0x10] sm:$0xff]
  %v3369 = vld [vmem:[%s8 + $0x18] sm:$0xff]
  %v3370 = vld [vmem:[%s8 + $0x20] sm:$0xff]
  %v3371 = vld [vmem:[%s8 + $0x28] sm:$0xff]
  %v3372 = vld [vmem:[%s8 + $0x30] sm:$0xff]
  %v3373 = vld [vmem:[%s8 + $0x38] sm:$0xff]
  %v3374 = vld [vmem:[%s8 + $0x40] sm:$0xff]
  %v3375 = vld [vmem:[%s8 + $0x48] sm:$0xff]
  %v3376 = vld [vmem:[%s8 + $0x50] sm:$0xff]
  %v3377 = vld [vmem:[%s8 + $0x58] sm:$0xff]
  %v3378 = vld [vmem:[%s8 + $0x60] sm:$0xff]
  %v3379 = vld [vmem:[%s8 + $0x68] sm:$0xff]
  %v3380 = vld [vmem:[%s8 + $0x70] sm:$0xff]
  %v3381 = vld [vmem:[%s8 + $0x78] sm:$0xff]
  %v3382 = vld [vmem:[%s9] sm:$0x1]
  %v3384 = vlaneseq
  %v3385 = vshrl.u32 %v3384, 7
  %v3386 = vsub.s32 0, %v3385
  %v3387 = vrot.slane %v3382, %v3386
  %3389 = vmatprep.subr.mxu0 0.0
  %3390 = vmatpush1.msra.mxu0 %v3381
  %3391 = vmatprep.subr.mxu0 0.0
  %3392 = vmatpush1.msra.mxu0 %v3380
  %3393 = vmatprep.subr.mxu0 0.0
  %3394 = vmatpush1.msra.mxu0 %v3379
  %3395 = vmatprep.subr.mxu0 0.0
  %3396 = vmatpush1.msra.mxu0 %v3378
  %3397 = vmatprep.subr.mxu0 0.0
  %3398 = vmatpush1.msra.mxu0 %v3377
  %3399 = vmatprep.subr.mxu0 0.0
  %3400 = vmatpush1.msra.mxu0 %v3376
  %3401 = vmatprep.subr.mxu0 0.0
  %3402 = vmatpush1.msra.mxu0 %v3375
  %3403 = vmatprep.subr.mxu0 0.0
  %3404 = vmatpush1.msra.mxu0 %v3374
  %3405 = vmatprep.subr.mxu0 0.0
  %3406 = vmatpush1.msra.mxu0 %v3373
  %3407 = vmatprep.subr.mxu0 0.0
  %3408 = vmatpush1.msra.mxu0 %v3372
  %3409 = vmatprep.subr.mxu0 0.0
  %3410 = vmatpush1.msra.mxu0 %v3371
  %3411 = vmatprep.subr.mxu0 0.0
  %3412 = vmatpush1.msra.mxu0 %v3370
  %3413 = vmatprep.subr.mxu0 0.0
  %3414 = vmatpush1.msra.mxu0 %v3369
  %3415 = vmatprep.subr.mxu0 0.0
  %3416 = vmatpush1.msra.mxu0 %v3368
  %3417 = vmatprep.subr.mxu0 0.0
  %3418 = vmatpush1.msra.mxu0 %v3367
  %3419 = vmatprep.subr.mxu0 0.0
  %3420 = vmatpush1.msra.mxu0 %v3366
  %3421 = vmatprep.subr.mxu0 0.0
  %3422 = vmatpush2.msra.mxu0 0.0
  %3423 = vmatprep.subr.mxu0 0.0
  %3424 = vmatpush2.msra.mxu0 0.0
  %3425 = vmatprep.subr.mxu0 0.0
  %3426 = vmatpush2.msra.mxu0 0.0
  %3427 = vmatprep.subr.mxu0 0.0
  %3428 = vmatpush2.msra.mxu0 0.0
  %3429 = vmatprep.subr.mxu0 0.0
  %3430 = vmatpush2.msra.mxu0 0.0
  %3431 = vmatprep.subr.mxu0 0.0
  %3432 = vmatpush2.msra.mxu0 0.0
  %3433 = vmatprep.subr.mxu0 0.0
  %3434 = vmatpush2.msra.mxu0 0.0
  %3435 = vmatprep.subr.mxu0 0.0
  %3436 = vmatpush2.msra.mxu0 0.0
  %3437 = vmatprep.subr.mxu0 0.0
  %3438 = vmatpush2.msra.mxu0 0.0
  %3439 = vmatprep.subr.mxu0 0.0
  %3440 = vmatpush2.msra.mxu0 0.0
  %3441 = vmatprep.subr.mxu0 0.0
  %3442 = vmatpush2.msra.mxu0 0.0
  %3443 = vmatprep.subr.mxu0 0.0
  %3444 = vmatpush2.msra.mxu0 0.0
  %3445 = vmatprep.subr.mxu0 0.0
  %3446 = vmatpush2.msra.mxu0 0.0
  %3447 = vmatprep.subr.mxu0 0.0
  %3448 = vmatpush2.msra.mxu0 0.0
  %3449 = vmatprep.subr.mxu0 0.0
  %3450 = vmatpush2.msra.mxu0 0.0
  %3451 = vmatprep.subr.mxu0 0.0
  %3452 = vmatpush2.msra.mxu0 0.0
  %3453 = vmatprep.mubr.f32.mxu0 0.0
  %3454 = vmatmul.mubr.f32.gmra.mxu0 %v3358
  %v3455 = vpop.f32.mrf.mxu0
  %v3456 = vadd.f32 %v3387, %v3455
  %v3457 = vpop.f32.mrf.mxu0
  %3458 = vmatprep.mubr.f32.mxu0 0.0
  %3459 = vmatmul.mubr.f32.gmra.mxu0 %v3359
  %v3460 = vpop.f32.mrf.mxu0
  %v3461 = vadd.f32 %v3387, %v3460
  %v3462 = vpop.f32.mrf.mxu0
  %3463 = vmatprep.mubr.f32.mxu0 0.0
  %3464 = vmatmul.mubr.f32.gmra.mxu0 %v3360
  %v3465 = vpop.f32.mrf.mxu0
  %v3466 = vadd.f32 %v3387, %v3465
  %v3467 = vpop.f32.mrf.mxu0
  %3468 = vmatprep.mubr.f32.mxu0 0.0
  %3469 = vmatmul.mubr.f32.gmra.mxu0 %v3361
  %v3470 = vpop.f32.mrf.mxu0
  %v3471 = vadd.f32 %v3387, %v3470
  %v3472 = vpop.f32.mrf.mxu0
  %3473 = vmatprep.mubr.f32.mxu0 0.0
  %3474 = vmatmul.mubr.f32.gmra.mxu0 %v3362
  %v3475 = vpop.f32.mrf.mxu0
  %v3476 = vadd.f32 %v3387, %v3475
  %v3477 = vpop.f32.mrf.mxu0
  %3478 = vmatprep.mubr.f32.mxu0 0.0
  %3479 = vmatmul.mubr.f32.gmra.mxu0 %v3363
  %v3480 = vpop.f32.mrf.mxu0
  %v3481 = vadd.f32 %v3387, %v3480
  %v3482 = vpop.f32.mrf.mxu0
  %3483 = vmatprep.mubr.f32.mxu0 0.0
  %3484 = vmatmul.mubr.f32.gmra.mxu0 %v3364
  %v3485 = vpop.f32.mrf.mxu0
  %v3486 = vadd.f32 %v3387, %v3485
  %v3487 = vpop.f32.mrf.mxu0
  %3488 = vmatprep.mubr.f32.mxu0 0.0
  %3489 = vmatmul.mubr.f32.gmra.mxu0 %v3365
  %v3490 = vpop.f32.mrf.mxu0
  %v3491 = vadd.f32 %v3387, %v3490
  %v3492 = vpop.f32.mrf.mxu0
  %3493 = vdwg.mxu0
  %3494 = vst [vmem:[%s10] sm:$0xff] %v3456
  %3495 = vst [vmem:[%s10 + $0x8] sm:$0xff] %v3461
  %3496 = vst [vmem:[%s10 + $0x10] sm:$0xff] %v3466
  %3497 = vst [vmem:[%s10 + $0x18] sm:$0xff] %v3471
  %3498 = vst [vmem:[%s10 + $0x20] sm:$0xff] %v3476
  %3499 = vst [vmem:[%s10 + $0x28] sm:$0xff] %v3481
  %3500 = vst [vmem:[%s10 + $0x30] sm:$0xff] %v3486
  %3501 = vst [vmem:[%s10 + $0x38] sm:$0xff] %v3491
  // Predicated region
  $region42: #{charrnn_forward.1} parent=0 // pred_check
    _
  $region43: #{charrnn_forward.1} parent=0 // pred_check_branch
    %3503 = sbr.rel (0) target = $region45
  $region44: #{charrnn_forward.1} parent=0 // pred_region
    _
  $region45: #{charrnn_forward.1} parent=0 // pred_fallthru
    _
  // Predicated region
  $region46: #{charrnn_forward.1} parent=0 // pred_check
    _
  $region47: #{charrnn_forward.1} parent=0 // pred_check_branch
    %3505 = sbr.rel (0) target = $region49
  $region48: #{charrnn_forward.1} parent=0 // pred_region
    _
  $region49: #{charrnn_forward.1} parent=0 // pred_fallthru
    _
  // Predicated region
  $region50: #{charrnn_forward.1} parent=0 // pred_check
    _
  $region51: #{charrnn_forward.1} parent=0 // pred_check_branch
    %3507 = sbr.rel (0) target = $region53
  $region52: #{charrnn_forward.1} parent=0 // pred_region
    _
  $region53: #{charrnn_forward.1} parent=0 // pred_fallthru
    _
  // Predicated region
  $region54: #{charrnn_forward.1} parent=0 // pred_check
    _
  $region55: #{charrnn_forward.1} parent=0 // pred_check_branch
    %3509 = sbr.rel (0) target = $region57
  $region56: #{charrnn_forward.1} parent=0 // pred_region
    _
  $region57: #{charrnn_forward.1} parent=0 // pred_fallthru
    _
  // Predicated region
  $region58: #{charrnn_forward.1} parent=0 // pred_check
    _
  $region59: #{charrnn_forward.1} parent=0 // pred_check_branch
    %3511 = sbr.rel (0) target = $region61
  $region60: #{charrnn_forward.1} parent=0 // pred_region
    _
  $region61: #{charrnn_forward.1} parent=0 // pred_fallthru
    _
  // Predicated region
  $region62: #{charrnn_forward.1} parent=0 // pred_check
    _
  $region63: #{charrnn_forward.1} parent=0 // pred_check_branch
    %3513 = sbr.rel (0) target = $region65
  $region64: #{charrnn_forward.1} parent=0 // pred_region
    _
  $region65: #{charrnn_forward.1} parent=0 // pred_fallthru
    _

</llo_original>
